<compile_context>
chip_gen: v7x
topology: tpu7x:2x2x1
jax: 0.10.0
libtpu: 0.0.40
codegen_flags: <defaults>
</compile_context>

<pallas_src>
from functools import partial

import numpy as np
import jax
import jax.numpy as jnp
from jax import lax
from jax.experimental import pallas as pl
from jax.experimental.pallas import tpu as pltpu


def _attention_kernel(x_ref, wqkv_ref, wproj_ref, bproj_ref,
                      out_ref, attn_sum_ref,
                      qkv_scratch, o_scratch,
                      *, num_heads, block_b, heads_per_group, merge_batch):
    """One grid step: QKV projection, per-head attention and output projection
    for `block_b` packed batch elements.  Pre-softmax logits are reduced to a
    per-step (head+batch) sum in-kernel (sole consumer is the zero-weight
    center loss)."""
    _, N, C = x_ref.shape
    d = C // num_heads
    n_groups = num_heads // heads_per_group
    gw = heads_per_group * d                      # lane width of one group slab

    # ---- QKV projection: bf16 operands, f32 MXU accumulation, bf16 staging ----
    if merge_batch:
        # N % 8 == 0: collapsing (block_b, N) is a clean sublane merge, so one
        # big (Bt*N, C) x (C, 3C) matmul feeds the MXU a tall M dimension.
        x = x_ref[...].reshape(block_b * N, C).astype(jnp.bfloat16)
        qkv_scratch[...] = jnp.dot(
            x, wqkv_ref[...], preferred_element_type=jnp.float32
        ).astype(jnp.bfloat16)
    else:
        for b in range(block_b):                  # avoid padded-sublane merges
            qkv_scratch[b * N:(b + 1) * N, :] = jnp.dot(
                x_ref[b].astype(jnp.bfloat16), wqkv_ref[...],
                preferred_element_type=jnp.float32).astype(jnp.bfloat16)

    # Sum of the scaled pre-softmax logits over heads and packed batch.
    attn_sum_ref[...] = jnp.zeros_like(attn_sum_ref)

    # ---- per-head attention (scale already folded into the Q weight columns) ----
    for b in range(block_b):                      # static: results flow to refs
        row = b * N
        for g in range(n_groups):
            outs = []
            for hh in range(heads_per_group):
                col = (g * heads_per_group + hh) * d
                qh = qkv_scratch[row:row + N, col:col + d]                # (N, d) bf16
                kh = qkv_scratch[row:row + N, C + col:C + col + d]        # (N, d) bf16
                vh = qkv_scratch[row:row + N, 2 * C + col:2 * C + col + d]

                # scores: contract on d directly (no materialized kh.T).
                s = lax.dot_general(qh, kh, (((1,), (1,)), ((), ())),
                                    preferred_element_type=jnp.float32)   # (N, N) f32
                attn_sum_ref[0] += s

                # softmax: f32 stats, exp on EUP, approx reciprocal (EUP) not divide.
                m = jnp.max(s, axis=-1, keepdims=True)
                p = jnp.exp(s - m)
                p = p * pl.reciprocal(jnp.sum(p, axis=-1, keepdims=True), approx=True)

                o = lax.dot_general(p.astype(jnp.bfloat16), vh,
                                    (((1,), (0,)), ((), ())),
                                    preferred_element_type=jnp.float32)   # (N, d) f32
                outs.append(o.astype(jnp.bfloat16))
            # one lane-dense store per head group (128-lane slab for d=64 ViT).
            slab = outs[0] if len(outs) == 1 else jnp.concatenate(outs, axis=-1)
            o_scratch[row:row + N, g * gw:(g + 1) * gw] = slab

    # ---- output projection: (Bt*N, C) @ (C, C) + bias, bf16 operands / f32 acc ----
    if merge_batch:
        y = jnp.dot(o_scratch[...], wproj_ref[...],
                    preferred_element_type=jnp.float32) + bproj_ref[...]
        out_ref[...] = y.reshape(block_b, N, C).astype(out_ref.dtype)
    else:
        for b in range(block_b):
            y = jnp.dot(o_scratch[b * N:(b + 1) * N, :], wproj_ref[...],
                        preferred_element_type=jnp.float32) + bproj_ref[...]
            out_ref[b] = y.astype(out_ref.dtype)


def prepare_attention_params(w_qkv, w_proj, b_proj, num_heads, qk_scale=None):
    """One-time parameter prep, hoisted out of the forward path: fold the softmax
    scale into the Q columns of w_qkv and cast weights to bf16.  Weights are
    stored input-major (in, out) so y = x @ W (+ b) matches torch.nn.Linear."""
    C = w_proj.shape[0]
    d = C // num_heads
    scale = qk_scale if qk_scale is not None else d ** -0.5
    w_q = w_qkv[:, :C] * jnp.float32(scale)
    w_qkv_bf = jnp.concatenate([w_q, w_qkv[:, C:]], axis=1).astype(jnp.bfloat16)
    return (w_qkv_bf, w_proj.astype(jnp.bfloat16),
            b_proj.reshape(1, C).astype(jnp.float32))


def attention_forward(x, w_qkv_bf, w_proj_bf, b_proj_2d, num_heads,
                      center=None, block_b=None):
    """Pallas-backed equivalent of Attention.forward.
    Returns (x_out, center_loss, new_center) — new_center mirrors `self.center`."""
    B, N, C = x.shape
    assert C % num_heads == 0, "dim must be divisible by num_heads"
    d = C // num_heads

    # Head grouping: store 128-lane group slabs when d divides 128 and the row is
    # wide enough; otherwise per-head stores (nothing to gain when C < 128).
    if d < 128 and C >= 128 and (128 % d == 0) and (num_heads % (128 // d) == 0):
        heads_per_group = 128 // d
    else:
        heads_per_group = 1

    # Per-chip targets: 256-row M feeds v6e/v7x's 2x256x256 MXU; 128 is enough
    # for v5e's 4x128x128 MXU.
    kind = ""
    try:
        kind = jax.devices()[0].device_kind.lower()
    except Exception:
        pass
    is_v5e = ("v5 lite" in kind) or ("v5e" in kind) or ("v5litepod" in kind)
    target_m = 128 if is_v5e else 256

    try:
        vmem_cap = int(pltpu.get_tpu_info().vmem_capacity_bytes)
    except Exception:
        vmem_cap = 64 * 2 ** 20          # conservative (v7x per-core VMEM)

    def vmem_need(bb):
        x_blk = bb * N * C * x.dtype.itemsize
        out_blk = bb * N * C * x.dtype.itemsize
        attn_blk = N * N * 4
        weights = C * 3 * C * 2 + C * C * 2 + C * 4
        scratch = bb * N * 3 * C * 2 + bb * N * C * 2
        temps = 4 * N * N * 4            # s / p / softmax temporaries per head
        return 2 * (x_blk + out_blk + attn_blk) + 2 * weights + scratch + temps

    if block_b is None:
        block_b = max(1, min(B, int(pl.cdiv(target_m, max(N, 1)))))
        while block_b > 1 and B % block_b != 0:
            block_b -= 1
        # Multi-TensorCore chips (v7x): prefer >= 2 grid steps when it does not
        # starve the MXU M dimension.
        if not is_v5e and B // block_b < 2:
            for cand in range(block_b - 1, 0, -1):
                if B % cand == 0 and B // cand >= 2 and cand * N >= 128:
                    block_b = cand
                    break
    while block_b > 1 and vmem_need(block_b) > int(0.6 * vmem_cap):
        block_b -= 1
    while block_b > 1 and B % block_b != 0:
        block_b -= 1
    assert B % block_b == 0
    grid_b = B // block_b
    merge_batch = (N % 8 == 0)           # clean sublane collapse -> merged matmuls

    need = vmem_need(block_b)
    vmem_limit = int(min(max(2 * need, 16 * 2 ** 20), int(0.75 * vmem_cap)))

    kernel = partial(_attention_kernel, num_heads=num_heads, block_b=block_b,
                     heads_per_group=heads_per_group, merge_batch=merge_batch)
    out, attn_sum = pl.pallas_call(
        kernel,
        out_shape=(
            jax.ShapeDtypeStruct((B, N, C), x.dtype),
            jax.ShapeDtypeStruct((grid_b, N, N), jnp.float32),  # per-step logit sum
        ),
        grid=(grid_b,),
        in_specs=[
            pl.BlockSpec((block_b, N, C), lambda i: (i, 0, 0)),   # x
            pl.BlockSpec((C, 3 * C), lambda i: (0, 0)),           # w_qkv (in, out), Q pre-scaled
            pl.BlockSpec((C, C), lambda i: (0, 0)),               # w_proj (in, out)
            pl.BlockSpec((1, C), lambda i: (0, 0)),               # proj bias
        ],
        out_specs=(
            pl.BlockSpec((block_b, N, C), lambda i: (i, 0, 0)),
            pl.BlockSpec((1, N, N), lambda i: (i, 0, 0)),
        ),
        scratch_shapes=[
            pltpu.VMEM((block_b * N, 3 * C), jnp.bfloat16),       # staged QKV
            pltpu.VMEM((block_b * N, C), jnp.bfloat16),           # per-head outputs
        ],
        compiler_params=pltpu.CompilerParams(
            dimension_semantics=("parallel",),
            vmem_limit_bytes=vmem_limit),
    )(x, w_qkv_bf, w_proj_bf, b_proj_2d)

    # --- center-loss bookkeeping (plain JAX glue; loss_weight = 0.0 in module) ---
    # The torch module computes the center features from the PRE-softmax scaled
    # logits, head-meaned then batch-meaned; only that mean is needed here.
    features_mean = attn_sum.sum(axis=0).reshape(N * N) / jnp.float32(B * num_heads)
    first_step = center is None
    if first_step:
        center = features_mean            # torch: attn.mean(1).mean(0).flatten(-2)
    center_loss = jnp.float32(0.0)        # loss_weight = 0.0 -> exactly zero
    batch_center = jax.lax.stop_gradient(features_mean) - center
    momentum = 0.8
    new_center = (batch_center if first_step
                  else center * momentum + batch_center * (1.0 - momentum))
    return out, center_loss, new_center


def _reference_forward(x, w_qkv, w_proj, b_proj, num_heads):
    """Pure-JAX f32 reference (mirrors the torch module) for correctness checks."""
    B, N, C = x.shape
    d = C // num_heads
    scale = d ** -0.5
    qkv = (x @ w_qkv).reshape(B, N, 3, num_heads, d).transpose(2, 0, 3, 1, 4)
    q, k, v = qkv[0], qkv[1], qkv[2]                              # (B, H, N, d)
    logits = jnp.einsum('bhnd,bhmd->bhnm', q, k) * scale
    attn = jax.nn.softmax(logits, axis=-1)
    o = jnp.einsum('bhnm,bhmd->bhnd', attn, v).transpose(0, 2, 1, 3).reshape(B, N, C)
    return o @ w_proj + b_proj, logits


if __name__ == "__main__":
    B, N, C = 2, 8, 32
    num_heads = 8   # module default; head_dim = 4

    key = jax.random.PRNGKey(0)
    kx, kqkv, kproj, kb = jax.random.split(key, 4)

    x = jax.random.normal(kx, (B, N, C), dtype=jnp.float32)
    # Synthetic deterministic params; Linear weights stored pre-transposed (in, out).
    w_qkv = jax.random.normal(kqkv, (C, 3 * C), dtype=jnp.float32) * 0.05
    w_proj = jax.random.normal(kproj, (C, C), dtype=jnp.float32) * 0.05
    b_proj = jax.random.normal(kb, (C,), dtype=jnp.float32) * 0.05

    params = prepare_attention_params(w_qkv, w_proj, b_proj, num_heads)

    out, center_loss, new_center = attention_forward(x, *params, num_heads)
    jax.block_until_ready((out, center_loss, new_center))

    ref_out, ref_logits = _reference_forward(x, w_qkv, w_proj, b_proj, num_heads)
    # Kernel runs bf16 matmuls with f32 accumulation vs an all-f32 reference.
    np.testing.assert_allclose(np.asarray(out), np.asarray(ref_out), rtol=2e-2, atol=2e-2)
    assert float(center_loss) == 0.0
    assert new_center.shape == (N * N,)

    # Second call with a known center validates the in-kernel logits reduction:
    # with center == 0, new_center == 0.2 * mean_{batch,heads}(scaled logits).
    zero_center = jnp.zeros((N * N,), jnp.float32)
    _, _, nc2 = attention_forward(x, *params, num_heads, center=zero_center)
    jax.block_until_ready(nc2)
    ref_feat = ref_logits.mean(axis=1).mean(axis=0).reshape(N * N)
    np.testing.assert_allclose(np.asarray(nc2), 0.2 * np.asarray(ref_feat),
                               rtol=2e-2, atol=2e-2)

    print("KERNEL_OK")
</pallas_src>

<mosaic_0001>
module attributes {stable_mosaic.version = 11 : i64} {
  func.func @_attention_kernel(%arg0: i32, %arg1: memref<2x8x32xf32, #tpu.memory_space<vmem>>, %arg2: memref<32x96xbf16, #tpu.memory_space<vmem>>, %arg3: memref<32x32xbf16, #tpu.memory_space<vmem>>, %arg4: memref<1x32xf32, #tpu.memory_space<vmem>>, %arg5: memref<2x8x32xf32, #tpu.memory_space<vmem>>, %arg6: memref<1x8x8xf32, #tpu.memory_space<vmem>>, %arg7: memref<16x96xbf16, #tpu.memory_space<vmem>>, %arg8: memref<16x32xbf16, #tpu.memory_space<vmem>>) attributes {dimension_semantics = [#tpu.dimension_semantics<parallel>], iteration_bounds = array<i64: 1>, scalar_prefetch = 0 : i64, scratch_operands = 2 : i64, tpu.core_type = #tpu.core_type<tc>, window_params = [{transform_indices = @transform_0, window_bounds = array<i64: 2, 8, 32>}, {pipeline_mode = #tpu.pipeline_mode<synchronous>, transform_indices = @transform_1, window_bounds = array<i64: 32, 96>}, {pipeline_mode = #tpu.pipeline_mode<synchronous>, transform_indices = @transform_2, window_bounds = array<i64: 32, 32>}, {pipeline_mode = #tpu.pipeline_mode<synchronous>, transform_indices = @transform_3, window_bounds = array<i64: 1, 32>}, {transform_indices = @transform_4, window_bounds = array<i64: 2, 8, 32>}, {transform_indices = @transform_5, window_bounds = array<i64: 1, 8, 8>}]} {
    %c0 = arith.constant 0 : index
    %c0_0 = arith.constant 0 : index
    %c0_1 = arith.constant 0 : index
    %0 = vector.load %arg1[%c0, %c0_0, %c0_1] : memref<2x8x32xf32, #tpu.memory_space<vmem>>, vector<2x8x32xf32>
    %1 = vector.shape_cast %0 : vector<2x8x32xf32> to vector<16x32xf32>
    %2 = arith.truncf %1 : vector<16x32xf32> to vector<16x32xbf16>
    %c0_2 = arith.constant 0 : index
    %c0_3 = arith.constant 0 : index
    %3 = vector.load %arg2[%c0_2, %c0_3] : memref<32x96xbf16, #tpu.memory_space<vmem>>, vector<32x96xbf16>
    %cst = arith.constant dense<0.000000e+00> : vector<16x96xf32>
    %4 = tpu.matmul %2, %3, %cst {dimension_numbers = #tpu.dot_dimension_numbers<[1], [0], [0], [1], [0, 0, 1, 1], [], []>} : vector<16x32xbf16>, vector<32x96xbf16>, vector<16x96xf32> -> vector<16x96xf32>
    %5 = arith.truncf %4 : vector<16x96xf32> to vector<16x96xbf16>
    %c0_4 = arith.constant 0 : index
    %c0_5 = arith.constant 0 : index
    %6 = vector.load %arg7[%c0_4, %c0_5] : memref<16x96xbf16, #tpu.memory_space<vmem>>, vector<16x96xbf16>
    tpu.vector_store %arg7[%c0_4, %c0_5], %5 {strides = array<i32>} : memref<16x96xbf16, #tpu.memory_space<vmem>>, vector<16x96xbf16>,
    %cst_6 = arith.constant 0.000000e+00 : f32
    %7 = vector.broadcast %cst_6 : f32 to vector<1x8x8xf32>
    %c0_7 = arith.constant 0 : index
    %c0_8 = arith.constant 0 : index
    %c0_9 = arith.constant 0 : index
    %8 = vector.load %arg6[%c0_7, %c0_8, %c0_9] : memref<1x8x8xf32, #tpu.memory_space<vmem>>, vector<1x8x8xf32>
    tpu.vector_store %arg6[%c0_7, %c0_8, %c0_9], %7 {strides = array<i32>} : memref<1x8x8xf32, #tpu.memory_space<vmem>>, vector<1x8x8xf32>,
    %c0_10 = arith.constant 0 : index
    %c0_11 = arith.constant 0 : index
    %9 = vector.load %arg7[%c0_10, %c0_11] : memref<16x96xbf16, #tpu.memory_space<vmem>>, vector<8x4xbf16>
    %c0_12 = arith.constant 0 : index
    %c32 = arith.constant 32 : index
    %10 = vector.load %arg7[%c0_12, %c32] : memref<16x96xbf16, #tpu.memory_space<vmem>>, vector<8x4xbf16>
    %c0_13 = arith.constant 0 : index
    %c64 = arith.constant 64 : index
    %11 = vector.load %arg7[%c0_13, %c64] : memref<16x96xbf16, #tpu.memory_space<vmem>>, vector<8x4xbf16>
    %cst_14 = arith.constant dense<0.000000e+00> : vector<8x8xf32>
    %12 = tpu.matmul %9, %10, %cst_14 {dimension_numbers = #tpu.dot_dimension_numbers<[1], [1], [0], [0], [0, 0, 1, 0], [], []>} : vector<8x4xbf16>, vector<8x4xbf16>, vector<8x8xf32> -> vector<8x8xf32>
    %c0_15 = arith.constant 0 : index
    %c0_16 = arith.constant 0 : index
    %c0_17 = arith.constant 0 : index
    %13 = vector.load %arg6[%c0_15, %c0_16, %c0_17] : memref<1x8x8xf32, #tpu.memory_space<vmem>>, vector<1x8x8xf32>
    %14 = vector.shape_cast %13 : vector<1x8x8xf32> to vector<8x8xf32>
    %15 = arith.addf %14, %12 : vector<8x8xf32>
    %c0_18 = arith.constant 0 : index
    %c0_19 = arith.constant 0 : index
    %c0_20 = arith.constant 0 : index
    %16 = vector.load %arg6[%c0_18, %c0_19, %c0_20] : memref<1x8x8xf32, #tpu.memory_space<vmem>>, vector<1x8x8xf32>
    %17 = vector.shape_cast %16 : vector<1x8x8xf32> to vector<8x8xf32>
    %18 = vector.shape_cast %15 : vector<8x8xf32> to vector<1x8x8xf32>
    tpu.vector_store %arg6[%c0_18, %c0_19, %c0_20], %18 {strides = array<i32>} : memref<1x8x8xf32, #tpu.memory_space<vmem>>, vector<1x8x8xf32>,
    %cst_21 = arith.constant dense<0xFF800000> : vector<8xf32>
    %19 = vector.multi_reduction <maximumf>, %12, %cst_21 [1] : vector<8x8xf32> to vector<8xf32>
    %20 = vector.shape_cast %19 : vector<8xf32> to vector<8x1xf32>
    %21 = vector.broadcast %20 : vector<8x1xf32> to vector<8x8xf32>
    %22 = arith.subf %12, %21 : vector<8x8xf32>
    %23 = math.exp %22 : vector<8x8xf32>
    %cst_22 = arith.constant dense<0.000000e+00> : vector<8xf32>
    %24 = vector.multi_reduction <add>, %23, %cst_22 [1] : vector<8x8xf32> to vector<8xf32>
    %25 = vector.shape_cast %24 : vector<8xf32> to vector<8x1xf32>
    %26 = tpu.reciprocal %25 {approx = true} : vector<8x1xf32> -> vector<8x1xf32>
    %27 = vector.broadcast %26 : vector<8x1xf32> to vector<8x8xf32>
    %28 = arith.mulf %23, %27 : vector<8x8xf32>
    %29 = arith.truncf %28 : vector<8x8xf32> to vector<8x8xbf16>
    %cst_23 = arith.constant dense<0.000000e+00> : vector<8x4xf32>
    %30 = tpu.matmul %29, %11, %cst_23 {dimension_numbers = #tpu.dot_dimension_numbers<[1], [0], [0], [1], [0, 0, 1, 1], [], []>} : vector<8x8xbf16>, vector<8x4xbf16>, vector<8x4xf32> -> vector<8x4xf32>
    %31 = arith.truncf %30 : vector<8x4xf32> to vector<8x4xbf16>
    %c0_24 = arith.constant 0 : index
    %c0_25 = arith.constant 0 : index
    %32 = vector.load %arg8[%c0_24, %c0_25] : memref<16x32xbf16, #tpu.memory_space<vmem>>, vector<8x4xbf16>
    tpu.vector_store %arg8[%c0_24, %c0_25], %31 {strides = array<i32>} : memref<16x32xbf16, #tpu.memory_space<vmem>>, vector<8x4xbf16>,
    %c0_26 = arith.constant 0 : index
    %c4 = arith.constant 4 : index
    %33 = vector.load %arg7[%c0_26, %c4] : memref<16x96xbf16, #tpu.memory_space<vmem>>, vector<8x4xbf16>
    %c0_27 = arith.constant 0 : index
    %c36 = arith.constant 36 : index
    %34 = vector.load %arg7[%c0_27, %c36] : memref<16x96xbf16, #tpu.memory_space<vmem>>, vector<8x4xbf16>
    %c0_28 = arith.constant 0 : index
    %c68 = arith.constant 68 : index
    %35 = vector.load %arg7[%c0_28, %c68] : memref<16x96xbf16, #tpu.memory_space<vmem>>, vector<8x4xbf16>
    %cst_29 = arith.constant dense<0.000000e+00> : vector<8x8xf32>
    %36 = tpu.matmul %33, %34, %cst_29 {dimension_numbers = #tpu.dot_dimension_numbers<[1], [1], [0], [0], [0, 0, 1, 0], [], []>} : vector<8x4xbf16>, vector<8x4xbf16>, vector<8x8xf32> -> vector<8x8xf32>
    %c0_30 = arith.constant 0 : index
    %c0_31 = arith.constant 0 : index
    %c0_32 = arith.constant 0 : index
    %37 = vector.load %arg6[%c0_30, %c0_31, %c0_32] : memref<1x8x8xf32, #tpu.memory_space<vmem>>, vector<1x8x8xf32>
    %38 = vector.shape_cast %37 : vector<1x8x8xf32> to vector<8x8xf32>
    %39 = arith.addf %38, %36 : vector<8x8xf32>
    %c0_33 = arith.constant 0 : index
    %c0_34 = arith.constant 0 : index
    %c0_35 = arith.constant 0 : index
    %40 = vector.load %arg6[%c0_33, %c0_34, %c0_35] : memref<1x8x8xf32, #tpu.memory_space<vmem>>, vector<1x8x8xf32>
    %41 = vector.shape_cast %40 : vector<1x8x8xf32> to vector<8x8xf32>
    %42 = vector.shape_cast %39 : vector<8x8xf32> to vector<1x8x8xf32>
    tpu.vector_store %arg6[%c0_33, %c0_34, %c0_35], %42 {strides = array<i32>} : memref<1x8x8xf32, #tpu.memory_space<vmem>>, vector<1x8x8xf32>,
    %cst_36 = arith.constant dense<0xFF800000> : vector<8xf32>
    %43 = vector.multi_reduction <maximumf>, %36, %cst_36 [1] : vector<8x8xf32> to vector<8xf32>
    %44 = vector.shape_cast %43 : vector<8xf32> to vector<8x1xf32>
    %45 = vector.broadcast %44 : vector<8x1xf32> to vector<8x8xf32>
    %46 = arith.subf %36, %45 : vector<8x8xf32>
    %47 = math.exp %46 : vector<8x8xf32>
    %cst_37 = arith.constant dense<0.000000e+00> : vector<8xf32>
    %48 = vector.multi_reduction <add>, %47, %cst_37 [1] : vector<8x8xf32> to vector<8xf32>
    %49 = vector.shape_cast %48 : vector<8xf32> to vector<8x1xf32>
    %50 = tpu.reciprocal %49 {approx = true} : vector<8x1xf32> -> vector<8x1xf32>
    %51 = vector.broadcast %50 : vector<8x1xf32> to vector<8x8xf32>
    %52 = arith.mulf %47, %51 : vector<8x8xf32>
    %53 = arith.truncf %52 : vector<8x8xf32> to vector<8x8xbf16>
    %cst_38 = arith.constant dense<0.000000e+00> : vector<8x4xf32>
    %54 = tpu.matmul %53, %35, %cst_38 {dimension_numbers = #tpu.dot_dimension_numbers<[1], [0], [0], [1], [0, 0, 1, 1], [], []>} : vector<8x8xbf16>, vector<8x4xbf16>, vector<8x4xf32> -> vector<8x4xf32>
    %55 = arith.truncf %54 : vector<8x4xf32> to vector<8x4xbf16>
    %c0_39 = arith.constant 0 : index
    %c4_40 = arith.constant 4 : index
    %56 = vector.load %arg8[%c0_39, %c4_40] : memref<16x32xbf16, #tpu.memory_space<vmem>>, vector<8x4xbf16>
    tpu.vector_store %arg8[%c0_39, %c4_40], %55 {strides = array<i32>} : memref<16x32xbf16, #tpu.memory_space<vmem>>, vector<8x4xbf16>,
    %c0_41 = arith.constant 0 : index
    %c8 = arith.constant 8 : index
    %57 = vector.load %arg7[%c0_41, %c8] : memref<16x96xbf16, #tpu.memory_space<vmem>>, vector<8x4xbf16>
    %c0_42 = arith.constant 0 : index
    %c40 = arith.constant 40 : index
    %58 = vector.load %arg7[%c0_42, %c40] : memref<16x96xbf16, #tpu.memory_space<vmem>>, vector<8x4xbf16>
    %c0_43 = arith.constant 0 : index
    %c72 = arith.constant 72 : index
    %59 = vector.load %arg7[%c0_43, %c72] : memref<16x96xbf16, #tpu.memory_space<vmem>>, vector<8x4xbf16>
    %cst_44 = arith.constant dense<0.000000e+00> : vector<8x8xf32>
    %60 = tpu.matmul %57, %58, %cst_44 {dimension_numbers = #tpu.dot_dimension_numbers<[1], [1], [0], [0], [0, 0, 1, 0], [], []>} : vector<8x4xbf16>, vector<8x4xbf16>, vector<8x8xf32> -> vector<8x8xf32>
    %c0_45 = arith.constant 0 : index
    %c0_46 = arith.constant 0 : index
    %c0_47 = arith.constant 0 : index
    %61 = vector.load %arg6[%c0_45, %c0_46, %c0_47] : memref<1x8x8xf32, #tpu.memory_space<vmem>>, vector<1x8x8xf32>
    %62 = vector.shape_cast %61 : vector<1x8x8xf32> to vector<8x8xf32>
    %63 = arith.addf %62, %60 : vector<8x8xf32>
    %c0_48 = arith.constant 0 : index
    %c0_49 = arith.constant 0 : index
    %c0_50 = arith.constant 0 : index
    %64 = vector.load %arg6[%c0_48, %c0_49, %c0_50] : memref<1x8x8xf32, #tpu.memory_space<vmem>>, vector<1x8x8xf32>
    %65 = vector.shape_cast %64 : vector<1x8x8xf32> to vector<8x8xf32>
    %66 = vector.shape_cast %63 : vector<8x8xf32> to vector<1x8x8xf32>
    tpu.vector_store %arg6[%c0_48, %c0_49, %c0_50], %66 {strides = array<i32>} : memref<1x8x8xf32, #tpu.memory_space<vmem>>, vector<1x8x8xf32>,
    %cst_51 = arith.constant dense<0xFF800000> : vector<8xf32>
    %67 = vector.multi_reduction <maximumf>, %60, %cst_51 [1] : vector<8x8xf32> to vector<8xf32>
    %68 = vector.shape_cast %67 : vector<8xf32> to vector<8x1xf32>
    %69 = vector.broadcast %68 : vector<8x1xf32> to vector<8x8xf32>
    %70 = arith.subf %60, %69 : vector<8x8xf32>
    %71 = math.exp %70 : vector<8x8xf32>
    %cst_52 = arith.constant dense<0.000000e+00> : vector<8xf32>
    %72 = vector.multi_reduction <add>, %71, %cst_52 [1] : vector<8x8xf32> to vector<8xf32>
    %73 = vector.shape_cast %72 : vector<8xf32> to vector<8x1xf32>
    %74 = tpu.reciprocal %73 {approx = true} : vector<8x1xf32> -> vector<8x1xf32>
    %75 = vector.broadcast %74 : vector<8x1xf32> to vector<8x8xf32>
    %76 = arith.mulf %71, %75 : vector<8x8xf32>
    %77 = arith.truncf %76 : vector<8x8xf32> to vector<8x8xbf16>
    %cst_53 = arith.constant dense<0.000000e+00> : vector<8x4xf32>
    %78 = tpu.matmul %77, %59, %cst_53 {dimension_numbers = #tpu.dot_dimension_numbers<[1], [0], [0], [1], [0, 0, 1, 1], [], []>} : vector<8x8xbf16>, vector<8x4xbf16>, vector<8x4xf32> -> vector<8x4xf32>
    %79 = arith.truncf %78 : vector<8x4xf32> to vector<8x4xbf16>
    %c0_54 = arith.constant 0 : index
    %c8_55 = arith.constant 8 : index
    %80 = vector.load %arg8[%c0_54, %c8_55] : memref<16x32xbf16, #tpu.memory_space<vmem>>, vector<8x4xbf16>
    tpu.vector_store %arg8[%c0_54, %c8_55], %79 {strides = array<i32>} : memref<16x32xbf16, #tpu.memory_space<vmem>>, vector<8x4xbf16>,
    %c0_56 = arith.constant 0 : index
    %c12 = arith.constant 12 : index
    %81 = vector.load %arg7[%c0_56, %c12] : memref<16x96xbf16, #tpu.memory_space<vmem>>, vector<8x4xbf16>
    %c0_57 = arith.constant 0 : index
    %c44 = arith.constant 44 : index
    %82 = vector.load %arg7[%c0_57, %c44] : memref<16x96xbf16, #tpu.memory_space<vmem>>, vector<8x4xbf16>
    %c0_58 = arith.constant 0 : index
    %c76 = arith.constant 76 : index
    %83 = vector.load %arg7[%c0_58, %c76] : memref<16x96xbf16, #tpu.memory_space<vmem>>, vector<8x4xbf16>
    %cst_59 = arith.constant dense<0.000000e+00> : vector<8x8xf32>
    %84 = tpu.matmul %81, %82, %cst_59 {dimension_numbers = #tpu.dot_dimension_numbers<[1], [1], [0], [0], [0, 0, 1, 0], [], []>} : vector<8x4xbf16>, vector<8x4xbf16>, vector<8x8xf32> -> vector<8x8xf32>
    %c0_60 = arith.constant 0 : index
    %c0_61 = arith.constant 0 : index
    %c0_62 = arith.constant 0 : index
    %85 = vector.load %arg6[%c0_60, %c0_61, %c0_62] : memref<1x8x8xf32, #tpu.memory_space<vmem>>, vector<1x8x8xf32>
    %86 = vector.shape_cast %85 : vector<1x8x8xf32> to vector<8x8xf32>
    %87 = arith.addf %86, %84 : vector<8x8xf32>
    %c0_63 = arith.constant 0 : index
    %c0_64 = arith.constant 0 : index
    %c0_65 = arith.constant 0 : index
    %88 = vector.load %arg6[%c0_63, %c0_64, %c0_65] : memref<1x8x8xf32, #tpu.memory_space<vmem>>, vector<1x8x8xf32>
    %89 = vector.shape_cast %88 : vector<1x8x8xf32> to vector<8x8xf32>
    %90 = vector.shape_cast %87 : vector<8x8xf32> to vector<1x8x8xf32>
    tpu.vector_store %arg6[%c0_63, %c0_64, %c0_65], %90 {strides = array<i32>} : memref<1x8x8xf32, #tpu.memory_space<vmem>>, vector<1x8x8xf32>,
    %cst_66 = arith.constant dense<0xFF800000> : vector<8xf32>
    %91 = vector.multi_reduction <maximumf>, %84, %cst_66 [1] : vector<8x8xf32> to vector<8xf32>
    %92 = vector.shape_cast %91 : vector<8xf32> to vector<8x1xf32>
    %93 = vector.broadcast %92 : vector<8x1xf32> to vector<8x8xf32>
    %94 = arith.subf %84, %93 : vector<8x8xf32>
    %95 = math.exp %94 : vector<8x8xf32>
    %cst_67 = arith.constant dense<0.000000e+00> : vector<8xf32>
    %96 = vector.multi_reduction <add>, %95, %cst_67 [1] : vector<8x8xf32> to vector<8xf32>
    %97 = vector.shape_cast %96 : vector<8xf32> to vector<8x1xf32>
    %98 = tpu.reciprocal %97 {approx = true} : vector<8x1xf32> -> vector<8x1xf32>
    %99 = vector.broadcast %98 : vector<8x1xf32> to vector<8x8xf32>
    %100 = arith.mulf %95, %99 : vector<8x8xf32>
    %101 = arith.truncf %100 : vector<8x8xf32> to vector<8x8xbf16>
    %cst_68 = arith.constant dense<0.000000e+00> : vector<8x4xf32>
    %102 = tpu.matmul %101, %83, %cst_68 {dimension_numbers = #tpu.dot_dimension_numbers<[1], [0], [0], [1], [0, 0, 1, 1], [], []>} : vector<8x8xbf16>, vector<8x4xbf16>, vector<8x4xf32> -> vector<8x4xf32>
    %103 = arith.truncf %102 : vector<8x4xf32> to vector<8x4xbf16>
    %c0_69 = arith.constant 0 : index
    %c12_70 = arith.constant 12 : index
    %104 = vector.load %arg8[%c0_69, %c12_70] : memref<16x32xbf16, #tpu.memory_space<vmem>>, vector<8x4xbf16>
    tpu.vector_store %arg8[%c0_69, %c12_70], %103 {strides = array<i32>} : memref<16x32xbf16, #tpu.memory_space<vmem>>, vector<8x4xbf16>,
    %c0_71 = arith.constant 0 : index
    %c16 = arith.constant 16 : index
    %105 = vector.load %arg7[%c0_71, %c16] : memref<16x96xbf16, #tpu.memory_space<vmem>>, vector<8x4xbf16>
    %c0_72 = arith.constant 0 : index
    %c48 = arith.constant 48 : index
    %106 = vector.load %arg7[%c0_72, %c48] : memref<16x96xbf16, #tpu.memory_space<vmem>>, vector<8x4xbf16>
    %c0_73 = arith.constant 0 : index
    %c80 = arith.constant 80 : index
    %107 = vector.load %arg7[%c0_73, %c80] : memref<16x96xbf16, #tpu.memory_space<vmem>>, vector<8x4xbf16>
    %cst_74 = arith.constant dense<0.000000e+00> : vector<8x8xf32>
    %108 = tpu.matmul %105, %106, %cst_74 {dimension_numbers = #tpu.dot_dimension_numbers<[1], [1], [0], [0], [0, 0, 1, 0], [], []>} : vector<8x4xbf16>, vector<8x4xbf16>, vector<8x8xf32> -> vector<8x8xf32>
    %c0_75 = arith.constant 0 : index
    %c0_76 = arith.constant 0 : index
    %c0_77 = arith.constant 0 : index
    %109 = vector.load %arg6[%c0_75, %c0_76, %c0_77] : memref<1x8x8xf32, #tpu.memory_space<vmem>>, vector<1x8x8xf32>
    %110 = vector.shape_cast %109 : vector<1x8x8xf32> to vector<8x8xf32>
    %111 = arith.addf %110, %108 : vector<8x8xf32>
    %c0_78 = arith.constant 0 : index
    %c0_79 = arith.constant 0 : index
    %c0_80 = arith.constant 0 : index
    %112 = vector.load %arg6[%c0_78, %c0_79, %c0_80] : memref<1x8x8xf32, #tpu.memory_space<vmem>>, vector<1x8x8xf32>
    %113 = vector.shape_cast %112 : vector<1x8x8xf32> to vector<8x8xf32>
    %114 = vector.shape_cast %111 : vector<8x8xf32> to vector<1x8x8xf32>
    tpu.vector_store %arg6[%c0_78, %c0_79, %c0_80], %114 {strides = array<i32>} : memref<1x8x8xf32, #tpu.memory_space<vmem>>, vector<1x8x8xf32>,
    %cst_81 = arith.constant dense<0xFF800000> : vector<8xf32>
    %115 = vector.multi_reduction <maximumf>, %108, %cst_81 [1] : vector<8x8xf32> to vector<8xf32>
    %116 = vector.shape_cast %115 : vector<8xf32> to vector<8x1xf32>
    %117 = vector.broadcast %116 : vector<8x1xf32> to vector<8x8xf32>
    %118 = arith.subf %108, %117 : vector<8x8xf32>
    %119 = math.exp %118 : vector<8x8xf32>
    %cst_82 = arith.constant dense<0.000000e+00> : vector<8xf32>
    %120 = vector.multi_reduction <add>, %119, %cst_82 [1] : vector<8x8xf32> to vector<8xf32>
    %121 = vector.shape_cast %120 : vector<8xf32> to vector<8x1xf32>
    %122 = tpu.reciprocal %121 {approx = true} : vector<8x1xf32> -> vector<8x1xf32>
    %123 = vector.broadcast %122 : vector<8x1xf32> to vector<8x8xf32>
    %124 = arith.mulf %119, %123 : vector<8x8xf32>
    %125 = arith.truncf %124 : vector<8x8xf32> to vector<8x8xbf16>
    %cst_83 = arith.constant dense<0.000000e+00> : vector<8x4xf32>
    %126 = tpu.matmul %125, %107, %cst_83 {dimension_numbers = #tpu.dot_dimension_numbers<[1], [0], [0], [1], [0, 0, 1, 1], [], []>} : vector<8x8xbf16>, vector<8x4xbf16>, vector<8x4xf32> -> vector<8x4xf32>
    %127 = arith.truncf %126 : vector<8x4xf32> to vector<8x4xbf16>
    %c0_84 = arith.constant 0 : index
    %c16_85 = arith.constant 16 : index
    %128 = vector.load %arg8[%c0_84, %c16_85] : memref<16x32xbf16, #tpu.memory_space<vmem>>, vector<8x4xbf16>
    tpu.vector_store %arg8[%c0_84, %c16_85], %127 {strides = array<i32>} : memref<16x32xbf16, #tpu.memory_space<vmem>>, vector<8x4xbf16>,
    %c0_86 = arith.constant 0 : index
    %c20 = arith.constant 20 : index
    %129 = vector.load %arg7[%c0_86, %c20] : memref<16x96xbf16, #tpu.memory_space<vmem>>, vector<8x4xbf16>
    %c0_87 = arith.constant 0 : index
    %c52 = arith.constant 52 : index
    %130 = vector.load %arg7[%c0_87, %c52] : memref<16x96xbf16, #tpu.memory_space<vmem>>, vector<8x4xbf16>
    %c0_88 = arith.constant 0 : index
    %c84 = arith.constant 84 : index
    %131 = vector.load %arg7[%c0_88, %c84] : memref<16x96xbf16, #tpu.memory_space<vmem>>, vector<8x4xbf16>
    %cst_89 = arith.constant dense<0.000000e+00> : vector<8x8xf32>
    %132 = tpu.matmul %129, %130, %cst_89 {dimension_numbers = #tpu.dot_dimension_numbers<[1], [1], [0], [0], [0, 0, 1, 0], [], []>} : vector<8x4xbf16>, vector<8x4xbf16>, vector<8x8xf32> -> vector<8x8xf32>
    %c0_90 = arith.constant 0 : index
    %c0_91 = arith.constant 0 : index
    %c0_92 = arith.constant 0 : index
    %133 = vector.load %arg6[%c0_90, %c0_91, %c0_92] : memref<1x8x8xf32, #tpu.memory_space<vmem>>, vector<1x8x8xf32>
    %134 = vector.shape_cast %133 : vector<1x8x8xf32> to vector<8x8xf32>
    %135 = arith.addf %134, %132 : vector<8x8xf32>
    %c0_93 = arith.constant 0 : index
    %c0_94 = arith.constant 0 : index
    %c0_95 = arith.constant 0 : index
    %136 = vector.load %arg6[%c0_93, %c0_94, %c0_95] : memref<1x8x8xf32, #tpu.memory_space<vmem>>, vector<1x8x8xf32>
    %137 = vector.shape_cast %136 : vector<1x8x8xf32> to vector<8x8xf32>
    %138 = vector.shape_cast %135 : vector<8x8xf32> to vector<1x8x8xf32>
    tpu.vector_store %arg6[%c0_93, %c0_94, %c0_95], %138 {strides = array<i32>} : memref<1x8x8xf32, #tpu.memory_space<vmem>>, vector<1x8x8xf32>,
    %cst_96 = arith.constant dense<0xFF800000> : vector<8xf32>
    %139 = vector.multi_reduction <maximumf>, %132, %cst_96 [1] : vector<8x8xf32> to vector<8xf32>
    %140 = vector.shape_cast %139 : vector<8xf32> to vector<8x1xf32>
    %141 = vector.broadcast %140 : vector<8x1xf32> to vector<8x8xf32>
    %142 = arith.subf %132, %141 : vector<8x8xf32>
    %143 = math.exp %142 : vector<8x8xf32>
    %cst_97 = arith.constant dense<0.000000e+00> : vector<8xf32>
    %144 = vector.multi_reduction <add>, %143, %cst_97 [1] : vector<8x8xf32> to vector<8xf32>
    %145 = vector.shape_cast %144 : vector<8xf32> to vector<8x1xf32>
    %146 = tpu.reciprocal %145 {approx = true} : vector<8x1xf32> -> vector<8x1xf32>
    %147 = vector.broadcast %146 : vector<8x1xf32> to vector<8x8xf32>
    %148 = arith.mulf %143, %147 : vector<8x8xf32>
    %149 = arith.truncf %148 : vector<8x8xf32> to vector<8x8xbf16>
    %cst_98 = arith.constant dense<0.000000e+00> : vector<8x4xf32>
    %150 = tpu.matmul %149, %131, %cst_98 {dimension_numbers = #tpu.dot_dimension_numbers<[1], [0], [0], [1], [0, 0, 1, 1], [], []>} : vector<8x8xbf16>, vector<8x4xbf16>, vector<8x4xf32> -> vector<8x4xf32>
    %151 = arith.truncf %150 : vector<8x4xf32> to vector<8x4xbf16>
    %c0_99 = arith.constant 0 : index
    %c20_100 = arith.constant 20 : index
    %152 = vector.load %arg8[%c0_99, %c20_100] : memref<16x32xbf16, #tpu.memory_space<vmem>>, vector<8x4xbf16>
    tpu.vector_store %arg8[%c0_99, %c20_100], %151 {strides = array<i32>} : memref<16x32xbf16, #tpu.memory_space<vmem>>, vector<8x4xbf16>,
    %c0_101 = arith.constant 0 : index
    %c24 = arith.constant 24 : index
    %153 = vector.load %arg7[%c0_101, %c24] : memref<16x96xbf16, #tpu.memory_space<vmem>>, vector<8x4xbf16>
    %c0_102 = arith.constant 0 : index
    %c56 = arith.constant 56 : index
    %154 = vector.load %arg7[%c0_102, %c56] : memref<16x96xbf16, #tpu.memory_space<vmem>>, vector<8x4xbf16>
    %c0_103 = arith.constant 0 : index
    %c88 = arith.constant 88 : index
    %155 = vector.load %arg7[%c0_103, %c88] : memref<16x96xbf16, #tpu.memory_space<vmem>>, vector<8x4xbf16>
    %cst_104 = arith.constant dense<0.000000e+00> : vector<8x8xf32>
    %156 = tpu.matmul %153, %154, %cst_104 {dimension_numbers = #tpu.dot_dimension_numbers<[1], [1], [0], [0], [0, 0, 1, 0], [], []>} : vector<8x4xbf16>, vector<8x4xbf16>, vector<8x8xf32> -> vector<8x8xf32>
    %c0_105 = arith.constant 0 : index
    %c0_106 = arith.constant 0 : index
    %c0_107 = arith.constant 0 : index
    %157 = vector.load %arg6[%c0_105, %c0_106, %c0_107] : memref<1x8x8xf32, #tpu.memory_space<vmem>>, vector<1x8x8xf32>
    %158 = vector.shape_cast %157 : vector<1x8x8xf32> to vector<8x8xf32>
    %159 = arith.addf %158, %156 : vector<8x8xf32>
    %c0_108 = arith.constant 0 : index
    %c0_109 = arith.constant 0 : index
    %c0_110 = arith.constant 0 : index
    %160 = vector.load %arg6[%c0_108, %c0_109, %c0_110] : memref<1x8x8xf32, #tpu.memory_space<vmem>>, vector<1x8x8xf32>
    %161 = vector.shape_cast %160 : vector<1x8x8xf32> to vector<8x8xf32>
    %162 = vector.shape_cast %159 : vector<8x8xf32> to vector<1x8x8xf32>
    tpu.vector_store %arg6[%c0_108, %c0_109, %c0_110], %162 {strides = array<i32>} : memref<1x8x8xf32, #tpu.memory_space<vmem>>, vector<1x8x8xf32>,
    %cst_111 = arith.constant dense<0xFF800000> : vector<8xf32>
    %163 = vector.multi_reduction <maximumf>, %156, %cst_111 [1] : vector<8x8xf32> to vector<8xf32>
    %164 = vector.shape_cast %163 : vector<8xf32> to vector<8x1xf32>
    %165 = vector.broadcast %164 : vector<8x1xf32> to vector<8x8xf32>
    %166 = arith.subf %156, %165 : vector<8x8xf32>
    %167 = math.exp %166 : vector<8x8xf32>
    %cst_112 = arith.constant dense<0.000000e+00> : vector<8xf32>
    %168 = vector.multi_reduction <add>, %167, %cst_112 [1] : vector<8x8xf32> to vector<8xf32>
    %169 = vector.shape_cast %168 : vector<8xf32> to vector<8x1xf32>
    %170 = tpu.reciprocal %169 {approx = true} : vector<8x1xf32> -> vector<8x1xf32>
    %171 = vector.broadcast %170 : vector<8x1xf32> to vector<8x8xf32>
    %172 = arith.mulf %167, %171 : vector<8x8xf32>
    %173 = arith.truncf %172 : vector<8x8xf32> to vector<8x8xbf16>
    %cst_113 = arith.constant dense<0.000000e+00> : vector<8x4xf32>
    %174 = tpu.matmul %173, %155, %cst_113 {dimension_numbers = #tpu.dot_dimension_numbers<[1], [0], [0], [1], [0, 0, 1, 1], [], []>} : vector<8x8xbf16>, vector<8x4xbf16>, vector<8x4xf32> -> vector<8x4xf32>
    %175 = arith.truncf %174 : vector<8x4xf32> to vector<8x4xbf16>
    %c0_114 = arith.constant 0 : index
    %c24_115 = arith.constant 24 : index
    %176 = vector.load %arg8[%c0_114, %c24_115] : memref<16x32xbf16, #tpu.memory_space<vmem>>, vector<8x4xbf16>
    tpu.vector_store %arg8[%c0_114, %c24_115], %175 {strides = array<i32>} : memref<16x32xbf16, #tpu.memory_space<vmem>>, vector<8x4xbf16>,
    %c0_116 = arith.constant 0 : index
    %c28 = arith.constant 28 : index
    %177 = vector.load %arg7[%c0_116, %c28] : memref<16x96xbf16, #tpu.memory_space<vmem>>, vector<8x4xbf16>
    %c0_117 = arith.constant 0 : index
    %c60 = arith.constant 60 : index
    %178 = vector.load %arg7[%c0_117, %c60] : memref<16x96xbf16, #tpu.memory_space<vmem>>, vector<8x4xbf16>
    %c0_118 = arith.constant 0 : index
    %c92 = arith.constant 92 : index
    %179 = vector.load %arg7[%c0_118, %c92] : memref<16x96xbf16, #tpu.memory_space<vmem>>, vector<8x4xbf16>
    %cst_119 = arith.constant dense<0.000000e+00> : vector<8x8xf32>
    %180 = tpu.matmul %177, %178, %cst_119 {dimension_numbers = #tpu.dot_dimension_numbers<[1], [1], [0], [0], [0, 0, 1, 0], [], []>} : vector<8x4xbf16>, vector<8x4xbf16>, vector<8x8xf32> -> vector<8x8xf32>
    %c0_120 = arith.constant 0 : index
    %c0_121 = arith.constant 0 : index
    %c0_122 = arith.constant 0 : index
    %181 = vector.load %arg6[%c0_120, %c0_121, %c0_122] : memref<1x8x8xf32, #tpu.memory_space<vmem>>, vector<1x8x8xf32>
    %182 = vector.shape_cast %181 : vector<1x8x8xf32> to vector<8x8xf32>
    %183 = arith.addf %182, %180 : vector<8x8xf32>
    %c0_123 = arith.constant 0 : index
    %c0_124 = arith.constant 0 : index
    %c0_125 = arith.constant 0 : index
    %184 = vector.load %arg6[%c0_123, %c0_124, %c0_125] : memref<1x8x8xf32, #tpu.memory_space<vmem>>, vector<1x8x8xf32>
    %185 = vector.shape_cast %184 : vector<1x8x8xf32> to vector<8x8xf32>
    %186 = vector.shape_cast %183 : vector<8x8xf32> to vector<1x8x8xf32>
    tpu.vector_store %arg6[%c0_123, %c0_124, %c0_125], %186 {strides = array<i32>} : memref<1x8x8xf32, #tpu.memory_space<vmem>>, vector<1x8x8xf32>,
    %cst_126 = arith.constant dense<0xFF800000> : vector<8xf32>
    %187 = vector.multi_reduction <maximumf>, %180, %cst_126 [1] : vector<8x8xf32> to vector<8xf32>
    %188 = vector.shape_cast %187 : vector<8xf32> to vector<8x1xf32>
    %189 = vector.broadcast %188 : vector<8x1xf32> to vector<8x8xf32>
    %190 = arith.subf %180, %189 : vector<8x8xf32>
    %191 = math.exp %190 : vector<8x8xf32>
    %cst_127 = arith.constant dense<0.000000e+00> : vector<8xf32>
    %192 = vector.multi_reduction <add>, %191, %cst_127 [1] : vector<8x8xf32> to vector<8xf32>
    %193 = vector.shape_cast %192 : vector<8xf32> to vector<8x1xf32>
    %194 = tpu.reciprocal %193 {approx = true} : vector<8x1xf32> -> vector<8x1xf32>
    %195 = vector.broadcast %194 : vector<8x1xf32> to vector<8x8xf32>
    %196 = arith.mulf %191, %195 : vector<8x8xf32>
    %197 = arith.truncf %196 : vector<8x8xf32> to vector<8x8xbf16>
    %cst_128 = arith.constant dense<0.000000e+00> : vector<8x4xf32>
    %198 = tpu.matmul %197, %179, %cst_128 {dimension_numbers = #tpu.dot_dimension_numbers<[1], [0], [0], [1], [0, 0, 1, 1], [], []>} : vector<8x8xbf16>, vector<8x4xbf16>, vector<8x4xf32> -> vector<8x4xf32>
    %199 = arith.truncf %198 : vector<8x4xf32> to vector<8x4xbf16>
    %c0_129 = arith.constant 0 : index
    %c28_130 = arith.constant 28 : index
    %200 = vector.load %arg8[%c0_129, %c28_130] : memref<16x32xbf16, #tpu.memory_space<vmem>>, vector<8x4xbf16>
    tpu.vector_store %arg8[%c0_129, %c28_130], %199 {strides = array<i32>} : memref<16x32xbf16, #tpu.memory_space<vmem>>, vector<8x4xbf16>,
    %c8_131 = arith.constant 8 : index
    %c0_132 = arith.constant 0 : index
    %201 = vector.load %arg7[%c8_131, %c0_132] : memref<16x96xbf16, #tpu.memory_space<vmem>>, vector<8x4xbf16>
    %c8_133 = arith.constant 8 : index
    %c32_134 = arith.constant 32 : index
    %202 = vector.load %arg7[%c8_133, %c32_134] : memref<16x96xbf16, #tpu.memory_space<vmem>>, vector<8x4xbf16>
    %c8_135 = arith.constant 8 : index
    %c64_136 = arith.constant 64 : index
    %203 = vector.load %arg7[%c8_135, %c64_136] : memref<16x96xbf16, #tpu.memory_space<vmem>>, vector<8x4xbf16>
    %cst_137 = arith.constant dense<0.000000e+00> : vector<8x8xf32>
    %204 = tpu.matmul %201, %202, %cst_137 {dimension_numbers = #tpu.dot_dimension_numbers<[1], [1], [0], [0], [0, 0, 1, 0], [], []>} : vector<8x4xbf16>, vector<8x4xbf16>, vector<8x8xf32> -> vector<8x8xf32>
    %c0_138 = arith.constant 0 : index
    %c0_139 = arith.constant 0 : index
    %c0_140 = arith.constant 0 : index
    %205 = vector.load %arg6[%c0_138, %c0_139, %c0_140] : memref<1x8x8xf32, #tpu.memory_space<vmem>>, vector<1x8x8xf32>
    %206 = vector.shape_cast %205 : vector<1x8x8xf32> to vector<8x8xf32>
    %207 = arith.addf %206, %204 : vector<8x8xf32>
    %c0_141 = arith.constant 0 : index
    %c0_142 = arith.constant 0 : index
    %c0_143 = arith.constant 0 : index
    %208 = vector.load %arg6[%c0_141, %c0_142, %c0_143] : memref<1x8x8xf32, #tpu.memory_space<vmem>>, vector<1x8x8xf32>
    %209 = vector.shape_cast %208 : vector<1x8x8xf32> to vector<8x8xf32>
    %210 = vector.shape_cast %207 : vector<8x8xf32> to vector<1x8x8xf32>
    tpu.vector_store %arg6[%c0_141, %c0_142, %c0_143], %210 {strides = array<i32>} : memref<1x8x8xf32, #tpu.memory_space<vmem>>, vector<1x8x8xf32>,
    %cst_144 = arith.constant dense<0xFF800000> : vector<8xf32>
    %211 = vector.multi_reduction <maximumf>, %204, %cst_144 [1] : vector<8x8xf32> to vector<8xf32>
    %212 = vector.shape_cast %211 : vector<8xf32> to vector<8x1xf32>
    %213 = vector.broadcast %212 : vector<8x1xf32> to vector<8x8xf32>
    %214 = arith.subf %204, %213 : vector<8x8xf32>
    %215 = math.exp %214 : vector<8x8xf32>
    %cst_145 = arith.constant dense<0.000000e+00> : vector<8xf32>
    %216 = vector.multi_reduction <add>, %215, %cst_145 [1] : vector<8x8xf32> to vector<8xf32>
    %217 = vector.shape_cast %216 : vector<8xf32> to vector<8x1xf32>
    %218 = tpu.reciprocal %217 {approx = true} : vector<8x1xf32> -> vector<8x1xf32>
    %219 = vector.broadcast %218 : vector<8x1xf32> to vector<8x8xf32>
    %220 = arith.mulf %215, %219 : vector<8x8xf32>
    %221 = arith.truncf %220 : vector<8x8xf32> to vector<8x8xbf16>
    %cst_146 = arith.constant dense<0.000000e+00> : vector<8x4xf32>
    %222 = tpu.matmul %221, %203, %cst_146 {dimension_numbers = #tpu.dot_dimension_numbers<[1], [0], [0], [1], [0, 0, 1, 1], [], []>} : vector<8x8xbf16>, vector<8x4xbf16>, vector<8x4xf32> -> vector<8x4xf32>
    %223 = arith.truncf %222 : vector<8x4xf32> to vector<8x4xbf16>
    %c8_147 = arith.constant 8 : index
    %c0_148 = arith.constant 0 : index
    %224 = vector.load %arg8[%c8_147, %c0_148] : memref<16x32xbf16, #tpu.memory_space<vmem>>, vector<8x4xbf16>
    tpu.vector_store %arg8[%c8_147, %c0_148], %223 {strides = array<i32>} : memref<16x32xbf16, #tpu.memory_space<vmem>>, vector<8x4xbf16>,
    %c8_149 = arith.constant 8 : index
    %c4_150 = arith.constant 4 : index
    %225 = vector.load %arg7[%c8_149, %c4_150] : memref<16x96xbf16, #tpu.memory_space<vmem>>, vector<8x4xbf16>
    %c8_151 = arith.constant 8 : index
    %c36_152 = arith.constant 36 : index
    %226 = vector.load %arg7[%c8_151, %c36_152] : memref<16x96xbf16, #tpu.memory_space<vmem>>, vector<8x4xbf16>
    %c8_153 = arith.constant 8 : index
    %c68_154 = arith.constant 68 : index
    %227 = vector.load %arg7[%c8_153, %c68_154] : memref<16x96xbf16, #tpu.memory_space<vmem>>, vector<8x4xbf16>
    %cst_155 = arith.constant dense<0.000000e+00> : vector<8x8xf32>
    %228 = tpu.matmul %225, %226, %cst_155 {dimension_numbers = #tpu.dot_dimension_numbers<[1], [1], [0], [0], [0, 0, 1, 0], [], []>} : vector<8x4xbf16>, vector<8x4xbf16>, vector<8x8xf32> -> vector<8x8xf32>
    %c0_156 = arith.constant 0 : index
    %c0_157 = arith.constant 0 : index
    %c0_158 = arith.constant 0 : index
    %229 = vector.load %arg6[%c0_156, %c0_157, %c0_158] : memref<1x8x8xf32, #tpu.memory_space<vmem>>, vector<1x8x8xf32>
    %230 = vector.shape_cast %229 : vector<1x8x8xf32> to vector<8x8xf32>
    %231 = arith.addf %230, %228 : vector<8x8xf32>
    %c0_159 = arith.constant 0 : index
    %c0_160 = arith.constant 0 : index
    %c0_161 = arith.constant 0 : index
    %232 = vector.load %arg6[%c0_159, %c0_160, %c0_161] : memref<1x8x8xf32, #tpu.memory_space<vmem>>, vector<1x8x8xf32>
    %233 = vector.shape_cast %232 : vector<1x8x8xf32> to vector<8x8xf32>
    %234 = vector.shape_cast %231 : vector<8x8xf32> to vector<1x8x8xf32>
    tpu.vector_store %arg6[%c0_159, %c0_160, %c0_161], %234 {strides = array<i32>} : memref<1x8x8xf32, #tpu.memory_space<vmem>>, vector<1x8x8xf32>,
    %cst_162 = arith.constant dense<0xFF800000> : vector<8xf32>
    %235 = vector.multi_reduction <maximumf>, %228, %cst_162 [1] : vector<8x8xf32> to vector<8xf32>
    %236 = vector.shape_cast %235 : vector<8xf32> to vector<8x1xf32>
    %237 = vector.broadcast %236 : vector<8x1xf32> to vector<8x8xf32>
    %238 = arith.subf %228, %237 : vector<8x8xf32>
    %239 = math.exp %238 : vector<8x8xf32>
    %cst_163 = arith.constant dense<0.000000e+00> : vector<8xf32>
    %240 = vector.multi_reduction <add>, %239, %cst_163 [1] : vector<8x8xf32> to vector<8xf32>
    %241 = vector.shape_cast %240 : vector<8xf32> to vector<8x1xf32>
    %242 = tpu.reciprocal %241 {approx = true} : vector<8x1xf32> -> vector<8x1xf32>
    %243 = vector.broadcast %242 : vector<8x1xf32> to vector<8x8xf32>
    %244 = arith.mulf %239, %243 : vector<8x8xf32>
    %245 = arith.truncf %244 : vector<8x8xf32> to vector<8x8xbf16>
    %cst_164 = arith.constant dense<0.000000e+00> : vector<8x4xf32>
    %246 = tpu.matmul %245, %227, %cst_164 {dimension_numbers = #tpu.dot_dimension_numbers<[1], [0], [0], [1], [0, 0, 1, 1], [], []>} : vector<8x8xbf16>, vector<8x4xbf16>, vector<8x4xf32> -> vector<8x4xf32>
    %247 = arith.truncf %246 : vector<8x4xf32> to vector<8x4xbf16>
    %c8_165 = arith.constant 8 : index
    %c4_166 = arith.constant 4 : index
    %248 = vector.load %arg8[%c8_165, %c4_166] : memref<16x32xbf16, #tpu.memory_space<vmem>>, vector<8x4xbf16>
    tpu.vector_store %arg8[%c8_165, %c4_166], %247 {strides = array<i32>} : memref<16x32xbf16, #tpu.memory_space<vmem>>, vector<8x4xbf16>,
    %c8_167 = arith.constant 8 : index
    %c8_168 = arith.constant 8 : index
    %249 = vector.load %arg7[%c8_167, %c8_168] : memref<16x96xbf16, #tpu.memory_space<vmem>>, vector<8x4xbf16>
    %c8_169 = arith.constant 8 : index
    %c40_170 = arith.constant 40 : index
    %250 = vector.load %arg7[%c8_169, %c40_170] : memref<16x96xbf16, #tpu.memory_space<vmem>>, vector<8x4xbf16>
    %c8_171 = arith.constant 8 : index
    %c72_172 = arith.constant 72 : index
    %251 = vector.load %arg7[%c8_171, %c72_172] : memref<16x96xbf16, #tpu.memory_space<vmem>>, vector<8x4xbf16>
    %cst_173 = arith.constant dense<0.000000e+00> : vector<8x8xf32>
    %252 = tpu.matmul %249, %250, %cst_173 {dimension_numbers = #tpu.dot_dimension_numbers<[1], [1], [0], [0], [0, 0, 1, 0], [], []>} : vector<8x4xbf16>, vector<8x4xbf16>, vector<8x8xf32> -> vector<8x8xf32>
    %c0_174 = arith.constant 0 : index
    %c0_175 = arith.constant 0 : index
    %c0_176 = arith.constant 0 : index
    %253 = vector.load %arg6[%c0_174, %c0_175, %c0_176] : memref<1x8x8xf32, #tpu.memory_space<vmem>>, vector<1x8x8xf32>
    %254 = vector.shape_cast %253 : vector<1x8x8xf32> to vector<8x8xf32>
    %255 = arith.addf %254, %252 : vector<8x8xf32>
    %c0_177 = arith.constant 0 : index
    %c0_178 = arith.constant 0 : index
    %c0_179 = arith.constant 0 : index
    %256 = vector.load %arg6[%c0_177, %c0_178, %c0_179] : memref<1x8x8xf32, #tpu.memory_space<vmem>>, vector<1x8x8xf32>
    %257 = vector.shape_cast %256 : vector<1x8x8xf32> to vector<8x8xf32>
    %258 = vector.shape_cast %255 : vector<8x8xf32> to vector<1x8x8xf32>
    tpu.vector_store %arg6[%c0_177, %c0_178, %c0_179], %258 {strides = array<i32>} : memref<1x8x8xf32, #tpu.memory_space<vmem>>, vector<1x8x8xf32>,
    %cst_180 = arith.constant dense<0xFF800000> : vector<8xf32>
    %259 = vector.multi_reduction <maximumf>, %252, %cst_180 [1] : vector<8x8xf32> to vector<8xf32>
    %260 = vector.shape_cast %259 : vector<8xf32> to vector<8x1xf32>
    %261 = vector.broadcast %260 : vector<8x1xf32> to vector<8x8xf32>
    %262 = arith.subf %252, %261 : vector<8x8xf32>
    %263 = math.exp %262 : vector<8x8xf32>
    %cst_181 = arith.constant dense<0.000000e+00> : vector<8xf32>
    %264 = vector.multi_reduction <add>, %263, %cst_181 [1] : vector<8x8xf32> to vector<8xf32>
    %265 = vector.shape_cast %264 : vector<8xf32> to vector<8x1xf32>
    %266 = tpu.reciprocal %265 {approx = true} : vector<8x1xf32> -> vector<8x1xf32>
    %267 = vector.broadcast %266 : vector<8x1xf32> to vector<8x8xf32>
    %268 = arith.mulf %263, %267 : vector<8x8xf32>
    %269 = arith.truncf %268 : vector<8x8xf32> to vector<8x8xbf16>
    %cst_182 = arith.constant dense<0.000000e+00> : vector<8x4xf32>
    %270 = tpu.matmul %269, %251, %cst_182 {dimension_numbers = #tpu.dot_dimension_numbers<[1], [0], [0], [1], [0, 0, 1, 1], [], []>} : vector<8x8xbf16>, vector<8x4xbf16>, vector<8x4xf32> -> vector<8x4xf32>
    %271 = arith.truncf %270 : vector<8x4xf32> to vector<8x4xbf16>
    %c8_183 = arith.constant 8 : index
    %c8_184 = arith.constant 8 : index
    %272 = vector.load %arg8[%c8_183, %c8_184] : memref<16x32xbf16, #tpu.memory_space<vmem>>, vector<8x4xbf16>
    tpu.vector_store %arg8[%c8_183, %c8_184], %271 {strides = array<i32>} : memref<16x32xbf16, #tpu.memory_space<vmem>>, vector<8x4xbf16>,
    %c8_185 = arith.constant 8 : index
    %c12_186 = arith.constant 12 : index
    %273 = vector.load %arg7[%c8_185, %c12_186] : memref<16x96xbf16, #tpu.memory_space<vmem>>, vector<8x4xbf16>
    %c8_187 = arith.constant 8 : index
    %c44_188 = arith.constant 44 : index
    %274 = vector.load %arg7[%c8_187, %c44_188] : memref<16x96xbf16, #tpu.memory_space<vmem>>, vector<8x4xbf16>
    %c8_189 = arith.constant 8 : index
    %c76_190 = arith.constant 76 : index
    %275 = vector.load %arg7[%c8_189, %c76_190] : memref<16x96xbf16, #tpu.memory_space<vmem>>, vector<8x4xbf16>
    %cst_191 = arith.constant dense<0.000000e+00> : vector<8x8xf32>
    %276 = tpu.matmul %273, %274, %cst_191 {dimension_numbers = #tpu.dot_dimension_numbers<[1], [1], [0], [0], [0, 0, 1, 0], [], []>} : vector<8x4xbf16>, vector<8x4xbf16>, vector<8x8xf32> -> vector<8x8xf32>
    %c0_192 = arith.constant 0 : index
    %c0_193 = arith.constant 0 : index
    %c0_194 = arith.constant 0 : index
    %277 = vector.load %arg6[%c0_192, %c0_193, %c0_194] : memref<1x8x8xf32, #tpu.memory_space<vmem>>, vector<1x8x8xf32>
    %278 = vector.shape_cast %277 : vector<1x8x8xf32> to vector<8x8xf32>
    %279 = arith.addf %278, %276 : vector<8x8xf32>
    %c0_195 = arith.constant 0 : index
    %c0_196 = arith.constant 0 : index
    %c0_197 = arith.constant 0 : index
    %280 = vector.load %arg6[%c0_195, %c0_196, %c0_197] : memref<1x8x8xf32, #tpu.memory_space<vmem>>, vector<1x8x8xf32>
    %281 = vector.shape_cast %280 : vector<1x8x8xf32> to vector<8x8xf32>
    %282 = vector.shape_cast %279 : vector<8x8xf32> to vector<1x8x8xf32>
    tpu.vector_store %arg6[%c0_195, %c0_196, %c0_197], %282 {strides = array<i32>} : memref<1x8x8xf32, #tpu.memory_space<vmem>>, vector<1x8x8xf32>,
    %cst_198 = arith.constant dense<0xFF800000> : vector<8xf32>
    %283 = vector.multi_reduction <maximumf>, %276, %cst_198 [1] : vector<8x8xf32> to vector<8xf32>
    %284 = vector.shape_cast %283 : vector<8xf32> to vector<8x1xf32>
    %285 = vector.broadcast %284 : vector<8x1xf32> to vector<8x8xf32>
    %286 = arith.subf %276, %285 : vector<8x8xf32>
    %287 = math.exp %286 : vector<8x8xf32>
    %cst_199 = arith.constant dense<0.000000e+00> : vector<8xf32>
    %288 = vector.multi_reduction <add>, %287, %cst_199 [1] : vector<8x8xf32> to vector<8xf32>
    %289 = vector.shape_cast %288 : vector<8xf32> to vector<8x1xf32>
    %290 = tpu.reciprocal %289 {approx = true} : vector<8x1xf32> -> vector<8x1xf32>
    %291 = vector.broadcast %290 : vector<8x1xf32> to vector<8x8xf32>
    %292 = arith.mulf %287, %291 : vector<8x8xf32>
    %293 = arith.truncf %292 : vector<8x8xf32> to vector<8x8xbf16>
    %cst_200 = arith.constant dense<0.000000e+00> : vector<8x4xf32>
    %294 = tpu.matmul %293, %275, %cst_200 {dimension_numbers = #tpu.dot_dimension_numbers<[1], [0], [0], [1], [0, 0, 1, 1], [], []>} : vector<8x8xbf16>, vector<8x4xbf16>, vector<8x4xf32> -> vector<8x4xf32>
    %295 = arith.truncf %294 : vector<8x4xf32> to vector<8x4xbf16>
    %c8_201 = arith.constant 8 : index
    %c12_202 = arith.constant 12 : index
    %296 = vector.load %arg8[%c8_201, %c12_202] : memref<16x32xbf16, #tpu.memory_space<vmem>>, vector<8x4xbf16>
    tpu.vector_store %arg8[%c8_201, %c12_202], %295 {strides = array<i32>} : memref<16x32xbf16, #tpu.memory_space<vmem>>, vector<8x4xbf16>,
    %c8_203 = arith.constant 8 : index
    %c16_204 = arith.constant 16 : index
    %297 = vector.load %arg7[%c8_203, %c16_204] : memref<16x96xbf16, #tpu.memory_space<vmem>>, vector<8x4xbf16>
    %c8_205 = arith.constant 8 : index
    %c48_206 = arith.constant 48 : index
    %298 = vector.load %arg7[%c8_205, %c48_206] : memref<16x96xbf16, #tpu.memory_space<vmem>>, vector<8x4xbf16>
    %c8_207 = arith.constant 8 : index
    %c80_208 = arith.constant 80 : index
    %299 = vector.load %arg7[%c8_207, %c80_208] : memref<16x96xbf16, #tpu.memory_space<vmem>>, vector<8x4xbf16>
    %cst_209 = arith.constant dense<0.000000e+00> : vector<8x8xf32>
    %300 = tpu.matmul %297, %298, %cst_209 {dimension_numbers = #tpu.dot_dimension_numbers<[1], [1], [0], [0], [0, 0, 1, 0], [], []>} : vector<8x4xbf16>, vector<8x4xbf16>, vector<8x8xf32> -> vector<8x8xf32>
    %c0_210 = arith.constant 0 : index
    %c0_211 = arith.constant 0 : index
    %c0_212 = arith.constant 0 : index
    %301 = vector.load %arg6[%c0_210, %c0_211, %c0_212] : memref<1x8x8xf32, #tpu.memory_space<vmem>>, vector<1x8x8xf32>
    %302 = vector.shape_cast %301 : vector<1x8x8xf32> to vector<8x8xf32>
    %303 = arith.addf %302, %300 : vector<8x8xf32>
    %c0_213 = arith.constant 0 : index
    %c0_214 = arith.constant 0 : index
    %c0_215 = arith.constant 0 : index
    %304 = vector.load %arg6[%c0_213, %c0_214, %c0_215] : memref<1x8x8xf32, #tpu.memory_space<vmem>>, vector<1x8x8xf32>
    %305 = vector.shape_cast %304 : vector<1x8x8xf32> to vector<8x8xf32>
    %306 = vector.shape_cast %303 : vector<8x8xf32> to vector<1x8x8xf32>
    tpu.vector_store %arg6[%c0_213, %c0_214, %c0_215], %306 {strides = array<i32>} : memref<1x8x8xf32, #tpu.memory_space<vmem>>, vector<1x8x8xf32>,
    %cst_216 = arith.constant dense<0xFF800000> : vector<8xf32>
    %307 = vector.multi_reduction <maximumf>, %300, %cst_216 [1] : vector<8x8xf32> to vector<8xf32>
    %308 = vector.shape_cast %307 : vector<8xf32> to vector<8x1xf32>
    %309 = vector.broadcast %308 : vector<8x1xf32> to vector<8x8xf32>
    %310 = arith.subf %300, %309 : vector<8x8xf32>
    %311 = math.exp %310 : vector<8x8xf32>
    %cst_217 = arith.constant dense<0.000000e+00> : vector<8xf32>
    %312 = vector.multi_reduction <add>, %311, %cst_217 [1] : vector<8x8xf32> to vector<8xf32>
    %313 = vector.shape_cast %312 : vector<8xf32> to vector<8x1xf32>
    %314 = tpu.reciprocal %313 {approx = true} : vector<8x1xf32> -> vector<8x1xf32>
    %315 = vector.broadcast %314 : vector<8x1xf32> to vector<8x8xf32>
    %316 = arith.mulf %311, %315 : vector<8x8xf32>
    %317 = arith.truncf %316 : vector<8x8xf32> to vector<8x8xbf16>
    %cst_218 = arith.constant dense<0.000000e+00> : vector<8x4xf32>
    %318 = tpu.matmul %317, %299, %cst_218 {dimension_numbers = #tpu.dot_dimension_numbers<[1], [0], [0], [1], [0, 0, 1, 1], [], []>} : vector<8x8xbf16>, vector<8x4xbf16>, vector<8x4xf32> -> vector<8x4xf32>
    %319 = arith.truncf %318 : vector<8x4xf32> to vector<8x4xbf16>
    %c8_219 = arith.constant 8 : index
    %c16_220 = arith.constant 16 : index
    %320 = vector.load %arg8[%c8_219, %c16_220] : memref<16x32xbf16, #tpu.memory_space<vmem>>, vector<8x4xbf16>
    tpu.vector_store %arg8[%c8_219, %c16_220], %319 {strides = array<i32>} : memref<16x32xbf16, #tpu.memory_space<vmem>>, vector<8x4xbf16>,
    %c8_221 = arith.constant 8 : index
    %c20_222 = arith.constant 20 : index
    %321 = vector.load %arg7[%c8_221, %c20_222] : memref<16x96xbf16, #tpu.memory_space<vmem>>, vector<8x4xbf16>
    %c8_223 = arith.constant 8 : index
    %c52_224 = arith.constant 52 : index
    %322 = vector.load %arg7[%c8_223, %c52_224] : memref<16x96xbf16, #tpu.memory_space<vmem>>, vector<8x4xbf16>
    %c8_225 = arith.constant 8 : index
    %c84_226 = arith.constant 84 : index
    %323 = vector.load %arg7[%c8_225, %c84_226] : memref<16x96xbf16, #tpu.memory_space<vmem>>, vector<8x4xbf16>
    %cst_227 = arith.constant dense<0.000000e+00> : vector<8x8xf32>
    %324 = tpu.matmul %321, %322, %cst_227 {dimension_numbers = #tpu.dot_dimension_numbers<[1], [1], [0], [0], [0, 0, 1, 0], [], []>} : vector<8x4xbf16>, vector<8x4xbf16>, vector<8x8xf32> -> vector<8x8xf32>
    %c0_228 = arith.constant 0 : index
    %c0_229 = arith.constant 0 : index
    %c0_230 = arith.constant 0 : index
    %325 = vector.load %arg6[%c0_228, %c0_229, %c0_230] : memref<1x8x8xf32, #tpu.memory_space<vmem>>, vector<1x8x8xf32>
    %326 = vector.shape_cast %325 : vector<1x8x8xf32> to vector<8x8xf32>
    %327 = arith.addf %326, %324 : vector<8x8xf32>
    %c0_231 = arith.constant 0 : index
    %c0_232 = arith.constant 0 : index
    %c0_233 = arith.constant 0 : index
    %328 = vector.load %arg6[%c0_231, %c0_232, %c0_233] : memref<1x8x8xf32, #tpu.memory_space<vmem>>, vector<1x8x8xf32>
    %329 = vector.shape_cast %328 : vector<1x8x8xf32> to vector<8x8xf32>
    %330 = vector.shape_cast %327 : vector<8x8xf32> to vector<1x8x8xf32>
    tpu.vector_store %arg6[%c0_231, %c0_232, %c0_233], %330 {strides = array<i32>} : memref<1x8x8xf32, #tpu.memory_space<vmem>>, vector<1x8x8xf32>,
    %cst_234 = arith.constant dense<0xFF800000> : vector<8xf32>
    %331 = vector.multi_reduction <maximumf>, %324, %cst_234 [1] : vector<8x8xf32> to vector<8xf32>
    %332 = vector.shape_cast %331 : vector<8xf32> to vector<8x1xf32>
    %333 = vector.broadcast %332 : vector<8x1xf32> to vector<8x8xf32>
    %334 = arith.subf %324, %333 : vector<8x8xf32>
    %335 = math.exp %334 : vector<8x8xf32>
    %cst_235 = arith.constant dense<0.000000e+00> : vector<8xf32>
    %336 = vector.multi_reduction <add>, %335, %cst_235 [1] : vector<8x8xf32> to vector<8xf32>
    %337 = vector.shape_cast %336 : vector<8xf32> to vector<8x1xf32>
    %338 = tpu.reciprocal %337 {approx = true} : vector<8x1xf32> -> vector<8x1xf32>
    %339 = vector.broadcast %338 : vector<8x1xf32> to vector<8x8xf32>
    %340 = arith.mulf %335, %339 : vector<8x8xf32>
    %341 = arith.truncf %340 : vector<8x8xf32> to vector<8x8xbf16>
    %cst_236 = arith.constant dense<0.000000e+00> : vector<8x4xf32>
    %342 = tpu.matmul %341, %323, %cst_236 {dimension_numbers = #tpu.dot_dimension_numbers<[1], [0], [0], [1], [0, 0, 1, 1], [], []>} : vector<8x8xbf16>, vector<8x4xbf16>, vector<8x4xf32> -> vector<8x4xf32>
    %343 = arith.truncf %342 : vector<8x4xf32> to vector<8x4xbf16>
    %c8_237 = arith.constant 8 : index
    %c20_238 = arith.constant 20 : index
    %344 = vector.load %arg8[%c8_237, %c20_238] : memref<16x32xbf16, #tpu.memory_space<vmem>>, vector<8x4xbf16>
    tpu.vector_store %arg8[%c8_237, %c20_238], %343 {strides = array<i32>} : memref<16x32xbf16, #tpu.memory_space<vmem>>, vector<8x4xbf16>,
    %c8_239 = arith.constant 8 : index
    %c24_240 = arith.constant 24 : index
    %345 = vector.load %arg7[%c8_239, %c24_240] : memref<16x96xbf16, #tpu.memory_space<vmem>>, vector<8x4xbf16>
    %c8_241 = arith.constant 8 : index
    %c56_242 = arith.constant 56 : index
    %346 = vector.load %arg7[%c8_241, %c56_242] : memref<16x96xbf16, #tpu.memory_space<vmem>>, vector<8x4xbf16>
    %c8_243 = arith.constant 8 : index
    %c88_244 = arith.constant 88 : index
    %347 = vector.load %arg7[%c8_243, %c88_244] : memref<16x96xbf16, #tpu.memory_space<vmem>>, vector<8x4xbf16>
    %cst_245 = arith.constant dense<0.000000e+00> : vector<8x8xf32>
    %348 = tpu.matmul %345, %346, %cst_245 {dimension_numbers = #tpu.dot_dimension_numbers<[1], [1], [0], [0], [0, 0, 1, 0], [], []>} : vector<8x4xbf16>, vector<8x4xbf16>, vector<8x8xf32> -> vector<8x8xf32>
    %c0_246 = arith.constant 0 : index
    %c0_247 = arith.constant 0 : index
    %c0_248 = arith.constant 0 : index
    %349 = vector.load %arg6[%c0_246, %c0_247, %c0_248] : memref<1x8x8xf32, #tpu.memory_space<vmem>>, vector<1x8x8xf32>
    %350 = vector.shape_cast %349 : vector<1x8x8xf32> to vector<8x8xf32>
    %351 = arith.addf %350, %348 : vector<8x8xf32>
    %c0_249 = arith.constant 0 : index
    %c0_250 = arith.constant 0 : index
    %c0_251 = arith.constant 0 : index
    %352 = vector.load %arg6[%c0_249, %c0_250, %c0_251] : memref<1x8x8xf32, #tpu.memory_space<vmem>>, vector<1x8x8xf32>
    %353 = vector.shape_cast %352 : vector<1x8x8xf32> to vector<8x8xf32>
    %354 = vector.shape_cast %351 : vector<8x8xf32> to vector<1x8x8xf32>
    tpu.vector_store %arg6[%c0_249, %c0_250, %c0_251], %354 {strides = array<i32>} : memref<1x8x8xf32, #tpu.memory_space<vmem>>, vector<1x8x8xf32>,
    %cst_252 = arith.constant dense<0xFF800000> : vector<8xf32>
    %355 = vector.multi_reduction <maximumf>, %348, %cst_252 [1] : vector<8x8xf32> to vector<8xf32>
    %356 = vector.shape_cast %355 : vector<8xf32> to vector<8x1xf32>
    %357 = vector.broadcast %356 : vector<8x1xf32> to vector<8x8xf32>
    %358 = arith.subf %348, %357 : vector<8x8xf32>
    %359 = math.exp %358 : vector<8x8xf32>
    %cst_253 = arith.constant dense<0.000000e+00> : vector<8xf32>
    %360 = vector.multi_reduction <add>, %359, %cst_253 [1] : vector<8x8xf32> to vector<8xf32>
    %361 = vector.shape_cast %360 : vector<8xf32> to vector<8x1xf32>
    %362 = tpu.reciprocal %361 {approx = true} : vector<8x1xf32> -> vector<8x1xf32>
    %363 = vector.broadcast %362 : vector<8x1xf32> to vector<8x8xf32>
    %364 = arith.mulf %359, %363 : vector<8x8xf32>
    %365 = arith.truncf %364 : vector<8x8xf32> to vector<8x8xbf16>
    %cst_254 = arith.constant dense<0.000000e+00> : vector<8x4xf32>
    %366 = tpu.matmul %365, %347, %cst_254 {dimension_numbers = #tpu.dot_dimension_numbers<[1], [0], [0], [1], [0, 0, 1, 1], [], []>} : vector<8x8xbf16>, vector<8x4xbf16>, vector<8x4xf32> -> vector<8x4xf32>
    %367 = arith.truncf %366 : vector<8x4xf32> to vector<8x4xbf16>
    %c8_255 = arith.constant 8 : index
    %c24_256 = arith.constant 24 : index
    %368 = vector.load %arg8[%c8_255, %c24_256] : memref<16x32xbf16, #tpu.memory_space<vmem>>, vector<8x4xbf16>
    tpu.vector_store %arg8[%c8_255, %c24_256], %367 {strides = array<i32>} : memref<16x32xbf16, #tpu.memory_space<vmem>>, vector<8x4xbf16>,
    %c8_257 = arith.constant 8 : index
    %c28_258 = arith.constant 28 : index
    %369 = vector.load %arg7[%c8_257, %c28_258] : memref<16x96xbf16, #tpu.memory_space<vmem>>, vector<8x4xbf16>
    %c8_259 = arith.constant 8 : index
    %c60_260 = arith.constant 60 : index
    %370 = vector.load %arg7[%c8_259, %c60_260] : memref<16x96xbf16, #tpu.memory_space<vmem>>, vector<8x4xbf16>
    %c8_261 = arith.constant 8 : index
    %c92_262 = arith.constant 92 : index
    %371 = vector.load %arg7[%c8_261, %c92_262] : memref<16x96xbf16, #tpu.memory_space<vmem>>, vector<8x4xbf16>
    %cst_263 = arith.constant dense<0.000000e+00> : vector<8x8xf32>
    %372 = tpu.matmul %369, %370, %cst_263 {dimension_numbers = #tpu.dot_dimension_numbers<[1], [1], [0], [0], [0, 0, 1, 0], [], []>} : vector<8x4xbf16>, vector<8x4xbf16>, vector<8x8xf32> -> vector<8x8xf32>
    %c0_264 = arith.constant 0 : index
    %c0_265 = arith.constant 0 : index
    %c0_266 = arith.constant 0 : index
    %373 = vector.load %arg6[%c0_264, %c0_265, %c0_266] : memref<1x8x8xf32, #tpu.memory_space<vmem>>, vector<1x8x8xf32>
    %374 = vector.shape_cast %373 : vector<1x8x8xf32> to vector<8x8xf32>
    %375 = arith.addf %374, %372 : vector<8x8xf32>
    %c0_267 = arith.constant 0 : index
    %c0_268 = arith.constant 0 : index
    %c0_269 = arith.constant 0 : index
    %376 = vector.load %arg6[%c0_267, %c0_268, %c0_269] : memref<1x8x8xf32, #tpu.memory_space<vmem>>, vector<1x8x8xf32>
    %377 = vector.shape_cast %376 : vector<1x8x8xf32> to vector<8x8xf32>
    %378 = vector.shape_cast %375 : vector<8x8xf32> to vector<1x8x8xf32>
    tpu.vector_store %arg6[%c0_267, %c0_268, %c0_269], %378 {strides = array<i32>} : memref<1x8x8xf32, #tpu.memory_space<vmem>>, vector<1x8x8xf32>,
    %cst_270 = arith.constant dense<0xFF800000> : vector<8xf32>
    %379 = vector.multi_reduction <maximumf>, %372, %cst_270 [1] : vector<8x8xf32> to vector<8xf32>
    %380 = vector.shape_cast %379 : vector<8xf32> to vector<8x1xf32>
    %381 = vector.broadcast %380 : vector<8x1xf32> to vector<8x8xf32>
    %382 = arith.subf %372, %381 : vector<8x8xf32>
    %383 = math.exp %382 : vector<8x8xf32>
    %cst_271 = arith.constant dense<0.000000e+00> : vector<8xf32>
    %384 = vector.multi_reduction <add>, %383, %cst_271 [1] : vector<8x8xf32> to vector<8xf32>
    %385 = vector.shape_cast %384 : vector<8xf32> to vector<8x1xf32>
    %386 = tpu.reciprocal %385 {approx = true} : vector<8x1xf32> -> vector<8x1xf32>
    %387 = vector.broadcast %386 : vector<8x1xf32> to vector<8x8xf32>
    %388 = arith.mulf %383, %387 : vector<8x8xf32>
    %389 = arith.truncf %388 : vector<8x8xf32> to vector<8x8xbf16>
    %cst_272 = arith.constant dense<0.000000e+00> : vector<8x4xf32>
    %390 = tpu.matmul %389, %371, %cst_272 {dimension_numbers = #tpu.dot_dimension_numbers<[1], [0], [0], [1], [0, 0, 1, 1], [], []>} : vector<8x8xbf16>, vector<8x4xbf16>, vector<8x4xf32> -> vector<8x4xf32>
    %391 = arith.truncf %390 : vector<8x4xf32> to vector<8x4xbf16>
    %c8_273 = arith.constant 8 : index
    %c28_274 = arith.constant 28 : index
    %392 = vector.load %arg8[%c8_273, %c28_274] : memref<16x32xbf16, #tpu.memory_space<vmem>>, vector<8x4xbf16>
    tpu.vector_store %arg8[%c8_273, %c28_274], %391 {strides = array<i32>} : memref<16x32xbf16, #tpu.memory_space<vmem>>, vector<8x4xbf16>,
    %c0_275 = arith.constant 0 : index
    %c0_276 = arith.constant 0 : index
    %393 = vector.load %arg8[%c0_275, %c0_276] : memref<16x32xbf16, #tpu.memory_space<vmem>>, vector<16x32xbf16>
    %c0_277 = arith.constant 0 : index
    %c0_278 = arith.constant 0 : index
    %394 = vector.load %arg3[%c0_277, %c0_278] : memref<32x32xbf16, #tpu.memory_space<vmem>>, vector<32x32xbf16>
    %cst_279 = arith.constant dense<0.000000e+00> : vector<16x32xf32>
    %395 = tpu.matmul %393, %394, %cst_279 {dimension_numbers = #tpu.dot_dimension_numbers<[1], [0], [0], [1], [0, 0, 1, 1], [], []>} : vector<16x32xbf16>, vector<32x32xbf16>, vector<16x32xf32> -> vector<16x32xf32>
    %c0_280 = arith.constant 0 : index
    %c0_281 = arith.constant 0 : index
    %396 = vector.load %arg4[%c0_280, %c0_281] : memref<1x32xf32, #tpu.memory_space<vmem>>, vector<1x32xf32>
    %397 = vector.broadcast %396 : vector<1x32xf32> to vector<16x32xf32>
    %398 = arith.addf %395, %397 : vector<16x32xf32>
    %399 = vector.shape_cast %398 : vector<16x32xf32> to vector<2x8x32xf32>
    %c0_282 = arith.constant 0 : index
    %c0_283 = arith.constant 0 : index
    %c0_284 = arith.constant 0 : index
    %400 = vector.load %arg5[%c0_282, %c0_283, %c0_284] : memref<2x8x32xf32, #tpu.memory_space<vmem>>, vector<2x8x32xf32>
    tpu.vector_store %arg5[%c0_282, %c0_283, %c0_284], %399 {strides = array<i32>} : memref<2x8x32xf32, #tpu.memory_space<vmem>>, vector<2x8x32xf32>,
    return
  }
  func.func @transform_0(%arg0: i32) -> (i32, i32, i32) {
    %c0_i32 = arith.constant 0 : i32
    %c0_i32_0 = arith.constant 0 : i32
    %c0_i32_1 = arith.constant 0 : i32
    return %arg0, %c0_i32, %c0_i32_0 : i32, i32, i32
  }
  func.func @transform_1(%arg0: i32) -> (i32, i32) {
    %c0_i32 = arith.constant 0 : i32
    %c0_i32_0 = arith.constant 0 : i32
    %c0_i32_1 = arith.constant 0 : i32
    return %c0_i32, %c0_i32_0 : i32, i32
  }
  func.func @transform_2(%arg0: i32) -> (i32, i32) {
    %c0_i32 = arith.constant 0 : i32
    %c0_i32_0 = arith.constant 0 : i32
    %c0_i32_1 = arith.constant 0 : i32
    return %c0_i32, %c0_i32_0 : i32, i32
  }
  func.func @transform_3(%arg0: i32) -> (i32, i32) {
    %c0_i32 = arith.constant 0 : i32
    %c0_i32_0 = arith.constant 0 : i32
    %c0_i32_1 = arith.constant 0 : i32
    return %c0_i32, %c0_i32_0 : i32, i32
  }
  func.func @transform_4(%arg0: i32) -> (i32, i32, i32) {
    %c0_i32 = arith.constant 0 : i32
    %c0_i32_0 = arith.constant 0 : i32
    %c0_i32_1 = arith.constant 0 : i32
    return %arg0, %c0_i32, %c0_i32_0 : i32, i32, i32
  }
  func.func @transform_5(%arg0: i32) -> (i32, i32, i32) {
    %c0_i32 = arith.constant 0 : i32
    %c0_i32_0 = arith.constant 0 : i32
    %c0_i32_1 = arith.constant 0 : i32
    return %arg0, %c0_i32, %c0_i32_0 : i32, i32, i32
  }
}

</mosaic_0001>

<llo_original>
// kernel: tpu_custom_call.1
$region0: #{tpu_custom_call.1}
  #allocation0 [shape = 'u32[]', space=smem, size = 0x4, offset = 0x4, fixed_abs, tag = 'smem constant byte address 0x4 - core index']
  #allocation1 [shape = 'u32[144,128]{1,0:T(1,128)}', space=vmem, size = 0x12000, scoped, tag = 'internal scratch']
  #allocation2 [shape = 'bf16[16,96]{1,0:T(16,128)(2,1)}', space=vmem, size = 0x1000, scoped, tag = 'scratch operand']
  #allocation3 [shape = 'bf16[16,32]{1,0:T(16,128)(2,1)}', space=vmem, size = 0x1000, scoped, tag = 'scratch operand']
  %s0 = inlined_call_operand.hbm [shape: f32[2,8,32], index: 0, kind: input, shape index: {}]
  %s1 = inlined_call_operand.hbm [shape: bf16[32,96], index: 1, kind: input, shape index: {}]
  %s2 = inlined_call_operand.hbm [shape: bf16[32,32], index: 2, kind: input, shape index: {}]
  %s3 = inlined_call_operand.vmem [shape: f32[1,32], index: 3, kind: input, shape index: {}]
  %s4 = inlined_call_operand.hbm [shape: f32[2,8,32], index: 4, kind: output, shape index: {0}]
  %s5 = inlined_call_operand.hbm [shape: f32[1,8,8], index: 5, kind: output, shape index: {1}]
  %6 = xla_tuple %s4, %s5
  %s7 = sld [smem:[#allocation0]]
  $region46: #{tpu_custom_call.1} parent=0
    _
  %s9 = ssub.s32 1, %s7
  %s10 = scalar_select 0, %s9, %s7
  $region1: #{tpu_custom_call.1} parent=0
    #allocation4 [shape = 'u8[8192]{0}', space=vmem, size = 0x2000, scoped, tag = 'input window, operand 0, single buffered']
    #allocation5 [shape = 's32[1]{0}', space=sflag, size = 0x4, scoped, tag = 'scoped memory for tpu_custom_call.1']
    #allocation6 [shape = 's32[1]{0}', space=sflag, size = 0x4, scoped, tag = 'scoped memory for tpu_custom_call.1']
    #allocation7 [shape = 'u8[8192]{0}', space=vmem, size = 0x2000, scoped, tag = 'input window, operand 1, single buffered']
    #allocation8 [shape = 's32[1]{0}', space=sflag, size = 0x4, scoped, tag = 'scoped memory for tpu_custom_call.1']
    #allocation9 [shape = 'u8[8192]{0}', space=vmem, size = 0x2000, scoped, tag = 'input window, operand 2, single buffered']
    #allocation10 [shape = 'u8[8192]{0}', space=vmem, size = 0x2000, scoped, tag = 'output window, operand 0, single buffered']
    #allocation11 [shape = 'u8[4096]{0}', space=vmem, size = 0x1000, scoped, tag = 'output window, operand 1, single buffered']
    #allocation12 [shape = 's32[1]{0}', space=sflag, size = 0x4, scoped, tag = 'scoped memory for tpu_custom_call.1']
    %11 = vsyncpa [#allocation5], 0
    %12 = vsyncpa [#allocation8], 0
    %13 = vsyncpa [#allocation6], 0
    %14 = vsyncpa [#allocation12], 0
    // Predicated region
    $region2: #{tpu_custom_call.1} parent=1 // pred_check
      _
    $region3: #{tpu_custom_call.1} parent=1 // pred_check_branch
      %16 = sbr.rel (0) target = $region5
    $region4: #{tpu_custom_call.1} parent=1 // pred_region
      %s18 = ssub.s32 256, 256
      %19 = vsyncadd [#allocation5], %s18
      %s20 = sshll.u32 [#allocation4], 4
      %s21 = int_to_ptr.vmem [resolvable:$true] %s20
      %26 = dma.hbm_to_vmem [thread:$0]  %s0, 256, %s21, [#allocation5], 128, 128, 8
    $region5: #{tpu_custom_call.1} parent=1 // pred_fallthru
      _
    // Predicated region
    $region6: #{tpu_custom_call.1} parent=1 // pred_check
      _
    $region7: #{tpu_custom_call.1} parent=1 // pred_check_branch
      %28 = sbr.rel (0) target = $region9
    $region8: #{tpu_custom_call.1} parent=1 // pred_region
      %s30 = ssub.s32 256, 256
      %31 = vsyncadd [#allocation8], %s30
      %s32 = sshll.u32 [#allocation7], 4
      %s33 = int_to_ptr.vmem [resolvable:$true] %s32
      %38 = dma.hbm_to_vmem [thread:$0]  %s1, 256, %s33, [#allocation8], 64, 64, 4
    $region9: #{tpu_custom_call.1} parent=1 // pred_fallthru
      _
    // Predicated region
    $region10: #{tpu_custom_call.1} parent=1 // pred_check
      _
    $region11: #{tpu_custom_call.1} parent=1 // pred_check_branch
      %40 = sbr.rel (0) target = $region13
    $region12: #{tpu_custom_call.1} parent=1 // pred_region
      %s42 = ssub.s32 256, 256
      %43 = vsyncadd [#allocation8], %s42
      %s44 = sshll.u32 [#allocation9], 4
      %s45 = int_to_ptr.vmem [resolvable:$true] %s44
      %50 = dma.hbm_to_vmem [thread:$0]  %s2, 256, %s45, [#allocation8], 64, 64, 4
    $region13: #{tpu_custom_call.1} parent=1 // pred_fallthru
      _
    // Predicated region
    $region14: #{tpu_custom_call.1} parent=1 // pred_check
      _
    $region15: #{tpu_custom_call.1} parent=1 // pred_check_branch
      %52 = sbr.rel (0) target = $region17
    $region16: #{tpu_custom_call.1} parent=1 // pred_region
      _
    $region17: #{tpu_custom_call.1} parent=1 // pred_fallthru
      _
    // Predicated region
    $region18: #{tpu_custom_call.1} parent=1 // pred_check
      _
    $region19: #{tpu_custom_call.1} parent=1 // pred_check_branch
      %54 = sbr.rel (0) target = $region21
    $region20: #{tpu_custom_call.1} parent=1 // pred_region
      %55 = dma.done [#allocation5], 256
    $region21: #{tpu_custom_call.1} parent=1 // pred_fallthru
      _
    // Predicated region
    $region22: #{tpu_custom_call.1} parent=1 // pred_check
      _
    $region23: #{tpu_custom_call.1} parent=1 // pred_check_branch
      %57 = sbr.rel (0) target = $region25
    $region24: #{tpu_custom_call.1} parent=1 // pred_region
      %58 = dma.done [#allocation8], 256
    $region25: #{tpu_custom_call.1} parent=1 // pred_fallthru
      _
    // Predicated region
    $region26: #{tpu_custom_call.1} parent=1 // pred_check
      _
    $region27: #{tpu_custom_call.1} parent=1 // pred_check_branch
      %60 = sbr.rel (0) target = $region29
    $region28: #{tpu_custom_call.1} parent=1 // pred_region
      %61 = dma.done [#allocation8], 256
    $region29: #{tpu_custom_call.1} parent=1 // pred_fallthru
      _
    %v63 = vld [vmem:[#allocation4] sm:$0xff]
    %v64 = vld [vmem:[#allocation4 + $0x8] sm:$0xff]
    %v65 = vpack.c.bf16 %v64, %v63
    %v66 = vld [vmem:[#allocation7] sm:$0xf]
    %v67 = vld [vmem:[#allocation7 + $0x4] sm:$0xf]
    %v68 = vld [vmem:[#allocation7 + $0x8] sm:$0xf]
    %v69 = vld [vmem:[#allocation7 + $0xc] sm:$0xf]
    %v74 = vunpack.c.l.b16 %v66
    %v75 = vunpack.c.l.b16 %v67
    %v76 = vunpack.c.l.b16 %v68
    %v77 = vunpack.c.l.b16 %v69
    %v78 = vpack.c.b16 %v75, %v74
    %v79 = vpack.c.b16 %v77, %v76
    %vm82 = vcmask 261120
    %v84 = vsel %vm82, %v65, 0
    %86 = vmatprep.subr.bf16.mxu0 0
    %87 = vmatpush1.bf16.msra.mxu0 %v78
    %88 = vmatprep.subr.bf16.mxu0 0
    %89 = vmatpush1.bf16.msra.mxu0 %v79
    %90 = vmatprep.subr.bf16.mxu0 0
    %91 = vmatpush1.bf16.msra.mxu0 0
    %92 = vmatprep.subr.bf16.mxu0 0
    %93 = vmatpush1.bf16.msra.mxu0 0
    %94 = vmatprep.subr.bf16.mxu0 0
    %95 = vmatpush1.bf16.msra.mxu0 0
    %96 = vmatprep.subr.bf16.mxu0 0
    %97 = vmatpush1.bf16.msra.mxu0 0
    %98 = vmatprep.subr.bf16.mxu0 0
    %99 = vmatpush1.bf16.msra.mxu0 0
    %100 = vmatprep.subr.bf16.mxu0 0
    %101 = vmatpush1.bf16.msra.mxu0 0
    %102 = vmatprep.subr.bf16.mxu0 0
    %103 = vmatpush1.bf16.msra.mxu0 0
    %104 = vmatprep.subr.bf16.mxu0 0
    %105 = vmatpush1.bf16.msra.mxu0 0
    %106 = vmatprep.subr.bf16.mxu0 0
    %107 = vmatpush1.bf16.msra.mxu0 0
    %108 = vmatprep.subr.bf16.mxu0 0
    %109 = vmatpush1.bf16.msra.mxu0 0
    %110 = vmatprep.subr.bf16.mxu0 0
    %111 = vmatpush1.bf16.msra.mxu0 0
    %112 = vmatprep.subr.bf16.mxu0 0
    %113 = vmatpush1.bf16.msra.mxu0 0
    %114 = vmatprep.subr.bf16.mxu0 0
    %115 = vmatpush1.bf16.msra.mxu0 0
    %116 = vmatprep.subr.bf16.mxu0 0
    %117 = vmatpush1.bf16.msra.mxu0 0
    %118 = vmatprep.mubr.bf16.mxu0 0
    %119 = vmatmul.mubr.bf16.gmra.mrb[0].mxu0 %v84
    %v120 = vpop.f32.mrb[0].mxu0
    %v121 = vadd.f32 0.0, %v120
    %v122 = vpop.f32.mrb[0].mxu0
    %v123 = vpop.f32.mrb[0].mxu0
    %v124 = vadd.f32 0.0, %v123
    %v125 = vpop.f32.mrb[0].mxu0
    %126 = vdwg.mxu0
    %v127 = vpack.c.bf16 %v124, %v121
    %vm128 = vcmask 785408
    %129 = vst.msk [vmem:[#allocation2] sm:$0xff] %vm128, %v127
    %vm130 = vcmask 64512
    %131 = vst.msk [vmem:[#allocation11] sm:$0xff] %vm130, 0.0
    %v132 = vld [vmem:[#allocation2] sm:$0xf]
    %134 = vrot.lane.b32.xlu0 %v132, 96
    %v135 = vpop.permute.xlu0 %134
    %vm136 = vcmask 31744
    %v138 = vsel %vm136, %v132, 0
    %v141 = vsel %vm136, %v135, 0
    %143 = vmatprep.subr.bf16.mxu0 0
    %144 = vmatpush1.bf16.xpose.msra.mxu0 %v141
    %145 = vmatprep.subr.bf16.mxu0 0
    %146 = vmatpush1.bf16.xpose.msra.mxu0 0
    %147 = vmatprep.subr.bf16.mxu0 0
    %148 = vmatpush1.bf16.xpose.msra.mxu0 0
    %149 = vmatprep.subr.bf16.mxu0 0
    %150 = vmatpush1.bf16.xpose.msra.mxu0 0
    %151 = vmatprep.subr.bf16.mxu0 0
    %152 = vmatpush1.bf16.xpose.msra.mxu0 0
    %153 = vmatprep.subr.bf16.mxu0 0
    %154 = vmatpush1.bf16.xpose.msra.mxu0 0
    %155 = vmatprep.subr.bf16.mxu0 0
    %156 = vmatpush1.bf16.xpose.msra.mxu0 0
    %157 = vmatprep.subr.bf16.mxu0 0
    %158 = vmatpush1.bf16.xpose.msra.mxu0 0
    %159 = vmatprep.subr.bf16.mxu0 0
    %160 = vmatpush1.bf16.xpose.msra.mxu0 0
    %161 = vmatprep.subr.bf16.mxu0 0
    %162 = vmatpush1.bf16.xpose.msra.mxu0 0
    %163 = vmatprep.subr.bf16.mxu0 0
    %164 = vmatpush1.bf16.xpose.msra.mxu0 0
    %165 = vmatprep.subr.bf16.mxu0 0
    %166 = vmatpush1.bf16.xpose.msra.mxu0 0
    %167 = vmatprep.subr.bf16.mxu0 0
    %168 = vmatpush1.bf16.xpose.msra.mxu0 0
    %169 = vmatprep.subr.bf16.mxu0 0
    %170 = vmatpush1.bf16.xpose.msra.mxu0 0
    %171 = vmatprep.subr.bf16.mxu0 0
    %172 = vmatpush1.bf16.xpose.msra.mxu0 0
    %173 = vmatprep.subr.bf16.mxu0 0
    %174 = vmatpush1.bf16.xpose.msra.mxu0 0
    %175 = vmatprep.mubr.bf16.mxu0 0
    %176 = vmatmul.mubr.bf16.gmra.mrb[0].mxu0 %v138
    %v177 = vpop.f32.mrb[0].mxu0
    %v178 = vadd.f32 0.0, %v177
    %v179 = vpop.f32.mrb[0].mxu0
    %v180 = vpop.f32.mrb[0].mxu0
    %v181 = vpop.f32.mrb[0].mxu0
    %182 = vdwg.mxu0
    %v183 = vld [vmem:[#allocation11] sm:$0xff]
    %v184 = vadd.f32 %v183, %v178
    %185 = vst.msk [vmem:[#allocation11] sm:$0xff] %vm130, %v184
    %v186 = vsel %vm130, %v178, -inf
    %187 = vmax.xlane.f32.xlu0 %v186
    %v188 = vpop.xlane.xlu0 %187
    %v189 = vsub.f32 %v178, %v188
    %v190 = vmul.f32 %v189, 1.442695
    %v191 = vpow.pop %v190
    %v192 = vsel %vm130, %v191, 0.0
    %193 = vadd.xlane.f32.xlu0 %v192
    %v194 = vpop.xlane.xlu0 %193
    %v195 = vrcp.pop %v194
    %v196 = vmul.f32 %v191, %v195
    %v197 = vpack.c.bf16 %v196, %v196
    %198 = vrot.lane.b32.xlu0 %v132, 64
    %v199 = vpop.permute.xlu0 %198
    %v201 = vsel %vm130, %v197, 0
    %vm203 = vcmask 1043456
    %v205 = vsel %vm203, %v199, 0
    %207 = vmatprep.subr.bf16.mxu0 0
    %208 = vmatpush1.bf16.msra.mxu0 %v205
    %209 = vmatprep.subr.bf16.mxu0 0
    %210 = vmatpush1.bf16.msra.mxu0 0
    %211 = vmatprep.subr.bf16.mxu0 0
    %212 = vmatpush1.bf16.msra.mxu0 0
    %213 = vmatprep.subr.bf16.mxu0 0
    %214 = vmatpush1.bf16.msra.mxu0 0
    %215 = vmatprep.subr.bf16.mxu0 0
    %216 = vmatpush1.bf16.msra.mxu0 0
    %217 = vmatprep.subr.bf16.mxu0 0
    %218 = vmatpush1.bf16.msra.mxu0 0
    %219 = vmatprep.subr.bf16.mxu0 0
    %220 = vmatpush1.bf16.msra.mxu0 0
    %221 = vmatprep.subr.bf16.mxu0 0
    %222 = vmatpush1.bf16.msra.mxu0 0
    %223 = vmatprep.subr.bf16.mxu0 0
    %224 = vmatpush1.bf16.msra.mxu0 0
    %225 = vmatprep.subr.bf16.mxu0 0
    %226 = vmatpush1.bf16.msra.mxu0 0
    %227 = vmatprep.subr.bf16.mxu0 0
    %228 = vmatpush1.bf16.msra.mxu0 0
    %229 = vmatprep.subr.bf16.mxu0 0
    %230 = vmatpush1.bf16.msra.mxu0 0
    %231 = vmatprep.subr.bf16.mxu0 0
    %232 = vmatpush1.bf16.msra.mxu0 0
    %233 = vmatprep.subr.bf16.mxu0 0
    %234 = vmatpush1.bf16.msra.mxu0 0
    %235 = vmatprep.subr.bf16.mxu0 0
    %236 = vmatpush1.bf16.msra.mxu0 0
    %237 = vmatprep.subr.bf16.mxu0 0
    %238 = vmatpush1.bf16.msra.mxu0 0
    %239 = vmatprep.mubr.bf16.mxu0 0
    %240 = vmatmul.mubr.bf16.gmra.mrb[0].mxu0 %v201
    %v241 = vpop.f32.mrb[0].mxu0
    %v242 = vadd.f32 0.0, %v241
    %v243 = vpop.f32.mrb[0].mxu0
    %v244 = vpop.f32.mrb[0].mxu0
    %v245 = vpop.f32.mrb[0].mxu0
    %246 = vdwg.mxu0
    %v247 = vpack.c.bf16 %v242, %v242
    %vm248 = vcmask 27648
    %249 = vst.msk [vmem:[#allocation3] sm:$0xf] %vm248, %v247
    %v250 = vld [vmem:[#allocation2] sm:$0xf]
    %252 = vrot.lane.b32.xlu0 %v250, 124
    %v253 = vpop.permute.xlu0 %252
    %254 = vrot.lane.b32.xlu0 %v250, 92
    %v255 = vpop.permute.xlu0 %254
    %v257 = vsel %vm136, %v253, 0
    %v260 = vsel %vm136, %v255, 0
    %262 = vmatprep.subr.bf16.mxu0 0
    %263 = vmatpush1.bf16.xpose.msra.mxu0 %v260
    %264 = vmatprep.subr.bf16.mxu0 0
    %265 = vmatpush1.bf16.xpose.msra.mxu0 0
    %266 = vmatprep.subr.bf16.mxu0 0
    %267 = vmatpush1.bf16.xpose.msra.mxu0 0
    %268 = vmatprep.subr.bf16.mxu0 0
    %269 = vmatpush1.bf16.xpose.msra.mxu0 0
    %270 = vmatprep.subr.bf16.mxu0 0
    %271 = vmatpush1.bf16.xpose.msra.mxu0 0
    %272 = vmatprep.subr.bf16.mxu0 0
    %273 = vmatpush1.bf16.xpose.msra.mxu0 0
    %274 = vmatprep.subr.bf16.mxu0 0
    %275 = vmatpush1.bf16.xpose.msra.mxu0 0
    %276 = vmatprep.subr.bf16.mxu0 0
    %277 = vmatpush1.bf16.xpose.msra.mxu0 0
    %278 = vmatprep.subr.bf16.mxu0 0
    %279 = vmatpush1.bf16.xpose.msra.mxu0 0
    %280 = vmatprep.subr.bf16.mxu0 0
    %281 = vmatpush1.bf16.xpose.msra.mxu0 0
    %282 = vmatprep.subr.bf16.mxu0 0
    %283 = vmatpush1.bf16.xpose.msra.mxu0 0
    %284 = vmatprep.subr.bf16.mxu0 0
    %285 = vmatpush1.bf16.xpose.msra.mxu0 0
    %286 = vmatprep.subr.bf16.mxu0 0
    %287 = vmatpush1.bf16.xpose.msra.mxu0 0
    %288 = vmatprep.subr.bf16.mxu0 0
    %289 = vmatpush1.bf16.xpose.msra.mxu0 0
    %290 = vmatprep.subr.bf16.mxu0 0
    %291 = vmatpush1.bf16.xpose.msra.mxu0 0
    %292 = vmatprep.subr.bf16.mxu0 0
    %293 = vmatpush1.bf16.xpose.msra.mxu0 0
    %294 = vmatprep.mubr.bf16.mxu0 0
    %295 = vmatmul.mubr.bf16.gmra.mrb[0].mxu0 %v257
    %v296 = vpop.f32.mrb[0].mxu0
    %v297 = vadd.f32 0.0, %v296
    %v298 = vpop.f32.mrb[0].mxu0
    %v299 = vpop.f32.mrb[0].mxu0
    %v300 = vpop.f32.mrb[0].mxu0
    %301 = vdwg.mxu0
    %v302 = vld [vmem:[#allocation11] sm:$0xff]
    %v303 = vadd.f32 %v302, %v297
    %304 = vst.msk [vmem:[#allocation11] sm:$0xff] %vm130, %v303
    %v305 = vsel %vm130, %v297, -inf
    %306 = vmax.xlane.f32.xlu0 %v305
    %v307 = vpop.xlane.xlu0 %306
    %v308 = vsub.f32 %v297, %v307
    %v309 = vmul.f32 %v308, 1.442695
    %v310 = vpow.pop %v309
    %v311 = vsel %vm130, %v310, 0.0
    %312 = vadd.xlane.f32.xlu0 %v311
    %v313 = vpop.xlane.xlu0 %312
    %v314 = vrcp.pop %v313
    %v315 = vmul.f32 %v310, %v314
    %v316 = vpack.c.bf16 %v315, %v315
    %317 = vrot.lane.b32.xlu0 %v250, 60
    %v318 = vpop.permute.xlu0 %317
    %v320 = vsel %vm130, %v316, 0
    %v323 = vsel %vm203, %v318, 0
    %325 = vmatprep.subr.bf16.mxu0 0
    %326 = vmatpush1.bf16.msra.mxu0 %v323
    %327 = vmatprep.subr.bf16.mxu0 0
    %328 = vmatpush1.bf16.msra.mxu0 0
    %329 = vmatprep.subr.bf16.mxu0 0
    %330 = vmatpush1.bf16.msra.mxu0 0
    %331 = vmatprep.subr.bf16.mxu0 0
    %332 = vmatpush1.bf16.msra.mxu0 0
    %333 = vmatprep.subr.bf16.mxu0 0
    %334 = vmatpush1.bf16.msra.mxu0 0
    %335 = vmatprep.subr.bf16.mxu0 0
    %336 = vmatpush1.bf16.msra.mxu0 0
    %337 = vmatprep.subr.bf16.mxu0 0
    %338 = vmatpush1.bf16.msra.mxu0 0
    %339 = vmatprep.subr.bf16.mxu0 0
    %340 = vmatpush1.bf16.msra.mxu0 0
    %341 = vmatprep.subr.bf16.mxu0 0
    %342 = vmatpush1.bf16.msra.mxu0 0
    %343 = vmatprep.subr.bf16.mxu0 0
    %344 = vmatpush1.bf16.msra.mxu0 0
    %345 = vmatprep.subr.bf16.mxu0 0
    %346 = vmatpush1.bf16.msra.mxu0 0
    %347 = vmatprep.subr.bf16.mxu0 0
    %348 = vmatpush1.bf16.msra.mxu0 0
    %349 = vmatprep.subr.bf16.mxu0 0
    %350 = vmatpush1.bf16.msra.mxu0 0
    %351 = vmatprep.subr.bf16.mxu0 0
    %352 = vmatpush1.bf16.msra.mxu0 0
    %353 = vmatprep.subr.bf16.mxu0 0
    %354 = vmatpush1.bf16.msra.mxu0 0
    %355 = vmatprep.subr.bf16.mxu0 0
    %356 = vmatpush1.bf16.msra.mxu0 0
    %357 = vmatprep.mubr.bf16.mxu0 0
    %358 = vmatmul.mubr.bf16.gmra.mrb[0].mxu0 %v320
    %v359 = vpop.f32.mrb[0].mxu0
    %v360 = vadd.f32 0.0, %v359
    %v361 = vpop.f32.mrb[0].mxu0
    %v362 = vpop.f32.mrb[0].mxu0
    %v363 = vpop.f32.mrb[0].mxu0
    %364 = vdwg.mxu0
    %v365 = vpack.c.bf16 %v360, %v360
    %367 = vrot.lane.b32.xlu0 %v365, 4
    %v368 = vpop.permute.xlu0 %367
    %vm370 = vcmask 60448
    %371 = vst.msk [vmem:[#allocation3] sm:$0xf] %vm370, %v368
    %v372 = vld [vmem:[#allocation2] sm:$0xf]
    %374 = vrot.lane.b32.xlu0 %v372, 120
    %v375 = vpop.permute.xlu0 %374
    %376 = vrot.lane.b32.xlu0 %v372, 88
    %v377 = vpop.permute.xlu0 %376
    %v379 = vsel %vm136, %v375, 0
    %v382 = vsel %vm136, %v377, 0
    %384 = vmatprep.subr.bf16.mxu0 0
    %385 = vmatpush1.bf16.xpose.msra.mxu0 %v382
    %386 = vmatprep.subr.bf16.mxu0 0
    %387 = vmatpush1.bf16.xpose.msra.mxu0 0
    %388 = vmatprep.subr.bf16.mxu0 0
    %389 = vmatpush1.bf16.xpose.msra.mxu0 0
    %390 = vmatprep.subr.bf16.mxu0 0
    %391 = vmatpush1.bf16.xpose.msra.mxu0 0
    %392 = vmatprep.subr.bf16.mxu0 0
    %393 = vmatpush1.bf16.xpose.msra.mxu0 0
    %394 = vmatprep.subr.bf16.mxu0 0
    %395 = vmatpush1.bf16.xpose.msra.mxu0 0
    %396 = vmatprep.subr.bf16.mxu0 0
    %397 = vmatpush1.bf16.xpose.msra.mxu0 0
    %398 = vmatprep.subr.bf16.mxu0 0
    %399 = vmatpush1.bf16.xpose.msra.mxu0 0
    %400 = vmatprep.subr.bf16.mxu0 0
    %401 = vmatpush1.bf16.xpose.msra.mxu0 0
    %402 = vmatprep.subr.bf16.mxu0 0
    %403 = vmatpush1.bf16.xpose.msra.mxu0 0
    %404 = vmatprep.subr.bf16.mxu0 0
    %405 = vmatpush1.bf16.xpose.msra.mxu0 0
    %406 = vmatprep.subr.bf16.mxu0 0
    %407 = vmatpush1.bf16.xpose.msra.mxu0 0
    %408 = vmatprep.subr.bf16.mxu0 0
    %409 = vmatpush1.bf16.xpose.msra.mxu0 0
    %410 = vmatprep.subr.bf16.mxu0 0
    %411 = vmatpush1.bf16.xpose.msra.mxu0 0
    %412 = vmatprep.subr.bf16.mxu0 0
    %413 = vmatpush1.bf16.xpose.msra.mxu0 0
    %414 = vmatprep.subr.bf16.mxu0 0
    %415 = vmatpush1.bf16.xpose.msra.mxu0 0
    %416 = vmatprep.mubr.bf16.mxu0 0
    %417 = vmatmul.mubr.bf16.gmra.mrb[0].mxu0 %v379
    %v418 = vpop.f32.mrb[0].mxu0
    %v419 = vadd.f32 0.0, %v418
    %v420 = vpop.f32.mrb[0].mxu0
    %v421 = vpop.f32.mrb[0].mxu0
    %v422 = vpop.f32.mrb[0].mxu0
    %423 = vdwg.mxu0
    %v424 = vld [vmem:[#allocation11] sm:$0xff]
    %v425 = vadd.f32 %v424, %v419
    %426 = vst.msk [vmem:[#allocation11] sm:$0xff] %vm130, %v425
    %v427 = vsel %vm130, %v419, -inf
    %428 = vmax.xlane.f32.xlu0 %v427
    %v429 = vpop.xlane.xlu0 %428
    %v430 = vsub.f32 %v419, %v429
    %v431 = vmul.f32 %v430, 1.442695
    %v432 = vpow.pop %v431
    %v433 = vsel %vm130, %v432, 0.0
    %434 = vadd.xlane.f32.xlu0 %v433
    %v435 = vpop.xlane.xlu0 %434
    %v436 = vrcp.pop %v435
    %v437 = vmul.f32 %v432, %v436
    %v438 = vpack.c.bf16 %v437, %v437
    %439 = vrot.lane.b32.xlu0 %v372, 56
    %v440 = vpop.permute.xlu0 %439
    %v442 = vsel %vm130, %v438, 0
    %v445 = vsel %vm203, %v440, 0
    %447 = vmatprep.subr.bf16.mxu0 0
    %448 = vmatpush1.bf16.msra.mxu0 %v445
    %449 = vmatprep.subr.bf16.mxu0 0
    %450 = vmatpush1.bf16.msra.mxu0 0
    %451 = vmatprep.subr.bf16.mxu0 0
    %452 = vmatpush1.bf16.msra.mxu0 0
    %453 = vmatprep.subr.bf16.mxu0 0
    %454 = vmatpush1.bf16.msra.mxu0 0
    %455 = vmatprep.subr.bf16.mxu0 0
    %456 = vmatpush1.bf16.msra.mxu0 0
    %457 = vmatprep.subr.bf16.mxu0 0
    %458 = vmatpush1.bf16.msra.mxu0 0
    %459 = vmatprep.subr.bf16.mxu0 0
    %460 = vmatpush1.bf16.msra.mxu0 0
    %461 = vmatprep.subr.bf16.mxu0 0
    %462 = vmatpush1.bf16.msra.mxu0 0
    %463 = vmatprep.subr.bf16.mxu0 0
    %464 = vmatpush1.bf16.msra.mxu0 0
    %465 = vmatprep.subr.bf16.mxu0 0
    %466 = vmatpush1.bf16.msra.mxu0 0
    %467 = vmatprep.subr.bf16.mxu0 0
    %468 = vmatpush1.bf16.msra.mxu0 0
    %469 = vmatprep.subr.bf16.mxu0 0
    %470 = vmatpush1.bf16.msra.mxu0 0
    %471 = vmatprep.subr.bf16.mxu0 0
    %472 = vmatpush1.bf16.msra.mxu0 0
    %473 = vmatprep.subr.bf16.mxu0 0
    %474 = vmatpush1.bf16.msra.mxu0 0
    %475 = vmatprep.subr.bf16.mxu0 0
    %476 = vmatpush1.bf16.msra.mxu0 0
    %477 = vmatprep.subr.bf16.mxu0 0
    %478 = vmatpush1.bf16.msra.mxu0 0
    %479 = vmatprep.mubr.bf16.mxu0 0
    %480 = vmatmul.mubr.bf16.gmra.mrb[0].mxu0 %v442
    %v481 = vpop.f32.mrb[0].mxu0
    %v482 = vadd.f32 0.0, %v481
    %v483 = vpop.f32.mrb[0].mxu0
    %v484 = vpop.f32.mrb[0].mxu0
    %v485 = vpop.f32.mrb[0].mxu0
    %486 = vdwg.mxu0
    %v487 = vpack.c.bf16 %v482, %v482
    %489 = vrot.lane.b32.xlu0 %v487, 8
    %v490 = vpop.permute.xlu0 %489
    %vm492 = vcmask 93248
    %493 = vst.msk [vmem:[#allocation3] sm:$0xf] %vm492, %v490
    %v494 = vld [vmem:[#allocation2] sm:$0xf]
    %496 = vrot.lane.b32.xlu0 %v494, 116
    %v497 = vpop.permute.xlu0 %496
    %498 = vrot.lane.b32.xlu0 %v494, 84
    %v499 = vpop.permute.xlu0 %498
    %v501 = vsel %vm136, %v497, 0
    %v504 = vsel %vm136, %v499, 0
    %506 = vmatprep.subr.bf16.mxu0 0
    %507 = vmatpush1.bf16.xpose.msra.mxu0 %v504
    %508 = vmatprep.subr.bf16.mxu0 0
    %509 = vmatpush1.bf16.xpose.msra.mxu0 0
    %510 = vmatprep.subr.bf16.mxu0 0
    %511 = vmatpush1.bf16.xpose.msra.mxu0 0
    %512 = vmatprep.subr.bf16.mxu0 0
    %513 = vmatpush1.bf16.xpose.msra.mxu0 0
    %514 = vmatprep.subr.bf16.mxu0 0
    %515 = vmatpush1.bf16.xpose.msra.mxu0 0
    %516 = vmatprep.subr.bf16.mxu0 0
    %517 = vmatpush1.bf16.xpose.msra.mxu0 0
    %518 = vmatprep.subr.bf16.mxu0 0
    %519 = vmatpush1.bf16.xpose.msra.mxu0 0
    %520 = vmatprep.subr.bf16.mxu0 0
    %521 = vmatpush1.bf16.xpose.msra.mxu0 0
    %522 = vmatprep.subr.bf16.mxu0 0
    %523 = vmatpush1.bf16.xpose.msra.mxu0 0
    %524 = vmatprep.subr.bf16.mxu0 0
    %525 = vmatpush1.bf16.xpose.msra.mxu0 0
    %526 = vmatprep.subr.bf16.mxu0 0
    %527 = vmatpush1.bf16.xpose.msra.mxu0 0
    %528 = vmatprep.subr.bf16.mxu0 0
    %529 = vmatpush1.bf16.xpose.msra.mxu0 0
    %530 = vmatprep.subr.bf16.mxu0 0
    %531 = vmatpush1.bf16.xpose.msra.mxu0 0
    %532 = vmatprep.subr.bf16.mxu0 0
    %533 = vmatpush1.bf16.xpose.msra.mxu0 0
    %534 = vmatprep.subr.bf16.mxu0 0
    %535 = vmatpush1.bf16.xpose.msra.mxu0 0
    %536 = vmatprep.subr.bf16.mxu0 0
    %537 = vmatpush1.bf16.xpose.msra.mxu0 0
    %538 = vmatprep.mubr.bf16.mxu0 0
    %539 = vmatmul.mubr.bf16.gmra.mrb[0].mxu0 %v501
    %v540 = vpop.f32.mrb[0].mxu0
    %v541 = vadd.f32 0.0, %v540
    %v542 = vpop.f32.mrb[0].mxu0
    %v543 = vpop.f32.mrb[0].mxu0
    %v544 = vpop.f32.mrb[0].mxu0
    %545 = vdwg.mxu0
    %v546 = vld [vmem:[#allocation11] sm:$0xff]
    %v547 = vadd.f32 %v546, %v541
    %548 = vst.msk [vmem:[#allocation11] sm:$0xff] %vm130, %v547
    %v549 = vsel %vm130, %v541, -inf
    %550 = vmax.xlane.f32.xlu0 %v549
    %v551 = vpop.xlane.xlu0 %550
    %v552 = vsub.f32 %v541, %v551
    %v553 = vmul.f32 %v552, 1.442695
    %v554 = vpow.pop %v553
    %v555 = vsel %vm130, %v554, 0.0
    %556 = vadd.xlane.f32.xlu0 %v555
    %v557 = vpop.xlane.xlu0 %556
    %v558 = vrcp.pop %v557
    %v559 = vmul.f32 %v554, %v558
    %v560 = vpack.c.bf16 %v559, %v559
    %561 = vrot.lane.b32.xlu0 %v494, 52
    %v562 = vpop.permute.xlu0 %561
    %v564 = vsel %vm130, %v560, 0
    %v567 = vsel %vm203, %v562, 0
    %569 = vmatprep.subr.bf16.mxu0 0
    %570 = vmatpush1.bf16.msra.mxu0 %v567
    %571 = vmatprep.subr.bf16.mxu0 0
    %572 = vmatpush1.bf16.msra.mxu0 0
    %573 = vmatprep.subr.bf16.mxu0 0
    %574 = vmatpush1.bf16.msra.mxu0 0
    %575 = vmatprep.subr.bf16.mxu0 0
    %576 = vmatpush1.bf16.msra.mxu0 0
    %577 = vmatprep.subr.bf16.mxu0 0
    %578 = vmatpush1.bf16.msra.mxu0 0
    %579 = vmatprep.subr.bf16.mxu0 0
    %580 = vmatpush1.bf16.msra.mxu0 0
    %581 = vmatprep.subr.bf16.mxu0 0
    %582 = vmatpush1.bf16.msra.mxu0 0
    %583 = vmatprep.subr.bf16.mxu0 0
    %584 = vmatpush1.bf16.msra.mxu0 0
    %585 = vmatprep.subr.bf16.mxu0 0
    %586 = vmatpush1.bf16.msra.mxu0 0
    %587 = vmatprep.subr.bf16.mxu0 0
    %588 = vmatpush1.bf16.msra.mxu0 0
    %589 = vmatprep.subr.bf16.mxu0 0
    %590 = vmatpush1.bf16.msra.mxu0 0
    %591 = vmatprep.subr.bf16.mxu0 0
    %592 = vmatpush1.bf16.msra.mxu0 0
    %593 = vmatprep.subr.bf16.mxu0 0
    %594 = vmatpush1.bf16.msra.mxu0 0
    %595 = vmatprep.subr.bf16.mxu0 0
    %596 = vmatpush1.bf16.msra.mxu0 0
    %597 = vmatprep.subr.bf16.mxu0 0
    %598 = vmatpush1.bf16.msra.mxu0 0
    %599 = vmatprep.subr.bf16.mxu0 0
    %600 = vmatpush1.bf16.msra.mxu0 0
    %601 = vmatprep.mubr.bf16.mxu0 0
    %602 = vmatmul.mubr.bf16.gmra.mrb[0].mxu0 %v564
    %v603 = vpop.f32.mrb[0].mxu0
    %v604 = vadd.f32 0.0, %v603
    %v605 = vpop.f32.mrb[0].mxu0
    %v606 = vpop.f32.mrb[0].mxu0
    %v607 = vpop.f32.mrb[0].mxu0
    %608 = vdwg.mxu0
    %v609 = vpack.c.bf16 %v604, %v604
    %611 = vrot.lane.b32.xlu0 %v609, 12
    %v612 = vpop.permute.xlu0 %611
    %vm614 = vcmask 126048
    %615 = vst.msk [vmem:[#allocation3] sm:$0xf] %vm614, %v612
    %v616 = vld [vmem:[#allocation2] sm:$0xf]
    %618 = vrot.lane.b32.xlu0 %v616, 112
    %v619 = vpop.permute.xlu0 %618
    %620 = vrot.lane.b32.xlu0 %v616, 80
    %v621 = vpop.permute.xlu0 %620
    %v623 = vsel %vm136, %v619, 0
    %v626 = vsel %vm136, %v621, 0
    %628 = vmatprep.subr.bf16.mxu0 0
    %629 = vmatpush1.bf16.xpose.msra.mxu0 %v626
    %630 = vmatprep.subr.bf16.mxu0 0
    %631 = vmatpush1.bf16.xpose.msra.mxu0 0
    %632 = vmatprep.subr.bf16.mxu0 0
    %633 = vmatpush1.bf16.xpose.msra.mxu0 0
    %634 = vmatprep.subr.bf16.mxu0 0
    %635 = vmatpush1.bf16.xpose.msra.mxu0 0
    %636 = vmatprep.subr.bf16.mxu0 0
    %637 = vmatpush1.bf16.xpose.msra.mxu0 0
    %638 = vmatprep.subr.bf16.mxu0 0
    %639 = vmatpush1.bf16.xpose.msra.mxu0 0
    %640 = vmatprep.subr.bf16.mxu0 0
    %641 = vmatpush1.bf16.xpose.msra.mxu0 0
    %642 = vmatprep.subr.bf16.mxu0 0
    %643 = vmatpush1.bf16.xpose.msra.mxu0 0
    %644 = vmatprep.subr.bf16.mxu0 0
    %645 = vmatpush1.bf16.xpose.msra.mxu0 0
    %646 = vmatprep.subr.bf16.mxu0 0
    %647 = vmatpush1.bf16.xpose.msra.mxu0 0
    %648 = vmatprep.subr.bf16.mxu0 0
    %649 = vmatpush1.bf16.xpose.msra.mxu0 0
    %650 = vmatprep.subr.bf16.mxu0 0
    %651 = vmatpush1.bf16.xpose.msra.mxu0 0
    %652 = vmatprep.subr.bf16.mxu0 0
    %653 = vmatpush1.bf16.xpose.msra.mxu0 0
    %654 = vmatprep.subr.bf16.mxu0 0
    %655 = vmatpush1.bf16.xpose.msra.mxu0 0
    %656 = vmatprep.subr.bf16.mxu0 0
    %657 = vmatpush1.bf16.xpose.msra.mxu0 0
    %658 = vmatprep.subr.bf16.mxu0 0
    %659 = vmatpush1.bf16.xpose.msra.mxu0 0
    %660 = vmatprep.mubr.bf16.mxu0 0
    %661 = vmatmul.mubr.bf16.gmra.mrb[0].mxu0 %v623
    %v662 = vpop.f32.mrb[0].mxu0
    %v663 = vadd.f32 0.0, %v662
    %v664 = vpop.f32.mrb[0].mxu0
    %v665 = vpop.f32.mrb[0].mxu0
    %v666 = vpop.f32.mrb[0].mxu0
    %667 = vdwg.mxu0
    %v668 = vld [vmem:[#allocation11] sm:$0xff]
    %v669 = vadd.f32 %v668, %v663
    %670 = vst.msk [vmem:[#allocation11] sm:$0xff] %vm130, %v669
    %v671 = vsel %vm130, %v663, -inf
    %672 = vmax.xlane.f32.xlu0 %v671
    %v673 = vpop.xlane.xlu0 %672
    %v674 = vsub.f32 %v663, %v673
    %v675 = vmul.f32 %v674, 1.442695
    %v676 = vpow.pop %v675
    %v677 = vsel %vm130, %v676, 0.0
    %678 = vadd.xlane.f32.xlu0 %v677
    %v679 = vpop.xlane.xlu0 %678
    %v680 = vrcp.pop %v679
    %v681 = vmul.f32 %v676, %v680
    %v682 = vpack.c.bf16 %v681, %v681
    %683 = vrot.lane.b32.xlu0 %v616, 48
    %v684 = vpop.permute.xlu0 %683
    %v686 = vsel %vm130, %v682, 0
    %v689 = vsel %vm203, %v684, 0
    %691 = vmatprep.subr.bf16.mxu0 0
    %692 = vmatpush1.bf16.msra.mxu0 %v689
    %693 = vmatprep.subr.bf16.mxu0 0
    %694 = vmatpush1.bf16.msra.mxu0 0
    %695 = vmatprep.subr.bf16.mxu0 0
    %696 = vmatpush1.bf16.msra.mxu0 0
    %697 = vmatprep.subr.bf16.mxu0 0
    %698 = vmatpush1.bf16.msra.mxu0 0
    %699 = vmatprep.subr.bf16.mxu0 0
    %700 = vmatpush1.bf16.msra.mxu0 0
    %701 = vmatprep.subr.bf16.mxu0 0
    %702 = vmatpush1.bf16.msra.mxu0 0
    %703 = vmatprep.subr.bf16.mxu0 0
    %704 = vmatpush1.bf16.msra.mxu0 0
    %705 = vmatprep.subr.bf16.mxu0 0
    %706 = vmatpush1.bf16.msra.mxu0 0
    %707 = vmatprep.subr.bf16.mxu0 0
    %708 = vmatpush1.bf16.msra.mxu0 0
    %709 = vmatprep.subr.bf16.mxu0 0
    %710 = vmatpush1.bf16.msra.mxu0 0
    %711 = vmatprep.subr.bf16.mxu0 0
    %712 = vmatpush1.bf16.msra.mxu0 0
    %713 = vmatprep.subr.bf16.mxu0 0
    %714 = vmatpush1.bf16.msra.mxu0 0
    %715 = vmatprep.subr.bf16.mxu0 0
    %716 = vmatpush1.bf16.msra.mxu0 0
    %717 = vmatprep.subr.bf16.mxu0 0
    %718 = vmatpush1.bf16.msra.mxu0 0
    %719 = vmatprep.subr.bf16.mxu0 0
    %720 = vmatpush1.bf16.msra.mxu0 0
    %721 = vmatprep.subr.bf16.mxu0 0
    %722 = vmatpush1.bf16.msra.mxu0 0
    %723 = vmatprep.mubr.bf16.mxu0 0
    %724 = vmatmul.mubr.bf16.gmra.mrb[0].mxu0 %v686
    %v725 = vpop.f32.mrb[0].mxu0
    %v726 = vadd.f32 0.0, %v725
    %v727 = vpop.f32.mrb[0].mxu0
    %v728 = vpop.f32.mrb[0].mxu0
    %v729 = vpop.f32.mrb[0].mxu0
    %730 = vdwg.mxu0
    %v731 = vpack.c.bf16 %v726, %v726
    %733 = vrot.lane.b32.xlu0 %v731, 16
    %v734 = vpop.permute.xlu0 %733
    %vm736 = vcmask 158848
    %737 = vst.msk [vmem:[#allocation3] sm:$0xf] %vm736, %v734
    %v738 = vld [vmem:[#allocation2] sm:$0xf]
    %740 = vrot.lane.b32.xlu0 %v738, 108
    %v741 = vpop.permute.xlu0 %740
    %742 = vrot.lane.b32.xlu0 %v738, 76
    %v743 = vpop.permute.xlu0 %742
    %v745 = vsel %vm136, %v741, 0
    %v748 = vsel %vm136, %v743, 0
    %750 = vmatprep.subr.bf16.mxu0 0
    %751 = vmatpush1.bf16.xpose.msra.mxu0 %v748
    %752 = vmatprep.subr.bf16.mxu0 0
    %753 = vmatpush1.bf16.xpose.msra.mxu0 0
    %754 = vmatprep.subr.bf16.mxu0 0
    %755 = vmatpush1.bf16.xpose.msra.mxu0 0
    %756 = vmatprep.subr.bf16.mxu0 0
    %757 = vmatpush1.bf16.xpose.msra.mxu0 0
    %758 = vmatprep.subr.bf16.mxu0 0
    %759 = vmatpush1.bf16.xpose.msra.mxu0 0
    %760 = vmatprep.subr.bf16.mxu0 0
    %761 = vmatpush1.bf16.xpose.msra.mxu0 0
    %762 = vmatprep.subr.bf16.mxu0 0
    %763 = vmatpush1.bf16.xpose.msra.mxu0 0
    %764 = vmatprep.subr.bf16.mxu0 0
    %765 = vmatpush1.bf16.xpose.msra.mxu0 0
    %766 = vmatprep.subr.bf16.mxu0 0
    %767 = vmatpush1.bf16.xpose.msra.mxu0 0
    %768 = vmatprep.subr.bf16.mxu0 0
    %769 = vmatpush1.bf16.xpose.msra.mxu0 0
    %770 = vmatprep.subr.bf16.mxu0 0
    %771 = vmatpush1.bf16.xpose.msra.mxu0 0
    %772 = vmatprep.subr.bf16.mxu0 0
    %773 = vmatpush1.bf16.xpose.msra.mxu0 0
    %774 = vmatprep.subr.bf16.mxu0 0
    %775 = vmatpush1.bf16.xpose.msra.mxu0 0
    %776 = vmatprep.subr.bf16.mxu0 0
    %777 = vmatpush1.bf16.xpose.msra.mxu0 0
    %778 = vmatprep.subr.bf16.mxu0 0
    %779 = vmatpush1.bf16.xpose.msra.mxu0 0
    %780 = vmatprep.subr.bf16.mxu0 0
    %781 = vmatpush1.bf16.xpose.msra.mxu0 0
    %782 = vmatprep.mubr.bf16.mxu0 0
    %783 = vmatmul.mubr.bf16.gmra.mrb[0].mxu0 %v745
    %v784 = vpop.f32.mrb[0].mxu0
    %v785 = vadd.f32 0.0, %v784
    %v786 = vpop.f32.mrb[0].mxu0
    %v787 = vpop.f32.mrb[0].mxu0
    %v788 = vpop.f32.mrb[0].mxu0
    %789 = vdwg.mxu0
    %v790 = vld [vmem:[#allocation11] sm:$0xff]
    %v791 = vadd.f32 %v790, %v785
    %792 = vst.msk [vmem:[#allocation11] sm:$0xff] %vm130, %v791
    %v793 = vsel %vm130, %v785, -inf
    %794 = vmax.xlane.f32.xlu0 %v793
    %v795 = vpop.xlane.xlu0 %794
    %v796 = vsub.f32 %v785, %v795
    %v797 = vmul.f32 %v796, 1.442695
    %v798 = vpow.pop %v797
    %v799 = vsel %vm130, %v798, 0.0
    %800 = vadd.xlane.f32.xlu0 %v799
    %v801 = vpop.xlane.xlu0 %800
    %v802 = vrcp.pop %v801
    %v803 = vmul.f32 %v798, %v802
    %v804 = vpack.c.bf16 %v803, %v803
    %805 = vrot.lane.b32.xlu0 %v738, 44
    %v806 = vpop.permute.xlu0 %805
    %v808 = vsel %vm130, %v804, 0
    %v811 = vsel %vm203, %v806, 0
    %813 = vmatprep.subr.bf16.mxu0 0
    %814 = vmatpush1.bf16.msra.mxu0 %v811
    %815 = vmatprep.subr.bf16.mxu0 0
    %816 = vmatpush1.bf16.msra.mxu0 0
    %817 = vmatprep.subr.bf16.mxu0 0
    %818 = vmatpush1.bf16.msra.mxu0 0
    %819 = vmatprep.subr.bf16.mxu0 0
    %820 = vmatpush1.bf16.msra.mxu0 0
    %821 = vmatprep.subr.bf16.mxu0 0
    %822 = vmatpush1.bf16.msra.mxu0 0
    %823 = vmatprep.subr.bf16.mxu0 0
    %824 = vmatpush1.bf16.msra.mxu0 0
    %825 = vmatprep.subr.bf16.mxu0 0
    %826 = vmatpush1.bf16.msra.mxu0 0
    %827 = vmatprep.subr.bf16.mxu0 0
    %828 = vmatpush1.bf16.msra.mxu0 0
    %829 = vmatprep.subr.bf16.mxu0 0
    %830 = vmatpush1.bf16.msra.mxu0 0
    %831 = vmatprep.subr.bf16.mxu0 0
    %832 = vmatpush1.bf16.msra.mxu0 0
    %833 = vmatprep.subr.bf16.mxu0 0
    %834 = vmatpush1.bf16.msra.mxu0 0
    %835 = vmatprep.subr.bf16.mxu0 0
    %836 = vmatpush1.bf16.msra.mxu0 0
    %837 = vmatprep.subr.bf16.mxu0 0
    %838 = vmatpush1.bf16.msra.mxu0 0
    %839 = vmatprep.subr.bf16.mxu0 0
    %840 = vmatpush1.bf16.msra.mxu0 0
    %841 = vmatprep.subr.bf16.mxu0 0
    %842 = vmatpush1.bf16.msra.mxu0 0
    %843 = vmatprep.subr.bf16.mxu0 0
    %844 = vmatpush1.bf16.msra.mxu0 0
    %845 = vmatprep.mubr.bf16.mxu0 0
    %846 = vmatmul.mubr.bf16.gmra.mrb[0].mxu0 %v808
    %v847 = vpop.f32.mrb[0].mxu0
    %v848 = vadd.f32 0.0, %v847
    %v849 = vpop.f32.mrb[0].mxu0
    %v850 = vpop.f32.mrb[0].mxu0
    %v851 = vpop.f32.mrb[0].mxu0
    %852 = vdwg.mxu0
    %v853 = vpack.c.bf16 %v848, %v848
    %855 = vrot.lane.b32.xlu0 %v853, 20
    %v856 = vpop.permute.xlu0 %855
    %vm858 = vcmask 191648
    %859 = vst.msk [vmem:[#allocation3] sm:$0xf] %vm858, %v856
    %v860 = vld [vmem:[#allocation2] sm:$0xf]
    %862 = vrot.lane.b32.xlu0 %v860, 104
    %v863 = vpop.permute.xlu0 %862
    %864 = vrot.lane.b32.xlu0 %v860, 72
    %v865 = vpop.permute.xlu0 %864
    %v867 = vsel %vm136, %v863, 0
    %v870 = vsel %vm136, %v865, 0
    %872 = vmatprep.subr.bf16.mxu0 0
    %873 = vmatpush1.bf16.xpose.msra.mxu0 %v870
    %874 = vmatprep.subr.bf16.mxu0 0
    %875 = vmatpush1.bf16.xpose.msra.mxu0 0
    %876 = vmatprep.subr.bf16.mxu0 0
    %877 = vmatpush1.bf16.xpose.msra.mxu0 0
    %878 = vmatprep.subr.bf16.mxu0 0
    %879 = vmatpush1.bf16.xpose.msra.mxu0 0
    %880 = vmatprep.subr.bf16.mxu0 0
    %881 = vmatpush1.bf16.xpose.msra.mxu0 0
    %882 = vmatprep.subr.bf16.mxu0 0
    %883 = vmatpush1.bf16.xpose.msra.mxu0 0
    %884 = vmatprep.subr.bf16.mxu0 0
    %885 = vmatpush1.bf16.xpose.msra.mxu0 0
    %886 = vmatprep.subr.bf16.mxu0 0
    %887 = vmatpush1.bf16.xpose.msra.mxu0 0
    %888 = vmatprep.subr.bf16.mxu0 0
    %889 = vmatpush1.bf16.xpose.msra.mxu0 0
    %890 = vmatprep.subr.bf16.mxu0 0
    %891 = vmatpush1.bf16.xpose.msra.mxu0 0
    %892 = vmatprep.subr.bf16.mxu0 0
    %893 = vmatpush1.bf16.xpose.msra.mxu0 0
    %894 = vmatprep.subr.bf16.mxu0 0
    %895 = vmatpush1.bf16.xpose.msra.mxu0 0
    %896 = vmatprep.subr.bf16.mxu0 0
    %897 = vmatpush1.bf16.xpose.msra.mxu0 0
    %898 = vmatprep.subr.bf16.mxu0 0
    %899 = vmatpush1.bf16.xpose.msra.mxu0 0
    %900 = vmatprep.subr.bf16.mxu0 0
    %901 = vmatpush1.bf16.xpose.msra.mxu0 0
    %902 = vmatprep.subr.bf16.mxu0 0
    %903 = vmatpush1.bf16.xpose.msra.mxu0 0
    %904 = vmatprep.mubr.bf16.mxu0 0
    %905 = vmatmul.mubr.bf16.gmra.mrb[0].mxu0 %v867
    %v906 = vpop.f32.mrb[0].mxu0
    %v907 = vadd.f32 0.0, %v906
    %v908 = vpop.f32.mrb[0].mxu0
    %v909 = vpop.f32.mrb[0].mxu0
    %v910 = vpop.f32.mrb[0].mxu0
    %911 = vdwg.mxu0
    %v912 = vld [vmem:[#allocation11] sm:$0xff]
    %v913 = vadd.f32 %v912, %v907
    %914 = vst.msk [vmem:[#allocation11] sm:$0xff] %vm130, %v913
    %v915 = vsel %vm130, %v907, -inf
    %916 = vmax.xlane.f32.xlu0 %v915
    %v917 = vpop.xlane.xlu0 %916
    %v918 = vsub.f32 %v907, %v917
    %v919 = vmul.f32 %v918, 1.442695
    %v920 = vpow.pop %v919
    %v921 = vsel %vm130, %v920, 0.0
    %922 = vadd.xlane.f32.xlu0 %v921
    %v923 = vpop.xlane.xlu0 %922
    %v924 = vrcp.pop %v923
    %v925 = vmul.f32 %v920, %v924
    %v926 = vpack.c.bf16 %v925, %v925
    %927 = vrot.lane.b32.xlu0 %v860, 40
    %v928 = vpop.permute.xlu0 %927
    %v930 = vsel %vm130, %v926, 0
    %v933 = vsel %vm203, %v928, 0
    %935 = vmatprep.subr.bf16.mxu0 0
    %936 = vmatpush1.bf16.msra.mxu0 %v933
    %937 = vmatprep.subr.bf16.mxu0 0
    %938 = vmatpush1.bf16.msra.mxu0 0
    %939 = vmatprep.subr.bf16.mxu0 0
    %940 = vmatpush1.bf16.msra.mxu0 0
    %941 = vmatprep.subr.bf16.mxu0 0
    %942 = vmatpush1.bf16.msra.mxu0 0
    %943 = vmatprep.subr.bf16.mxu0 0
    %944 = vmatpush1.bf16.msra.mxu0 0
    %945 = vmatprep.subr.bf16.mxu0 0
    %946 = vmatpush1.bf16.msra.mxu0 0
    %947 = vmatprep.subr.bf16.mxu0 0
    %948 = vmatpush1.bf16.msra.mxu0 0
    %949 = vmatprep.subr.bf16.mxu0 0
    %950 = vmatpush1.bf16.msra.mxu0 0
    %951 = vmatprep.subr.bf16.mxu0 0
    %952 = vmatpush1.bf16.msra.mxu0 0
    %953 = vmatprep.subr.bf16.mxu0 0
    %954 = vmatpush1.bf16.msra.mxu0 0
    %955 = vmatprep.subr.bf16.mxu0 0
    %956 = vmatpush1.bf16.msra.mxu0 0
    %957 = vmatprep.subr.bf16.mxu0 0
    %958 = vmatpush1.bf16.msra.mxu0 0
    %959 = vmatprep.subr.bf16.mxu0 0
    %960 = vmatpush1.bf16.msra.mxu0 0
    %961 = vmatprep.subr.bf16.mxu0 0
    %962 = vmatpush1.bf16.msra.mxu0 0
    %963 = vmatprep.subr.bf16.mxu0 0
    %964 = vmatpush1.bf16.msra.mxu0 0
    %965 = vmatprep.subr.bf16.mxu0 0
    %966 = vmatpush1.bf16.msra.mxu0 0
    %967 = vmatprep.mubr.bf16.mxu0 0
    %968 = vmatmul.mubr.bf16.gmra.mrb[0].mxu0 %v930
    %v969 = vpop.f32.mrb[0].mxu0
    %v970 = vadd.f32 0.0, %v969
    %v971 = vpop.f32.mrb[0].mxu0
    %v972 = vpop.f32.mrb[0].mxu0
    %v973 = vpop.f32.mrb[0].mxu0
    %974 = vdwg.mxu0
    %v975 = vpack.c.bf16 %v970, %v970
    %977 = vrot.lane.b32.xlu0 %v975, 24
    %v978 = vpop.permute.xlu0 %977
    %vm980 = vcmask 224448
    %981 = vst.msk [vmem:[#allocation3] sm:$0xf] %vm980, %v978
    %v982 = vld [vmem:[#allocation2] sm:$0xf]
    %984 = vrot.lane.b32.xlu0 %v982, 100
    %v985 = vpop.permute.xlu0 %984
    %986 = vrot.lane.b32.xlu0 %v982, 68
    %v987 = vpop.permute.xlu0 %986
    %v989 = vsel %vm136, %v985, 0
    %v992 = vsel %vm136, %v987, 0
    %994 = vmatprep.subr.bf16.mxu0 0
    %995 = vmatpush1.bf16.xpose.msra.mxu0 %v992
    %996 = vmatprep.subr.bf16.mxu0 0
    %997 = vmatpush1.bf16.xpose.msra.mxu0 0
    %998 = vmatprep.subr.bf16.mxu0 0
    %999 = vmatpush1.bf16.xpose.msra.mxu0 0
    %1000 = vmatprep.subr.bf16.mxu0 0
    %1001 = vmatpush1.bf16.xpose.msra.mxu0 0
    %1002 = vmatprep.subr.bf16.mxu0 0
    %1003 = vmatpush1.bf16.xpose.msra.mxu0 0
    %1004 = vmatprep.subr.bf16.mxu0 0
    %1005 = vmatpush1.bf16.xpose.msra.mxu0 0
    %1006 = vmatprep.subr.bf16.mxu0 0
    %1007 = vmatpush1.bf16.xpose.msra.mxu0 0
    %1008 = vmatprep.subr.bf16.mxu0 0
    %1009 = vmatpush1.bf16.xpose.msra.mxu0 0
    %1010 = vmatprep.subr.bf16.mxu0 0
    %1011 = vmatpush1.bf16.xpose.msra.mxu0 0
    %1012 = vmatprep.subr.bf16.mxu0 0
    %1013 = vmatpush1.bf16.xpose.msra.mxu0 0
    %1014 = vmatprep.subr.bf16.mxu0 0
    %1015 = vmatpush1.bf16.xpose.msra.mxu0 0
    %1016 = vmatprep.subr.bf16.mxu0 0
    %1017 = vmatpush1.bf16.xpose.msra.mxu0 0
    %1018 = vmatprep.subr.bf16.mxu0 0
    %1019 = vmatpush1.bf16.xpose.msra.mxu0 0
    %1020 = vmatprep.subr.bf16.mxu0 0
    %1021 = vmatpush1.bf16.xpose.msra.mxu0 0
    %1022 = vmatprep.subr.bf16.mxu0 0
    %1023 = vmatpush1.bf16.xpose.msra.mxu0 0
    %1024 = vmatprep.subr.bf16.mxu0 0
    %1025 = vmatpush1.bf16.xpose.msra.mxu0 0
    %1026 = vmatprep.mubr.bf16.mxu0 0
    %1027 = vmatmul.mubr.bf16.gmra.mrb[0].mxu0 %v989
    %v1028 = vpop.f32.mrb[0].mxu0
    %v1029 = vadd.f32 0.0, %v1028
    %v1030 = vpop.f32.mrb[0].mxu0
    %v1031 = vpop.f32.mrb[0].mxu0
    %v1032 = vpop.f32.mrb[0].mxu0
    %1033 = vdwg.mxu0
    %v1034 = vld [vmem:[#allocation11] sm:$0xff]
    %v1035 = vadd.f32 %v1034, %v1029
    %1036 = vst.msk [vmem:[#allocation11] sm:$0xff] %vm130, %v1035
    %v1037 = vsel %vm130, %v1029, -inf
    %1038 = vmax.xlane.f32.xlu0 %v1037
    %v1039 = vpop.xlane.xlu0 %1038
    %v1040 = vsub.f32 %v1029, %v1039
    %v1041 = vmul.f32 %v1040, 1.442695
    %v1042 = vpow.pop %v1041
    %v1043 = vsel %vm130, %v1042, 0.0
    %1044 = vadd.xlane.f32.xlu0 %v1043
    %v1045 = vpop.xlane.xlu0 %1044
    %v1046 = vrcp.pop %v1045
    %v1047 = vmul.f32 %v1042, %v1046
    %v1048 = vpack.c.bf16 %v1047, %v1047
    %1049 = vrot.lane.b32.xlu0 %v982, 36
    %v1050 = vpop.permute.xlu0 %1049
    %v1052 = vsel %vm130, %v1048, 0
    %v1055 = vsel %vm203, %v1050, 0
    %1057 = vmatprep.subr.bf16.mxu0 0
    %1058 = vmatpush1.bf16.msra.mxu0 %v1055
    %1059 = vmatprep.subr.bf16.mxu0 0
    %1060 = vmatpush1.bf16.msra.mxu0 0
    %1061 = vmatprep.subr.bf16.mxu0 0
    %1062 = vmatpush1.bf16.msra.mxu0 0
    %1063 = vmatprep.subr.bf16.mxu0 0
    %1064 = vmatpush1.bf16.msra.mxu0 0
    %1065 = vmatprep.subr.bf16.mxu0 0
    %1066 = vmatpush1.bf16.msra.mxu0 0
    %1067 = vmatprep.subr.bf16.mxu0 0
    %1068 = vmatpush1.bf16.msra.mxu0 0
    %1069 = vmatprep.subr.bf16.mxu0 0
    %1070 = vmatpush1.bf16.msra.mxu0 0
    %1071 = vmatprep.subr.bf16.mxu0 0
    %1072 = vmatpush1.bf16.msra.mxu0 0
    %1073 = vmatprep.subr.bf16.mxu0 0
    %1074 = vmatpush1.bf16.msra.mxu0 0
    %1075 = vmatprep.subr.bf16.mxu0 0
    %1076 = vmatpush1.bf16.msra.mxu0 0
    %1077 = vmatprep.subr.bf16.mxu0 0
    %1078 = vmatpush1.bf16.msra.mxu0 0
    %1079 = vmatprep.subr.bf16.mxu0 0
    %1080 = vmatpush1.bf16.msra.mxu0 0
    %1081 = vmatprep.subr.bf16.mxu0 0
    %1082 = vmatpush1.bf16.msra.mxu0 0
    %1083 = vmatprep.subr.bf16.mxu0 0
    %1084 = vmatpush1.bf16.msra.mxu0 0
    %1085 = vmatprep.subr.bf16.mxu0 0
    %1086 = vmatpush1.bf16.msra.mxu0 0
    %1087 = vmatprep.subr.bf16.mxu0 0
    %1088 = vmatpush1.bf16.msra.mxu0 0
    %1089 = vmatprep.mubr.bf16.mxu0 0
    %1090 = vmatmul.mubr.bf16.gmra.mrb[0].mxu0 %v1052
    %v1091 = vpop.f32.mrb[0].mxu0
    %v1092 = vadd.f32 0.0, %v1091
    %v1093 = vpop.f32.mrb[0].mxu0
    %v1094 = vpop.f32.mrb[0].mxu0
    %v1095 = vpop.f32.mrb[0].mxu0
    %1096 = vdwg.mxu0
    %v1097 = vpack.c.bf16 %v1092, %v1092
    %1099 = vrot.lane.b32.xlu0 %v1097, 28
    %v1100 = vpop.permute.xlu0 %1099
    %vm1102 = vcmask 257248
    %1103 = vst.msk [vmem:[#allocation3] sm:$0xf] %vm1102, %v1100
    %v1104 = vld [vmem:[#allocation2] sm:$0xf0]
    %v1106 = vrot.slane %v1104, 4
    %1107 = vrot.lane.b32.xlu0 %v1106, 96
    %v1108 = vpop.permute.xlu0 %1107
    %v1110 = vsel %vm136, %v1106, 0
    %v1113 = vsel %vm136, %v1108, 0
    %1115 = vmatprep.subr.bf16.mxu0 0
    %1116 = vmatpush1.bf16.xpose.msra.mxu0 %v1113
    %1117 = vmatprep.subr.bf16.mxu0 0
    %1118 = vmatpush1.bf16.xpose.msra.mxu0 0
    %1119 = vmatprep.subr.bf16.mxu0 0
    %1120 = vmatpush1.bf16.xpose.msra.mxu0 0
    %1121 = vmatprep.subr.bf16.mxu0 0
    %1122 = vmatpush1.bf16.xpose.msra.mxu0 0
    %1123 = vmatprep.subr.bf16.mxu0 0
    %1124 = vmatpush1.bf16.xpose.msra.mxu0 0
    %1125 = vmatprep.subr.bf16.mxu0 0
    %1126 = vmatpush1.bf16.xpose.msra.mxu0 0
    %1127 = vmatprep.subr.bf16.mxu0 0
    %1128 = vmatpush1.bf16.xpose.msra.mxu0 0
    %1129 = vmatprep.subr.bf16.mxu0 0
    %1130 = vmatpush1.bf16.xpose.msra.mxu0 0
    %1131 = vmatprep.subr.bf16.mxu0 0
    %1132 = vmatpush1.bf16.xpose.msra.mxu0 0
    %1133 = vmatprep.subr.bf16.mxu0 0
    %1134 = vmatpush1.bf16.xpose.msra.mxu0 0
    %1135 = vmatprep.subr.bf16.mxu0 0
    %1136 = vmatpush1.bf16.xpose.msra.mxu0 0
    %1137 = vmatprep.subr.bf16.mxu0 0
    %1138 = vmatpush1.bf16.xpose.msra.mxu0 0
    %1139 = vmatprep.subr.bf16.mxu0 0
    %1140 = vmatpush1.bf16.xpose.msra.mxu0 0
    %1141 = vmatprep.subr.bf16.mxu0 0
    %1142 = vmatpush1.bf16.xpose.msra.mxu0 0
    %1143 = vmatprep.subr.bf16.mxu0 0
    %1144 = vmatpush1.bf16.xpose.msra.mxu0 0
    %1145 = vmatprep.subr.bf16.mxu0 0
    %1146 = vmatpush1.bf16.xpose.msra.mxu0 0
    %1147 = vmatprep.mubr.bf16.mxu0 0
    %1148 = vmatmul.mubr.bf16.gmra.mrb[0].mxu0 %v1110
    %v1149 = vpop.f32.mrb[0].mxu0
    %v1150 = vadd.f32 0.0, %v1149
    %v1151 = vpop.f32.mrb[0].mxu0
    %v1152 = vpop.f32.mrb[0].mxu0
    %v1153 = vpop.f32.mrb[0].mxu0
    %1154 = vdwg.mxu0
    %v1155 = vld [vmem:[#allocation11] sm:$0xff]
    %v1156 = vadd.f32 %v1155, %v1150
    %1157 = vst.msk [vmem:[#allocation11] sm:$0xff] %vm130, %v1156
    %v1158 = vsel %vm130, %v1150, -inf
    %1159 = vmax.xlane.f32.xlu0 %v1158
    %v1160 = vpop.xlane.xlu0 %1159
    %v1161 = vsub.f32 %v1150, %v1160
    %v1162 = vmul.f32 %v1161, 1.442695
    %v1163 = vpow.pop %v1162
    %v1164 = vsel %vm130, %v1163, 0.0
    %1165 = vadd.xlane.f32.xlu0 %v1164
    %v1166 = vpop.xlane.xlu0 %1165
    %v1167 = vrcp.pop %v1166
    %v1168 = vmul.f32 %v1163, %v1167
    %v1169 = vpack.c.bf16 %v1168, %v1168
    %1170 = vrot.lane.b32.xlu0 %v1106, 64
    %v1171 = vpop.permute.xlu0 %1170
    %v1173 = vsel %vm130, %v1169, 0
    %v1176 = vsel %vm203, %v1171, 0
    %1178 = vmatprep.subr.bf16.mxu0 0
    %1179 = vmatpush1.bf16.msra.mxu0 %v1176
    %1180 = vmatprep.subr.bf16.mxu0 0
    %1181 = vmatpush1.bf16.msra.mxu0 0
    %1182 = vmatprep.subr.bf16.mxu0 0
    %1183 = vmatpush1.bf16.msra.mxu0 0
    %1184 = vmatprep.subr.bf16.mxu0 0
    %1185 = vmatpush1.bf16.msra.mxu0 0
    %1186 = vmatprep.subr.bf16.mxu0 0
    %1187 = vmatpush1.bf16.msra.mxu0 0
    %1188 = vmatprep.subr.bf16.mxu0 0
    %1189 = vmatpush1.bf16.msra.mxu0 0
    %1190 = vmatprep.subr.bf16.mxu0 0
    %1191 = vmatpush1.bf16.msra.mxu0 0
    %1192 = vmatprep.subr.bf16.mxu0 0
    %1193 = vmatpush1.bf16.msra.mxu0 0
    %1194 = vmatprep.subr.bf16.mxu0 0
    %1195 = vmatpush1.bf16.msra.mxu0 0
    %1196 = vmatprep.subr.bf16.mxu0 0
    %1197 = vmatpush1.bf16.msra.mxu0 0
    %1198 = vmatprep.subr.bf16.mxu0 0
    %1199 = vmatpush1.bf16.msra.mxu0 0
    %1200 = vmatprep.subr.bf16.mxu0 0
    %1201 = vmatpush1.bf16.msra.mxu0 0
    %1202 = vmatprep.subr.bf16.mxu0 0
    %1203 = vmatpush1.bf16.msra.mxu0 0
    %1204 = vmatprep.subr.bf16.mxu0 0
    %1205 = vmatpush1.bf16.msra.mxu0 0
    %1206 = vmatprep.subr.bf16.mxu0 0
    %1207 = vmatpush1.bf16.msra.mxu0 0
    %1208 = vmatprep.subr.bf16.mxu0 0
    %1209 = vmatpush1.bf16.msra.mxu0 0
    %1210 = vmatprep.mubr.bf16.mxu0 0
    %1211 = vmatmul.mubr.bf16.gmra.mrb[0].mxu0 %v1173
    %v1212 = vpop.f32.mrb[0].mxu0
    %v1213 = vadd.f32 0.0, %v1212
    %v1214 = vpop.f32.mrb[0].mxu0
    %v1215 = vpop.f32.mrb[0].mxu0
    %v1216 = vpop.f32.mrb[0].mxu0
    %1217 = vdwg.mxu0
    %v1218 = vpack.c.bf16 %v1213, %v1213
    %v1220 = vrot.slane %v1218, 4
    %vm1222 = vcmask 31748
    %1223 = vst.msk [vmem:[#allocation3] sm:$0xf0] %vm1222, %v1220
    %v1224 = vld [vmem:[#allocation2] sm:$0xf0]
    %v1226 = vrot.slane %v1224, 4
    %1227 = vrot.lane.b32.xlu0 %v1226, 124
    %v1228 = vpop.permute.xlu0 %1227
    %1229 = vrot.lane.b32.xlu0 %v1226, 92
    %v1230 = vpop.permute.xlu0 %1229
    %v1232 = vsel %vm136, %v1228, 0
    %v1235 = vsel %vm136, %v1230, 0
    %1237 = vmatprep.subr.bf16.mxu0 0
    %1238 = vmatpush1.bf16.xpose.msra.mxu0 %v1235
    %1239 = vmatprep.subr.bf16.mxu0 0
    %1240 = vmatpush1.bf16.xpose.msra.mxu0 0
    %1241 = vmatprep.subr.bf16.mxu0 0
    %1242 = vmatpush1.bf16.xpose.msra.mxu0 0
    %1243 = vmatprep.subr.bf16.mxu0 0
    %1244 = vmatpush1.bf16.xpose.msra.mxu0 0
    %1245 = vmatprep.subr.bf16.mxu0 0
    %1246 = vmatpush1.bf16.xpose.msra.mxu0 0
    %1247 = vmatprep.subr.bf16.mxu0 0
    %1248 = vmatpush1.bf16.xpose.msra.mxu0 0
    %1249 = vmatprep.subr.bf16.mxu0 0
    %1250 = vmatpush1.bf16.xpose.msra.mxu0 0
    %1251 = vmatprep.subr.bf16.mxu0 0
    %1252 = vmatpush1.bf16.xpose.msra.mxu0 0
    %1253 = vmatprep.subr.bf16.mxu0 0
    %1254 = vmatpush1.bf16.xpose.msra.mxu0 0
    %1255 = vmatprep.subr.bf16.mxu0 0
    %1256 = vmatpush1.bf16.xpose.msra.mxu0 0
    %1257 = vmatprep.subr.bf16.mxu0 0
    %1258 = vmatpush1.bf16.xpose.msra.mxu0 0
    %1259 = vmatprep.subr.bf16.mxu0 0
    %1260 = vmatpush1.bf16.xpose.msra.mxu0 0
    %1261 = vmatprep.subr.bf16.mxu0 0
    %1262 = vmatpush1.bf16.xpose.msra.mxu0 0
    %1263 = vmatprep.subr.bf16.mxu0 0
    %1264 = vmatpush1.bf16.xpose.msra.mxu0 0
    %1265 = vmatprep.subr.bf16.mxu0 0
    %1266 = vmatpush1.bf16.xpose.msra.mxu0 0
    %1267 = vmatprep.subr.bf16.mxu0 0
    %1268 = vmatpush1.bf16.xpose.msra.mxu0 0
    %1269 = vmatprep.mubr.bf16.mxu0 0
    %1270 = vmatmul.mubr.bf16.gmra.mrb[0].mxu0 %v1232
    %v1271 = vpop.f32.mrb[0].mxu0
    %v1272 = vadd.f32 0.0, %v1271
    %v1273 = vpop.f32.mrb[0].mxu0
    %v1274 = vpop.f32.mrb[0].mxu0
    %v1275 = vpop.f32.mrb[0].mxu0
    %1276 = vdwg.mxu0
    %v1277 = vld [vmem:[#allocation11] sm:$0xff]
    %v1278 = vadd.f32 %v1277, %v1272
    %1279 = vst.msk [vmem:[#allocation11] sm:$0xff] %vm130, %v1278
    %v1280 = vsel %vm130, %v1272, -inf
    %1281 = vmax.xlane.f32.xlu0 %v1280
    %v1282 = vpop.xlane.xlu0 %1281
    %v1283 = vsub.f32 %v1272, %v1282
    %v1284 = vmul.f32 %v1283, 1.442695
    %v1285 = vpow.pop %v1284
    %v1286 = vsel %vm130, %v1285, 0.0
    %1287 = vadd.xlane.f32.xlu0 %v1286
    %v1288 = vpop.xlane.xlu0 %1287
    %v1289 = vrcp.pop %v1288
    %v1290 = vmul.f32 %v1285, %v1289
    %v1291 = vpack.c.bf16 %v1290, %v1290
    %1292 = vrot.lane.b32.xlu0 %v1226, 60
    %v1293 = vpop.permute.xlu0 %1292
    %v1295 = vsel %vm130, %v1291, 0
    %v1298 = vsel %vm203, %v1293, 0
    %1300 = vmatprep.subr.bf16.mxu0 0
    %1301 = vmatpush1.bf16.msra.mxu0 %v1298
    %1302 = vmatprep.subr.bf16.mxu0 0
    %1303 = vmatpush1.bf16.msra.mxu0 0
    %1304 = vmatprep.subr.bf16.mxu0 0
    %1305 = vmatpush1.bf16.msra.mxu0 0
    %1306 = vmatprep.subr.bf16.mxu0 0
    %1307 = vmatpush1.bf16.msra.mxu0 0
    %1308 = vmatprep.subr.bf16.mxu0 0
    %1309 = vmatpush1.bf16.msra.mxu0 0
    %1310 = vmatprep.subr.bf16.mxu0 0
    %1311 = vmatpush1.bf16.msra.mxu0 0
    %1312 = vmatprep.subr.bf16.mxu0 0
    %1313 = vmatpush1.bf16.msra.mxu0 0
    %1314 = vmatprep.subr.bf16.mxu0 0
    %1315 = vmatpush1.bf16.msra.mxu0 0
    %1316 = vmatprep.subr.bf16.mxu0 0
    %1317 = vmatpush1.bf16.msra.mxu0 0
    %1318 = vmatprep.subr.bf16.mxu0 0
    %1319 = vmatpush1.bf16.msra.mxu0 0
    %1320 = vmatprep.subr.bf16.mxu0 0
    %1321 = vmatpush1.bf16.msra.mxu0 0
    %1322 = vmatprep.subr.bf16.mxu0 0
    %1323 = vmatpush1.bf16.msra.mxu0 0
    %1324 = vmatprep.subr.bf16.mxu0 0
    %1325 = vmatpush1.bf16.msra.mxu0 0
    %1326 = vmatprep.subr.bf16.mxu0 0
    %1327 = vmatpush1.bf16.msra.mxu0 0
    %1328 = vmatprep.subr.bf16.mxu0 0
    %1329 = vmatpush1.bf16.msra.mxu0 0
    %1330 = vmatprep.subr.bf16.mxu0 0
    %1331 = vmatpush1.bf16.msra.mxu0 0
    %1332 = vmatprep.mubr.bf16.mxu0 0
    %1333 = vmatmul.mubr.bf16.gmra.mrb[0].mxu0 %v1295
    %v1334 = vpop.f32.mrb[0].mxu0
    %v1335 = vadd.f32 0.0, %v1334
    %v1336 = vpop.f32.mrb[0].mxu0
    %v1337 = vpop.f32.mrb[0].mxu0
    %v1338 = vpop.f32.mrb[0].mxu0
    %1339 = vdwg.mxu0
    %v1340 = vpack.c.bf16 %v1335, %v1335
    %v1342 = vrot.slane %v1340, 4
    %1343 = vrot.lane.b32.xlu0 %v1342, 4
    %v1344 = vpop.permute.xlu0 %1343
    %vm1346 = vcmask 64548
    %1347 = vst.msk [vmem:[#allocation3] sm:$0xf0] %vm1346, %v1344
    %v1348 = vld [vmem:[#allocation2] sm:$0xf0]
    %v1350 = vrot.slane %v1348, 4
    %1351 = vrot.lane.b32.xlu0 %v1350, 120
    %v1352 = vpop.permute.xlu0 %1351
    %1353 = vrot.lane.b32.xlu0 %v1350, 88
    %v1354 = vpop.permute.xlu0 %1353
    %v1356 = vsel %vm136, %v1352, 0
    %v1359 = vsel %vm136, %v1354, 0
    %1361 = vmatprep.subr.bf16.mxu0 0
    %1362 = vmatpush1.bf16.xpose.msra.mxu0 %v1359
    %1363 = vmatprep.subr.bf16.mxu0 0
    %1364 = vmatpush1.bf16.xpose.msra.mxu0 0
    %1365 = vmatprep.subr.bf16.mxu0 0
    %1366 = vmatpush1.bf16.xpose.msra.mxu0 0
    %1367 = vmatprep.subr.bf16.mxu0 0
    %1368 = vmatpush1.bf16.xpose.msra.mxu0 0
    %1369 = vmatprep.subr.bf16.mxu0 0
    %1370 = vmatpush1.bf16.xpose.msra.mxu0 0
    %1371 = vmatprep.subr.bf16.mxu0 0
    %1372 = vmatpush1.bf16.xpose.msra.mxu0 0
    %1373 = vmatprep.subr.bf16.mxu0 0
    %1374 = vmatpush1.bf16.xpose.msra.mxu0 0
    %1375 = vmatprep.subr.bf16.mxu0 0
    %1376 = vmatpush1.bf16.xpose.msra.mxu0 0
    %1377 = vmatprep.subr.bf16.mxu0 0
    %1378 = vmatpush1.bf16.xpose.msra.mxu0 0
    %1379 = vmatprep.subr.bf16.mxu0 0
    %1380 = vmatpush1.bf16.xpose.msra.mxu0 0
    %1381 = vmatprep.subr.bf16.mxu0 0
    %1382 = vmatpush1.bf16.xpose.msra.mxu0 0
    %1383 = vmatprep.subr.bf16.mxu0 0
    %1384 = vmatpush1.bf16.xpose.msra.mxu0 0
    %1385 = vmatprep.subr.bf16.mxu0 0
    %1386 = vmatpush1.bf16.xpose.msra.mxu0 0
    %1387 = vmatprep.subr.bf16.mxu0 0
    %1388 = vmatpush1.bf16.xpose.msra.mxu0 0
    %1389 = vmatprep.subr.bf16.mxu0 0
    %1390 = vmatpush1.bf16.xpose.msra.mxu0 0
    %1391 = vmatprep.subr.bf16.mxu0 0
    %1392 = vmatpush1.bf16.xpose.msra.mxu0 0
    %1393 = vmatprep.mubr.bf16.mxu0 0
    %1394 = vmatmul.mubr.bf16.gmra.mrb[0].mxu0 %v1356
    %v1395 = vpop.f32.mrb[0].mxu0
    %v1396 = vadd.f32 0.0, %v1395
    %v1397 = vpop.f32.mrb[0].mxu0
    %v1398 = vpop.f32.mrb[0].mxu0
    %v1399 = vpop.f32.mrb[0].mxu0
    %1400 = vdwg.mxu0
    %v1401 = vld [vmem:[#allocation11] sm:$0xff]
    %v1402 = vadd.f32 %v1401, %v1396
    %1403 = vst.msk [vmem:[#allocation11] sm:$0xff] %vm130, %v1402
    %v1404 = vsel %vm130, %v1396, -inf
    %1405 = vmax.xlane.f32.xlu0 %v1404
    %v1406 = vpop.xlane.xlu0 %1405
    %v1407 = vsub.f32 %v1396, %v1406
    %v1408 = vmul.f32 %v1407, 1.442695
    %v1409 = vpow.pop %v1408
    %v1410 = vsel %vm130, %v1409, 0.0
    %1411 = vadd.xlane.f32.xlu0 %v1410
    %v1412 = vpop.xlane.xlu0 %1411
    %v1413 = vrcp.pop %v1412
    %v1414 = vmul.f32 %v1409, %v1413
    %v1415 = vpack.c.bf16 %v1414, %v1414
    %1416 = vrot.lane.b32.xlu0 %v1350, 56
    %v1417 = vpop.permute.xlu0 %1416
    %v1419 = vsel %vm130, %v1415, 0
    %v1422 = vsel %vm203, %v1417, 0
    %1424 = vmatprep.subr.bf16.mxu0 0
    %1425 = vmatpush1.bf16.msra.mxu0 %v1422
    %1426 = vmatprep.subr.bf16.mxu0 0
    %1427 = vmatpush1.bf16.msra.mxu0 0
    %1428 = vmatprep.subr.bf16.mxu0 0
    %1429 = vmatpush1.bf16.msra.mxu0 0
    %1430 = vmatprep.subr.bf16.mxu0 0
    %1431 = vmatpush1.bf16.msra.mxu0 0
    %1432 = vmatprep.subr.bf16.mxu0 0
    %1433 = vmatpush1.bf16.msra.mxu0 0
    %1434 = vmatprep.subr.bf16.mxu0 0
    %1435 = vmatpush1.bf16.msra.mxu0 0
    %1436 = vmatprep.subr.bf16.mxu0 0
    %1437 = vmatpush1.bf16.msra.mxu0 0
    %1438 = vmatprep.subr.bf16.mxu0 0
    %1439 = vmatpush1.bf16.msra.mxu0 0
    %1440 = vmatprep.subr.bf16.mxu0 0
    %1441 = vmatpush1.bf16.msra.mxu0 0
    %1442 = vmatprep.subr.bf16.mxu0 0
    %1443 = vmatpush1.bf16.msra.mxu0 0
    %1444 = vmatprep.subr.bf16.mxu0 0
    %1445 = vmatpush1.bf16.msra.mxu0 0
    %1446 = vmatprep.subr.bf16.mxu0 0
    %1447 = vmatpush1.bf16.msra.mxu0 0
    %1448 = vmatprep.subr.bf16.mxu0 0
    %1449 = vmatpush1.bf16.msra.mxu0 0
    %1450 = vmatprep.subr.bf16.mxu0 0
    %1451 = vmatpush1.bf16.msra.mxu0 0
    %1452 = vmatprep.subr.bf16.mxu0 0
    %1453 = vmatpush1.bf16.msra.mxu0 0
    %1454 = vmatprep.subr.bf16.mxu0 0
    %1455 = vmatpush1.bf16.msra.mxu0 0
    %1456 = vmatprep.mubr.bf16.mxu0 0
    %1457 = vmatmul.mubr.bf16.gmra.mrb[0].mxu0 %v1419
    %v1458 = vpop.f32.mrb[0].mxu0
    %v1459 = vadd.f32 0.0, %v1458
    %v1460 = vpop.f32.mrb[0].mxu0
    %v1461 = vpop.f32.mrb[0].mxu0
    %v1462 = vpop.f32.mrb[0].mxu0
    %1463 = vdwg.mxu0
    %v1464 = vpack.c.bf16 %v1459, %v1459
    %v1466 = vrot.slane %v1464, 4
    %1467 = vrot.lane.b32.xlu0 %v1466, 8
    %v1468 = vpop.permute.xlu0 %1467
    %vm1470 = vcmask 97348
    %1471 = vst.msk [vmem:[#allocation3] sm:$0xf0] %vm1470, %v1468
    %v1472 = vld [vmem:[#allocation2] sm:$0xf0]
    %v1474 = vrot.slane %v1472, 4
    %1475 = vrot.lane.b32.xlu0 %v1474, 116
    %v1476 = vpop.permute.xlu0 %1475
    %1477 = vrot.lane.b32.xlu0 %v1474, 84
    %v1478 = vpop.permute.xlu0 %1477
    %v1480 = vsel %vm136, %v1476, 0
    %v1483 = vsel %vm136, %v1478, 0
    %1485 = vmatprep.subr.bf16.mxu0 0
    %1486 = vmatpush1.bf16.xpose.msra.mxu0 %v1483
    %1487 = vmatprep.subr.bf16.mxu0 0
    %1488 = vmatpush1.bf16.xpose.msra.mxu0 0
    %1489 = vmatprep.subr.bf16.mxu0 0
    %1490 = vmatpush1.bf16.xpose.msra.mxu0 0
    %1491 = vmatprep.subr.bf16.mxu0 0
    %1492 = vmatpush1.bf16.xpose.msra.mxu0 0
    %1493 = vmatprep.subr.bf16.mxu0 0
    %1494 = vmatpush1.bf16.xpose.msra.mxu0 0
    %1495 = vmatprep.subr.bf16.mxu0 0
    %1496 = vmatpush1.bf16.xpose.msra.mxu0 0
    %1497 = vmatprep.subr.bf16.mxu0 0
    %1498 = vmatpush1.bf16.xpose.msra.mxu0 0
    %1499 = vmatprep.subr.bf16.mxu0 0
    %1500 = vmatpush1.bf16.xpose.msra.mxu0 0
    %1501 = vmatprep.subr.bf16.mxu0 0
    %1502 = vmatpush1.bf16.xpose.msra.mxu0 0
    %1503 = vmatprep.subr.bf16.mxu0 0
    %1504 = vmatpush1.bf16.xpose.msra.mxu0 0
    %1505 = vmatprep.subr.bf16.mxu0 0
    %1506 = vmatpush1.bf16.xpose.msra.mxu0 0
    %1507 = vmatprep.subr.bf16.mxu0 0
    %1508 = vmatpush1.bf16.xpose.msra.mxu0 0
    %1509 = vmatprep.subr.bf16.mxu0 0
    %1510 = vmatpush1.bf16.xpose.msra.mxu0 0
    %1511 = vmatprep.subr.bf16.mxu0 0
    %1512 = vmatpush1.bf16.xpose.msra.mxu0 0
    %1513 = vmatprep.subr.bf16.mxu0 0
    %1514 = vmatpush1.bf16.xpose.msra.mxu0 0
    %1515 = vmatprep.subr.bf16.mxu0 0
    %1516 = vmatpush1.bf16.xpose.msra.mxu0 0
    %1517 = vmatprep.mubr.bf16.mxu0 0
    %1518 = vmatmul.mubr.bf16.gmra.mrb[0].mxu0 %v1480
    %v1519 = vpop.f32.mrb[0].mxu0
    %v1520 = vadd.f32 0.0, %v1519
    %v1521 = vpop.f32.mrb[0].mxu0
    %v1522 = vpop.f32.mrb[0].mxu0
    %v1523 = vpop.f32.mrb[0].mxu0
    %1524 = vdwg.mxu0
    %v1525 = vld [vmem:[#allocation11] sm:$0xff]
    %v1526 = vadd.f32 %v1525, %v1520
    %1527 = vst.msk [vmem:[#allocation11] sm:$0xff] %vm130, %v1526
    %v1528 = vsel %vm130, %v1520, -inf
    %1529 = vmax.xlane.f32.xlu0 %v1528
    %v1530 = vpop.xlane.xlu0 %1529
    %v1531 = vsub.f32 %v1520, %v1530
    %v1532 = vmul.f32 %v1531, 1.442695
    %v1533 = vpow.pop %v1532
    %v1534 = vsel %vm130, %v1533, 0.0
    %1535 = vadd.xlane.f32.xlu0 %v1534
    %v1536 = vpop.xlane.xlu0 %1535
    %v1537 = vrcp.pop %v1536
    %v1538 = vmul.f32 %v1533, %v1537
    %v1539 = vpack.c.bf16 %v1538, %v1538
    %1540 = vrot.lane.b32.xlu0 %v1474, 52
    %v1541 = vpop.permute.xlu0 %1540
    %v1543 = vsel %vm130, %v1539, 0
    %v1546 = vsel %vm203, %v1541, 0
    %1548 = vmatprep.subr.bf16.mxu0 0
    %1549 = vmatpush1.bf16.msra.mxu0 %v1546
    %1550 = vmatprep.subr.bf16.mxu0 0
    %1551 = vmatpush1.bf16.msra.mxu0 0
    %1552 = vmatprep.subr.bf16.mxu0 0
    %1553 = vmatpush1.bf16.msra.mxu0 0
    %1554 = vmatprep.subr.bf16.mxu0 0
    %1555 = vmatpush1.bf16.msra.mxu0 0
    %1556 = vmatprep.subr.bf16.mxu0 0
    %1557 = vmatpush1.bf16.msra.mxu0 0
    %1558 = vmatprep.subr.bf16.mxu0 0
    %1559 = vmatpush1.bf16.msra.mxu0 0
    %1560 = vmatprep.subr.bf16.mxu0 0
    %1561 = vmatpush1.bf16.msra.mxu0 0
    %1562 = vmatprep.subr.bf16.mxu0 0
    %1563 = vmatpush1.bf16.msra.mxu0 0
    %1564 = vmatprep.subr.bf16.mxu0 0
    %1565 = vmatpush1.bf16.msra.mxu0 0
    %1566 = vmatprep.subr.bf16.mxu0 0
    %1567 = vmatpush1.bf16.msra.mxu0 0
    %1568 = vmatprep.subr.bf16.mxu0 0
    %1569 = vmatpush1.bf16.msra.mxu0 0
    %1570 = vmatprep.subr.bf16.mxu0 0
    %1571 = vmatpush1.bf16.msra.mxu0 0
    %1572 = vmatprep.subr.bf16.mxu0 0
    %1573 = vmatpush1.bf16.msra.mxu0 0
    %1574 = vmatprep.subr.bf16.mxu0 0
    %1575 = vmatpush1.bf16.msra.mxu0 0
    %1576 = vmatprep.subr.bf16.mxu0 0
    %1577 = vmatpush1.bf16.msra.mxu0 0
    %1578 = vmatprep.subr.bf16.mxu0 0
    %1579 = vmatpush1.bf16.msra.mxu0 0
    %1580 = vmatprep.mubr.bf16.mxu0 0
    %1581 = vmatmul.mubr.bf16.gmra.mrb[0].mxu0 %v1543
    %v1582 = vpop.f32.mrb[0].mxu0
    %v1583 = vadd.f32 0.0, %v1582
    %v1584 = vpop.f32.mrb[0].mxu0
    %v1585 = vpop.f32.mrb[0].mxu0
    %v1586 = vpop.f32.mrb[0].mxu0
    %1587 = vdwg.mxu0
    %v1588 = vpack.c.bf16 %v1583, %v1583
    %v1590 = vrot.slane %v1588, 4
    %1591 = vrot.lane.b32.xlu0 %v1590, 12
    %v1592 = vpop.permute.xlu0 %1591
    %vm1594 = vcmask 130148
    %1595 = vst.msk [vmem:[#allocation3] sm:$0xf0] %vm1594, %v1592
    %v1596 = vld [vmem:[#allocation2] sm:$0xf0]
    %v1598 = vrot.slane %v1596, 4
    %1599 = vrot.lane.b32.xlu0 %v1598, 112
    %v1600 = vpop.permute.xlu0 %1599
    %1601 = vrot.lane.b32.xlu0 %v1598, 80
    %v1602 = vpop.permute.xlu0 %1601
    %v1604 = vsel %vm136, %v1600, 0
    %v1607 = vsel %vm136, %v1602, 0
    %1609 = vmatprep.subr.bf16.mxu0 0
    %1610 = vmatpush1.bf16.xpose.msra.mxu0 %v1607
    %1611 = vmatprep.subr.bf16.mxu0 0
    %1612 = vmatpush1.bf16.xpose.msra.mxu0 0
    %1613 = vmatprep.subr.bf16.mxu0 0
    %1614 = vmatpush1.bf16.xpose.msra.mxu0 0
    %1615 = vmatprep.subr.bf16.mxu0 0
    %1616 = vmatpush1.bf16.xpose.msra.mxu0 0
    %1617 = vmatprep.subr.bf16.mxu0 0
    %1618 = vmatpush1.bf16.xpose.msra.mxu0 0
    %1619 = vmatprep.subr.bf16.mxu0 0
    %1620 = vmatpush1.bf16.xpose.msra.mxu0 0
    %1621 = vmatprep.subr.bf16.mxu0 0
    %1622 = vmatpush1.bf16.xpose.msra.mxu0 0
    %1623 = vmatprep.subr.bf16.mxu0 0
    %1624 = vmatpush1.bf16.xpose.msra.mxu0 0
    %1625 = vmatprep.subr.bf16.mxu0 0
    %1626 = vmatpush1.bf16.xpose.msra.mxu0 0
    %1627 = vmatprep.subr.bf16.mxu0 0
    %1628 = vmatpush1.bf16.xpose.msra.mxu0 0
    %1629 = vmatprep.subr.bf16.mxu0 0
    %1630 = vmatpush1.bf16.xpose.msra.mxu0 0
    %1631 = vmatprep.subr.bf16.mxu0 0
    %1632 = vmatpush1.bf16.xpose.msra.mxu0 0
    %1633 = vmatprep.subr.bf16.mxu0 0
    %1634 = vmatpush1.bf16.xpose.msra.mxu0 0
    %1635 = vmatprep.subr.bf16.mxu0 0
    %1636 = vmatpush1.bf16.xpose.msra.mxu0 0
    %1637 = vmatprep.subr.bf16.mxu0 0
    %1638 = vmatpush1.bf16.xpose.msra.mxu0 0
    %1639 = vmatprep.subr.bf16.mxu0 0
    %1640 = vmatpush1.bf16.xpose.msra.mxu0 0
    %1641 = vmatprep.mubr.bf16.mxu0 0
    %1642 = vmatmul.mubr.bf16.gmra.mrb[0].mxu0 %v1604
    %v1643 = vpop.f32.mrb[0].mxu0
    %v1644 = vadd.f32 0.0, %v1643
    %v1645 = vpop.f32.mrb[0].mxu0
    %v1646 = vpop.f32.mrb[0].mxu0
    %v1647 = vpop.f32.mrb[0].mxu0
    %1648 = vdwg.mxu0
    %v1649 = vld [vmem:[#allocation11] sm:$0xff]
    %v1650 = vadd.f32 %v1649, %v1644
    %1651 = vst.msk [vmem:[#allocation11] sm:$0xff] %vm130, %v1650
    %v1652 = vsel %vm130, %v1644, -inf
    %1653 = vmax.xlane.f32.xlu0 %v1652
    %v1654 = vpop.xlane.xlu0 %1653
    %v1655 = vsub.f32 %v1644, %v1654
    %v1656 = vmul.f32 %v1655, 1.442695
    %v1657 = vpow.pop %v1656
    %v1658 = vsel %vm130, %v1657, 0.0
    %1659 = vadd.xlane.f32.xlu0 %v1658
    %v1660 = vpop.xlane.xlu0 %1659
    %v1661 = vrcp.pop %v1660
    %v1662 = vmul.f32 %v1657, %v1661
    %v1663 = vpack.c.bf16 %v1662, %v1662
    %1664 = vrot.lane.b32.xlu0 %v1598, 48
    %v1665 = vpop.permute.xlu0 %1664
    %v1667 = vsel %vm130, %v1663, 0
    %v1670 = vsel %vm203, %v1665, 0
    %1672 = vmatprep.subr.bf16.mxu0 0
    %1673 = vmatpush1.bf16.msra.mxu0 %v1670
    %1674 = vmatprep.subr.bf16.mxu0 0
    %1675 = vmatpush1.bf16.msra.mxu0 0
    %1676 = vmatprep.subr.bf16.mxu0 0
    %1677 = vmatpush1.bf16.msra.mxu0 0
    %1678 = vmatprep.subr.bf16.mxu0 0
    %1679 = vmatpush1.bf16.msra.mxu0 0
    %1680 = vmatprep.subr.bf16.mxu0 0
    %1681 = vmatpush1.bf16.msra.mxu0 0
    %1682 = vmatprep.subr.bf16.mxu0 0
    %1683 = vmatpush1.bf16.msra.mxu0 0
    %1684 = vmatprep.subr.bf16.mxu0 0
    %1685 = vmatpush1.bf16.msra.mxu0 0
    %1686 = vmatprep.subr.bf16.mxu0 0
    %1687 = vmatpush1.bf16.msra.mxu0 0
    %1688 = vmatprep.subr.bf16.mxu0 0
    %1689 = vmatpush1.bf16.msra.mxu0 0
    %1690 = vmatprep.subr.bf16.mxu0 0
    %1691 = vmatpush1.bf16.msra.mxu0 0
    %1692 = vmatprep.subr.bf16.mxu0 0
    %1693 = vmatpush1.bf16.msra.mxu0 0
    %1694 = vmatprep.subr.bf16.mxu0 0
    %1695 = vmatpush1.bf16.msra.mxu0 0
    %1696 = vmatprep.subr.bf16.mxu0 0
    %1697 = vmatpush1.bf16.msra.mxu0 0
    %1698 = vmatprep.subr.bf16.mxu0 0
    %1699 = vmatpush1.bf16.msra.mxu0 0
    %1700 = vmatprep.subr.bf16.mxu0 0
    %1701 = vmatpush1.bf16.msra.mxu0 0
    %1702 = vmatprep.subr.bf16.mxu0 0
    %1703 = vmatpush1.bf16.msra.mxu0 0
    %1704 = vmatprep.mubr.bf16.mxu0 0
    %1705 = vmatmul.mubr.bf16.gmra.mrb[0].mxu0 %v1667
    %v1706 = vpop.f32.mrb[0].mxu0
    %v1707 = vadd.f32 0.0, %v1706
    %v1708 = vpop.f32.mrb[0].mxu0
    %v1709 = vpop.f32.mrb[0].mxu0
    %v1710 = vpop.f32.mrb[0].mxu0
    %1711 = vdwg.mxu0
    %v1712 = vpack.c.bf16 %v1707, %v1707
    %v1714 = vrot.slane %v1712, 4
    %1715 = vrot.lane.b32.xlu0 %v1714, 16
    %v1716 = vpop.permute.xlu0 %1715
    %vm1718 = vcmask 162948
    %1719 = vst.msk [vmem:[#allocation3] sm:$0xf0] %vm1718, %v1716
    %v1720 = vld [vmem:[#allocation2] sm:$0xf0]
    %v1722 = vrot.slane %v1720, 4
    %1723 = vrot.lane.b32.xlu0 %v1722, 108
    %v1724 = vpop.permute.xlu0 %1723
    %1725 = vrot.lane.b32.xlu0 %v1722, 76
    %v1726 = vpop.permute.xlu0 %1725
    %v1728 = vsel %vm136, %v1724, 0
    %v1731 = vsel %vm136, %v1726, 0
    %1733 = vmatprep.subr.bf16.mxu0 0
    %1734 = vmatpush1.bf16.xpose.msra.mxu0 %v1731
    %1735 = vmatprep.subr.bf16.mxu0 0
    %1736 = vmatpush1.bf16.xpose.msra.mxu0 0
    %1737 = vmatprep.subr.bf16.mxu0 0
    %1738 = vmatpush1.bf16.xpose.msra.mxu0 0
    %1739 = vmatprep.subr.bf16.mxu0 0
    %1740 = vmatpush1.bf16.xpose.msra.mxu0 0
    %1741 = vmatprep.subr.bf16.mxu0 0
    %1742 = vmatpush1.bf16.xpose.msra.mxu0 0
    %1743 = vmatprep.subr.bf16.mxu0 0
    %1744 = vmatpush1.bf16.xpose.msra.mxu0 0
    %1745 = vmatprep.subr.bf16.mxu0 0
    %1746 = vmatpush1.bf16.xpose.msra.mxu0 0
    %1747 = vmatprep.subr.bf16.mxu0 0
    %1748 = vmatpush1.bf16.xpose.msra.mxu0 0
    %1749 = vmatprep.subr.bf16.mxu0 0
    %1750 = vmatpush1.bf16.xpose.msra.mxu0 0
    %1751 = vmatprep.subr.bf16.mxu0 0
    %1752 = vmatpush1.bf16.xpose.msra.mxu0 0
    %1753 = vmatprep.subr.bf16.mxu0 0
    %1754 = vmatpush1.bf16.xpose.msra.mxu0 0
    %1755 = vmatprep.subr.bf16.mxu0 0
    %1756 = vmatpush1.bf16.xpose.msra.mxu0 0
    %1757 = vmatprep.subr.bf16.mxu0 0
    %1758 = vmatpush1.bf16.xpose.msra.mxu0 0
    %1759 = vmatprep.subr.bf16.mxu0 0
    %1760 = vmatpush1.bf16.xpose.msra.mxu0 0
    %1761 = vmatprep.subr.bf16.mxu0 0
    %1762 = vmatpush1.bf16.xpose.msra.mxu0 0
    %1763 = vmatprep.subr.bf16.mxu0 0
    %1764 = vmatpush1.bf16.xpose.msra.mxu0 0
    %1765 = vmatprep.mubr.bf16.mxu0 0
    %1766 = vmatmul.mubr.bf16.gmra.mrb[0].mxu0 %v1728
    %v1767 = vpop.f32.mrb[0].mxu0
    %v1768 = vadd.f32 0.0, %v1767
    %v1769 = vpop.f32.mrb[0].mxu0
    %v1770 = vpop.f32.mrb[0].mxu0
    %v1771 = vpop.f32.mrb[0].mxu0
    %1772 = vdwg.mxu0
    %v1773 = vld [vmem:[#allocation11] sm:$0xff]
    %v1774 = vadd.f32 %v1773, %v1768
    %1775 = vst.msk [vmem:[#allocation11] sm:$0xff] %vm130, %v1774
    %v1776 = vsel %vm130, %v1768, -inf
    %1777 = vmax.xlane.f32.xlu0 %v1776
    %v1778 = vpop.xlane.xlu0 %1777
    %v1779 = vsub.f32 %v1768, %v1778
    %v1780 = vmul.f32 %v1779, 1.442695
    %v1781 = vpow.pop %v1780
    %v1782 = vsel %vm130, %v1781, 0.0
    %1783 = vadd.xlane.f32.xlu0 %v1782
    %v1784 = vpop.xlane.xlu0 %1783
    %v1785 = vrcp.pop %v1784
    %v1786 = vmul.f32 %v1781, %v1785
    %v1787 = vpack.c.bf16 %v1786, %v1786
    %1788 = vrot.lane.b32.xlu0 %v1722, 44
    %v1789 = vpop.permute.xlu0 %1788
    %v1791 = vsel %vm130, %v1787, 0
    %v1794 = vsel %vm203, %v1789, 0
    %1796 = vmatprep.subr.bf16.mxu0 0
    %1797 = vmatpush1.bf16.msra.mxu0 %v1794
    %1798 = vmatprep.subr.bf16.mxu0 0
    %1799 = vmatpush1.bf16.msra.mxu0 0
    %1800 = vmatprep.subr.bf16.mxu0 0
    %1801 = vmatpush1.bf16.msra.mxu0 0
    %1802 = vmatprep.subr.bf16.mxu0 0
    %1803 = vmatpush1.bf16.msra.mxu0 0
    %1804 = vmatprep.subr.bf16.mxu0 0
    %1805 = vmatpush1.bf16.msra.mxu0 0
    %1806 = vmatprep.subr.bf16.mxu0 0
    %1807 = vmatpush1.bf16.msra.mxu0 0
    %1808 = vmatprep.subr.bf16.mxu0 0
    %1809 = vmatpush1.bf16.msra.mxu0 0
    %1810 = vmatprep.subr.bf16.mxu0 0
    %1811 = vmatpush1.bf16.msra.mxu0 0
    %1812 = vmatprep.subr.bf16.mxu0 0
    %1813 = vmatpush1.bf16.msra.mxu0 0
    %1814 = vmatprep.subr.bf16.mxu0 0
    %1815 = vmatpush1.bf16.msra.mxu0 0
    %1816 = vmatprep.subr.bf16.mxu0 0
    %1817 = vmatpush1.bf16.msra.mxu0 0
    %1818 = vmatprep.subr.bf16.mxu0 0
    %1819 = vmatpush1.bf16.msra.mxu0 0
    %1820 = vmatprep.subr.bf16.mxu0 0
    %1821 = vmatpush1.bf16.msra.mxu0 0
    %1822 = vmatprep.subr.bf16.mxu0 0
    %1823 = vmatpush1.bf16.msra.mxu0 0
    %1824 = vmatprep.subr.bf16.mxu0 0
    %1825 = vmatpush1.bf16.msra.mxu0 0
    %1826 = vmatprep.subr.bf16.mxu0 0
    %1827 = vmatpush1.bf16.msra.mxu0 0
    %1828 = vmatprep.mubr.bf16.mxu0 0
    %1829 = vmatmul.mubr.bf16.gmra.mrb[0].mxu0 %v1791
    %v1830 = vpop.f32.mrb[0].mxu0
    %v1831 = vadd.f32 0.0, %v1830
    %v1832 = vpop.f32.mrb[0].mxu0
    %v1833 = vpop.f32.mrb[0].mxu0
    %v1834 = vpop.f32.mrb[0].mxu0
    %1835 = vdwg.mxu0
    %v1836 = vpack.c.bf16 %v1831, %v1831
    %v1838 = vrot.slane %v1836, 4
    %1839 = vrot.lane.b32.xlu0 %v1838, 20
    %v1840 = vpop.permute.xlu0 %1839
    %vm1842 = vcmask 195748
    %1843 = vst.msk [vmem:[#allocation3] sm:$0xf0] %vm1842, %v1840
    %v1844 = vld [vmem:[#allocation2] sm:$0xf0]
    %v1846 = vrot.slane %v1844, 4
    %1847 = vrot.lane.b32.xlu0 %v1846, 104
    %v1848 = vpop.permute.xlu0 %1847
    %1849 = vrot.lane.b32.xlu0 %v1846, 72
    %v1850 = vpop.permute.xlu0 %1849
    %v1852 = vsel %vm136, %v1848, 0
    %v1855 = vsel %vm136, %v1850, 0
    %1857 = vmatprep.subr.bf16.mxu0 0
    %1858 = vmatpush1.bf16.xpose.msra.mxu0 %v1855
    %1859 = vmatprep.subr.bf16.mxu0 0
    %1860 = vmatpush1.bf16.xpose.msra.mxu0 0
    %1861 = vmatprep.subr.bf16.mxu0 0
    %1862 = vmatpush1.bf16.xpose.msra.mxu0 0
    %1863 = vmatprep.subr.bf16.mxu0 0
    %1864 = vmatpush1.bf16.xpose.msra.mxu0 0
    %1865 = vmatprep.subr.bf16.mxu0 0
    %1866 = vmatpush1.bf16.xpose.msra.mxu0 0
    %1867 = vmatprep.subr.bf16.mxu0 0
    %1868 = vmatpush1.bf16.xpose.msra.mxu0 0
    %1869 = vmatprep.subr.bf16.mxu0 0
    %1870 = vmatpush1.bf16.xpose.msra.mxu0 0
    %1871 = vmatprep.subr.bf16.mxu0 0
    %1872 = vmatpush1.bf16.xpose.msra.mxu0 0
    %1873 = vmatprep.subr.bf16.mxu0 0
    %1874 = vmatpush1.bf16.xpose.msra.mxu0 0
    %1875 = vmatprep.subr.bf16.mxu0 0
    %1876 = vmatpush1.bf16.xpose.msra.mxu0 0
    %1877 = vmatprep.subr.bf16.mxu0 0
    %1878 = vmatpush1.bf16.xpose.msra.mxu0 0
    %1879 = vmatprep.subr.bf16.mxu0 0
    %1880 = vmatpush1.bf16.xpose.msra.mxu0 0
    %1881 = vmatprep.subr.bf16.mxu0 0
    %1882 = vmatpush1.bf16.xpose.msra.mxu0 0
    %1883 = vmatprep.subr.bf16.mxu0 0
    %1884 = vmatpush1.bf16.xpose.msra.mxu0 0
    %1885 = vmatprep.subr.bf16.mxu0 0
    %1886 = vmatpush1.bf16.xpose.msra.mxu0 0
    %1887 = vmatprep.subr.bf16.mxu0 0
    %1888 = vmatpush1.bf16.xpose.msra.mxu0 0
    %1889 = vmatprep.mubr.bf16.mxu0 0
    %1890 = vmatmul.mubr.bf16.gmra.mrb[0].mxu0 %v1852
    %v1891 = vpop.f32.mrb[0].mxu0
    %v1892 = vadd.f32 0.0, %v1891
    %v1893 = vpop.f32.mrb[0].mxu0
    %v1894 = vpop.f32.mrb[0].mxu0
    %v1895 = vpop.f32.mrb[0].mxu0
    %1896 = vdwg.mxu0
    %v1897 = vld [vmem:[#allocation11] sm:$0xff]
    %v1898 = vadd.f32 %v1897, %v1892
    %1899 = vst.msk [vmem:[#allocation11] sm:$0xff] %vm130, %v1898
    %v1900 = vsel %vm130, %v1892, -inf
    %1901 = vmax.xlane.f32.xlu0 %v1900
    %v1902 = vpop.xlane.xlu0 %1901
    %v1903 = vsub.f32 %v1892, %v1902
    %v1904 = vmul.f32 %v1903, 1.442695
    %v1905 = vpow.pop %v1904
    %v1906 = vsel %vm130, %v1905, 0.0
    %1907 = vadd.xlane.f32.xlu0 %v1906
    %v1908 = vpop.xlane.xlu0 %1907
    %v1909 = vrcp.pop %v1908
    %v1910 = vmul.f32 %v1905, %v1909
    %v1911 = vpack.c.bf16 %v1910, %v1910
    %1912 = vrot.lane.b32.xlu0 %v1846, 40
    %v1913 = vpop.permute.xlu0 %1912
    %v1915 = vsel %vm130, %v1911, 0
    %v1918 = vsel %vm203, %v1913, 0
    %1920 = vmatprep.subr.bf16.mxu0 0
    %1921 = vmatpush1.bf16.msra.mxu0 %v1918
    %1922 = vmatprep.subr.bf16.mxu0 0
    %1923 = vmatpush1.bf16.msra.mxu0 0
    %1924 = vmatprep.subr.bf16.mxu0 0
    %1925 = vmatpush1.bf16.msra.mxu0 0
    %1926 = vmatprep.subr.bf16.mxu0 0
    %1927 = vmatpush1.bf16.msra.mxu0 0
    %1928 = vmatprep.subr.bf16.mxu0 0
    %1929 = vmatpush1.bf16.msra.mxu0 0
    %1930 = vmatprep.subr.bf16.mxu0 0
    %1931 = vmatpush1.bf16.msra.mxu0 0
    %1932 = vmatprep.subr.bf16.mxu0 0
    %1933 = vmatpush1.bf16.msra.mxu0 0
    %1934 = vmatprep.subr.bf16.mxu0 0
    %1935 = vmatpush1.bf16.msra.mxu0 0
    %1936 = vmatprep.subr.bf16.mxu0 0
    %1937 = vmatpush1.bf16.msra.mxu0 0
    %1938 = vmatprep.subr.bf16.mxu0 0
    %1939 = vmatpush1.bf16.msra.mxu0 0
    %1940 = vmatprep.subr.bf16.mxu0 0
    %1941 = vmatpush1.bf16.msra.mxu0 0
    %1942 = vmatprep.subr.bf16.mxu0 0
    %1943 = vmatpush1.bf16.msra.mxu0 0
    %1944 = vmatprep.subr.bf16.mxu0 0
    %1945 = vmatpush1.bf16.msra.mxu0 0
    %1946 = vmatprep.subr.bf16.mxu0 0
    %1947 = vmatpush1.bf16.msra.mxu0 0
    %1948 = vmatprep.subr.bf16.mxu0 0
    %1949 = vmatpush1.bf16.msra.mxu0 0
    %1950 = vmatprep.subr.bf16.mxu0 0
    %1951 = vmatpush1.bf16.msra.mxu0 0
    %1952 = vmatprep.mubr.bf16.mxu0 0
    %1953 = vmatmul.mubr.bf16.gmra.mrb[0].mxu0 %v1915
    %v1954 = vpop.f32.mrb[0].mxu0
    %v1955 = vadd.f32 0.0, %v1954
    %v1956 = vpop.f32.mrb[0].mxu0
    %v1957 = vpop.f32.mrb[0].mxu0
    %v1958 = vpop.f32.mrb[0].mxu0
    %1959 = vdwg.mxu0
    %v1960 = vpack.c.bf16 %v1955, %v1955
    %v1962 = vrot.slane %v1960, 4
    %1963 = vrot.lane.b32.xlu0 %v1962, 24
    %v1964 = vpop.permute.xlu0 %1963
    %vm1966 = vcmask 228548
    %1967 = vst.msk [vmem:[#allocation3] sm:$0xf0] %vm1966, %v1964
    %v1968 = vld [vmem:[#allocation2] sm:$0xf0]
    %v1970 = vrot.slane %v1968, 4
    %1971 = vrot.lane.b32.xlu0 %v1970, 100
    %v1972 = vpop.permute.xlu0 %1971
    %1973 = vrot.lane.b32.xlu0 %v1970, 68
    %v1974 = vpop.permute.xlu0 %1973
    %v1976 = vsel %vm136, %v1972, 0
    %v1979 = vsel %vm136, %v1974, 0
    %1981 = vmatprep.subr.bf16.mxu0 0
    %1982 = vmatpush1.bf16.xpose.msra.mxu0 %v1979
    %1983 = vmatprep.subr.bf16.mxu0 0
    %1984 = vmatpush1.bf16.xpose.msra.mxu0 0
    %1985 = vmatprep.subr.bf16.mxu0 0
    %1986 = vmatpush1.bf16.xpose.msra.mxu0 0
    %1987 = vmatprep.subr.bf16.mxu0 0
    %1988 = vmatpush1.bf16.xpose.msra.mxu0 0
    %1989 = vmatprep.subr.bf16.mxu0 0
    %1990 = vmatpush1.bf16.xpose.msra.mxu0 0
    %1991 = vmatprep.subr.bf16.mxu0 0
    %1992 = vmatpush1.bf16.xpose.msra.mxu0 0
    %1993 = vmatprep.subr.bf16.mxu0 0
    %1994 = vmatpush1.bf16.xpose.msra.mxu0 0
    %1995 = vmatprep.subr.bf16.mxu0 0
    %1996 = vmatpush1.bf16.xpose.msra.mxu0 0
    %1997 = vmatprep.subr.bf16.mxu0 0
    %1998 = vmatpush1.bf16.xpose.msra.mxu0 0
    %1999 = vmatprep.subr.bf16.mxu0 0
    %2000 = vmatpush1.bf16.xpose.msra.mxu0 0
    %2001 = vmatprep.subr.bf16.mxu0 0
    %2002 = vmatpush1.bf16.xpose.msra.mxu0 0
    %2003 = vmatprep.subr.bf16.mxu0 0
    %2004 = vmatpush1.bf16.xpose.msra.mxu0 0
    %2005 = vmatprep.subr.bf16.mxu0 0
    %2006 = vmatpush1.bf16.xpose.msra.mxu0 0
    %2007 = vmatprep.subr.bf16.mxu0 0
    %2008 = vmatpush1.bf16.xpose.msra.mxu0 0
    %2009 = vmatprep.subr.bf16.mxu0 0
    %2010 = vmatpush1.bf16.xpose.msra.mxu0 0
    %2011 = vmatprep.subr.bf16.mxu0 0
    %2012 = vmatpush1.bf16.xpose.msra.mxu0 0
    %2013 = vmatprep.mubr.bf16.mxu0 0
    %2014 = vmatmul.mubr.bf16.gmra.mrb[0].mxu0 %v1976
    %v2015 = vpop.f32.mrb[0].mxu0
    %v2016 = vadd.f32 0.0, %v2015
    %v2017 = vpop.f32.mrb[0].mxu0
    %v2018 = vpop.f32.mrb[0].mxu0
    %v2019 = vpop.f32.mrb[0].mxu0
    %2020 = vdwg.mxu0
    %v2021 = vld [vmem:[#allocation11] sm:$0xff]
    %v2022 = vadd.f32 %v2021, %v2016
    %2023 = vst.msk [vmem:[#allocation11] sm:$0xff] %vm130, %v2022
    %v2024 = vsel %vm130, %v2016, -inf
    %2025 = vmax.xlane.f32.xlu0 %v2024
    %v2026 = vpop.xlane.xlu0 %2025
    %v2027 = vsub.f32 %v2016, %v2026
    %v2028 = vmul.f32 %v2027, 1.442695
    %v2029 = vpow.pop %v2028
    %v2030 = vsel %vm130, %v2029, 0.0
    %2031 = vadd.xlane.f32.xlu0 %v2030
    %v2032 = vpop.xlane.xlu0 %2031
    %v2033 = vrcp.pop %v2032
    %v2034 = vmul.f32 %v2029, %v2033
    %v2035 = vpack.c.bf16 %v2034, %v2034
    %2036 = vrot.lane.b32.xlu0 %v1970, 36
    %v2037 = vpop.permute.xlu0 %2036
    %v2039 = vsel %vm130, %v2035, 0
    %v2042 = vsel %vm203, %v2037, 0
    %2044 = vmatprep.subr.bf16.mxu0 0
    %2045 = vmatpush1.bf16.msra.mxu0 %v2042
    %2046 = vmatprep.subr.bf16.mxu0 0
    %2047 = vmatpush1.bf16.msra.mxu0 0
    %2048 = vmatprep.subr.bf16.mxu0 0
    %2049 = vmatpush1.bf16.msra.mxu0 0
    %2050 = vmatprep.subr.bf16.mxu0 0
    %2051 = vmatpush1.bf16.msra.mxu0 0
    %2052 = vmatprep.subr.bf16.mxu0 0
    %2053 = vmatpush1.bf16.msra.mxu0 0
    %2054 = vmatprep.subr.bf16.mxu0 0
    %2055 = vmatpush1.bf16.msra.mxu0 0
    %2056 = vmatprep.subr.bf16.mxu0 0
    %2057 = vmatpush1.bf16.msra.mxu0 0
    %2058 = vmatprep.subr.bf16.mxu0 0
    %2059 = vmatpush1.bf16.msra.mxu0 0
    %2060 = vmatprep.subr.bf16.mxu0 0
    %2061 = vmatpush1.bf16.msra.mxu0 0
    %2062 = vmatprep.subr.bf16.mxu0 0
    %2063 = vmatpush1.bf16.msra.mxu0 0
    %2064 = vmatprep.subr.bf16.mxu0 0
    %2065 = vmatpush1.bf16.msra.mxu0 0
    %2066 = vmatprep.subr.bf16.mxu0 0
    %2067 = vmatpush1.bf16.msra.mxu0 0
    %2068 = vmatprep.subr.bf16.mxu0 0
    %2069 = vmatpush1.bf16.msra.mxu0 0
    %2070 = vmatprep.subr.bf16.mxu0 0
    %2071 = vmatpush1.bf16.msra.mxu0 0
    %2072 = vmatprep.subr.bf16.mxu0 0
    %2073 = vmatpush1.bf16.msra.mxu0 0
    %2074 = vmatprep.subr.bf16.mxu0 0
    %2075 = vmatpush1.bf16.msra.mxu0 0
    %2076 = vmatprep.mubr.bf16.mxu0 0
    %2077 = vmatmul.mubr.bf16.gmra.mrb[0].mxu0 %v2039
    %v2078 = vpop.f32.mrb[0].mxu0
    %v2079 = vadd.f32 0.0, %v2078
    %v2080 = vpop.f32.mrb[0].mxu0
    %v2081 = vpop.f32.mrb[0].mxu0
    %v2082 = vpop.f32.mrb[0].mxu0
    %2083 = vdwg.mxu0
    %v2084 = vpack.c.bf16 %v2079, %v2079
    %v2086 = vrot.slane %v2084, 4
    %2087 = vrot.lane.b32.xlu0 %v2086, 28
    %v2088 = vpop.permute.xlu0 %2087
    %vm2090 = vcmask 261348
    %2091 = vst.msk [vmem:[#allocation3] sm:$0xf0] %vm2090, %v2088
    %v2092 = vld [vmem:[#allocation3] sm:$0xff]
    %v2093 = vld [vmem:[#allocation9] sm:$0xf]
    %v2094 = vld [vmem:[#allocation9 + $0x4] sm:$0xf]
    %v2095 = vld [vmem:[#allocation9 + $0x8] sm:$0xf]
    %v2096 = vld [vmem:[#allocation9 + $0xc] sm:$0xf]
    %v2097 = vld [vmem:[%s3] sm:$0x1]
    %v2099 = vlaneseq
    %v2100 = vshrl.u32 %v2099, 7
    %v2101 = vsub.s32 0, %v2100
    %v2102 = vrot.slane %v2097, %v2101
    %v2108 = vunpack.c.l.b16 %v2093
    %v2109 = vunpack.c.l.b16 %v2094
    %v2110 = vunpack.c.l.b16 %v2095
    %v2111 = vunpack.c.l.b16 %v2096
    %v2112 = vpack.c.b16 %v2109, %v2108
    %v2113 = vpack.c.b16 %v2111, %v2110
    %v2117 = vsel %vm82, %v2092, 0
    %2119 = vmatprep.subr.bf16.mxu0 0
    %2120 = vmatpush1.bf16.msra.mxu0 %v2112
    %2121 = vmatprep.subr.bf16.mxu0 0
    %2122 = vmatpush1.bf16.msra.mxu0 %v2113
    %2123 = vmatprep.subr.bf16.mxu0 0
    %2124 = vmatpush1.bf16.msra.mxu0 0
    %2125 = vmatprep.subr.bf16.mxu0 0
    %2126 = vmatpush1.bf16.msra.mxu0 0
    %2127 = vmatprep.subr.bf16.mxu0 0
    %2128 = vmatpush1.bf16.msra.mxu0 0
    %2129 = vmatprep.subr.bf16.mxu0 0
    %2130 = vmatpush1.bf16.msra.mxu0 0
    %2131 = vmatprep.subr.bf16.mxu0 0
    %2132 = vmatpush1.bf16.msra.mxu0 0
    %2133 = vmatprep.subr.bf16.mxu0 0
    %2134 = vmatpush1.bf16.msra.mxu0 0
    %2135 = vmatprep.subr.bf16.mxu0 0
    %2136 = vmatpush1.bf16.msra.mxu0 0
    %2137 = vmatprep.subr.bf16.mxu0 0
    %2138 = vmatpush1.bf16.msra.mxu0 0
    %2139 = vmatprep.subr.bf16.mxu0 0
    %2140 = vmatpush1.bf16.msra.mxu0 0
    %2141 = vmatprep.subr.bf16.mxu0 0
    %2142 = vmatpush1.bf16.msra.mxu0 0
    %2143 = vmatprep.subr.bf16.mxu0 0
    %2144 = vmatpush1.bf16.msra.mxu0 0
    %2145 = vmatprep.subr.bf16.mxu0 0
    %2146 = vmatpush1.bf16.msra.mxu0 0
    %2147 = vmatprep.subr.bf16.mxu0 0
    %2148 = vmatpush1.bf16.msra.mxu0 0
    %2149 = vmatprep.subr.bf16.mxu0 0
    %2150 = vmatpush1.bf16.msra.mxu0 0
    %2151 = vmatprep.mubr.bf16.mxu0 0
    %2152 = vmatmul.mubr.bf16.gmra.mrb[0].mxu0 %v2117
    %v2153 = vpop.f32.mrb[0].mxu0
    %v2154 = vadd.f32 %v2102, %v2153
    %v2155 = vpop.f32.mrb[0].mxu0
    %v2156 = vpop.f32.mrb[0].mxu0
    %v2157 = vadd.f32 %v2102, %v2156
    %v2158 = vpop.f32.mrb[0].mxu0
    %2159 = vdwg.mxu0
    %2160 = vst.msk [vmem:[#allocation10] sm:$0xff] %vm82, %v2154
    %2161 = vst.msk [vmem:[#allocation10 + $0x8] sm:$0xff] %vm82, %v2157
    // Predicated region
    $region30: #{tpu_custom_call.1} parent=1 // pred_check
      _
    $region31: #{tpu_custom_call.1} parent=1 // pred_check_branch
      %2163 = sbr.rel (0) target = $region33
    $region32: #{tpu_custom_call.1} parent=1 // pred_region
      %s2165 = ssub.s32 256, 256
      %2166 = vsyncadd [#allocation6], %s2165
      %s2167 = sshll.u32 [#allocation10], 4
      %s2168 = int_to_ptr.vmem [resolvable:$true] %s2167
      %2173 = dma.vmem_to_hbm [thread:$0]  %s2168, 256, %s4, [#allocation6], 128, 128, 8
    $region33: #{tpu_custom_call.1} parent=1 // pred_fallthru
      _
    // Predicated region
    $region34: #{tpu_custom_call.1} parent=1 // pred_check
      _
    $region35: #{tpu_custom_call.1} parent=1 // pred_check_branch
      %2175 = sbr.rel (0) target = $region37
    $region36: #{tpu_custom_call.1} parent=1 // pred_region
      %s2177 = ssub.s32 128, 128
      %2178 = vsyncadd [#allocation12], %s2177
      %s2180 = sshll.u32 [#allocation11], 4
      %s2181 = int_to_ptr.vmem [resolvable:$true] %s2180
      %2183 = dma.vmem_to_hbm [thread:$0]  %s2181, 128, %s5, [#allocation12]
    $region37: #{tpu_custom_call.1} parent=1 // pred_fallthru
      _
    // Predicated region
    $region38: #{tpu_custom_call.1} parent=1 // pred_check
      _
    $region39: #{tpu_custom_call.1} parent=1 // pred_check_branch
      %2185 = sbr.rel (0) target = $region41
    $region40: #{tpu_custom_call.1} parent=1 // pred_region
      %2186 = dma.done [#allocation6], 256
    $region41: #{tpu_custom_call.1} parent=1 // pred_fallthru
      _
    // Predicated region
    $region42: #{tpu_custom_call.1} parent=1 // pred_check
      _
    $region43: #{tpu_custom_call.1} parent=1 // pred_check_branch
      %2188 = sbr.rel (0) target = $region45
    $region44: #{tpu_custom_call.1} parent=1 // pred_region
      %2189 = dma.done [#allocation12], 128
    $region45: #{tpu_custom_call.1} parent=1 // pred_fallthru
      _
    %2190 = vsyncpa [#allocation5], 1
    %2191 = vsyncpa [#allocation8], 1
    %2192 = vsyncpa [#allocation6], 1
    %2193 = vsyncpa [#allocation12], 1

</llo_original>
